<compile_context>
chip_gen: v6e
topology: v6e:2x2x1
jax: 0.10.0
libtpu: 0.0.40
codegen_flags: <defaults>
</compile_context>

<pallas_src>
import functools

import jax
import jax.numpy as jnp
from jax.experimental import pallas as pl
from jax.experimental.pallas import tpu as pltpu

EPS = 1e-5                       # PyTorch nn.LayerNorm default
_VMEM_LIMIT = 48 * 1024 * 1024   # explicit scoped-VMEM budget (fits v7x's 64 MiB)


# ----------------------------- in-kernel helpers -----------------------------

def _bf16(x):
    return x.astype(jnp.bfloat16)


def _layernorm(x, g, b):
    x = x.astype(jnp.float32)
    mu = jnp.mean(x, axis=-1, keepdims=True)
    var = jnp.mean((x - mu) ** 2, axis=-1, keepdims=True)
    return (x - mu) * jax.lax.rsqrt(var + EPS) * g + b


def _gelu_tanh(x):
    # tanh-approx GELU: runs on the EUP slot instead of ~10 VALU ops/elem.
    # Deviates from PyTorch's exact erf GELU by <~1e-3 (fine for inference).
    c = 0.7978845608028654  # sqrt(2/pi)
    return 0.5 * x * (1.0 + jnp.tanh(c * (x + 0.044715 * x * x * x)))


def _segment_mean(x2, nb, s):
    """Per-sequence mean of a (nb*s, d) matrix -> (nb, d).

    Expressed as a tiny masked matmul so it maps onto the MXU instead of a
    middle-axis vector reduction (and fuses the torch.mean(dim=1) into the
    kernel epilogue - no full activation writeback to HBM)."""
    rows = jax.lax.broadcasted_iota(jnp.int32, (nb, nb * s), 0)
    cols = jax.lax.broadcasted_iota(jnp.int32, (nb, nb * s), 1)
    mask = (cols >= rows * s) & (cols < rows * s + s)
    avg = jnp.where(mask, 1.0 / s, 0.0).astype(jnp.float32)
    return jnp.dot(avg, x2, preferred_element_type=jnp.float32)


def _res_attn_block(x2, nb, s, n_head,
                    ln1_g, ln1_b, wq_t, bq, wk_t, wv_t, bv, wo_t, bo,
                    ln2_g, ln2_b, w1_t, b1, w2_t, b2):
    """ResidualAttentionBlock on nb sequences of length s, flattened to (nb*s, d).

    Weights are pre-transposed to [din, dout]; wq_t/bq/wk_t are pre-scaled by
    (d/n_head)**-0.25.  Per-head results are accumulated directly through the
    output projection (no lane-axis concatenate)."""
    d = x2.shape[-1]
    dh = d // n_head

    # ---- self-attention branch ----
    xn = _layernorm(x2, ln1_g, ln1_b)
    xnb = _bf16(xn)
    q = jnp.dot(xnb, wq_t, preferred_element_type=jnp.float32) + bq
    k = jnp.dot(xnb, wk_t, preferred_element_type=jnp.float32)       # key: no bias
    v = jnp.dot(xnb, wv_t, preferred_element_type=jnp.float32) + bv
    q3 = q.reshape(nb, s, d)
    k3 = k.reshape(nb, s, d)
    v3 = v.reshape(nb, s, d)

    attn = jnp.zeros((nb * s, d), jnp.float32)
    for h in range(n_head):                       # static unrolled head loop
        sl = slice(h * dh, (h + 1) * dh)
        qh = _bf16(q3[:, :, sl])
        kh = _bf16(k3[:, :, sl])
        vh = _bf16(v3[:, :, sl])
        logits = jnp.einsum('bqd,bkd->bqk', qh, kh,
                            preferred_element_type=jnp.float32)      # (nb, s, s)
        logits = logits - jnp.max(logits, axis=-1, keepdims=True)
        p = jnp.exp(logits)
        p = p * pl.reciprocal(jnp.sum(p, axis=-1, keepdims=True), approx=True)
        oh = jnp.einsum('bqk,bkd->bqd', _bf16(p), vh,
                        preferred_element_type=jnp.float32)          # (nb, s, dh)
        attn = attn + jnp.dot(_bf16(oh.reshape(nb * s, dh)), wo_t[sl, :],
                              preferred_element_type=jnp.float32)
    x2 = x2 + attn + bo

    # ---- MLP branch ----
    xn2 = _layernorm(x2, ln2_g, ln2_b)
    h1 = jnp.dot(_bf16(xn2), w1_t, preferred_element_type=jnp.float32) + b1
    h1 = _gelu_tanh(h1)
    h2 = jnp.dot(_bf16(h1), w2_t, preferred_element_type=jnp.float32) + b2
    return x2 + h2


# --------------------------------- kernels -----------------------------------

def _time_kernel(x_ref,
                 dln_g, dln_b, dw_t, dbias,
                 ln1_g, ln1_b, wq_t, bq, wk_t, wv_t, bv, wo_t, bo,
                 ln2_g, ln2_b, w1_t, b1, w2_t, b2,
                 o_ref, *, n_head):
    """down_layer (LN + Linear) prologue + time_tr block + fused mean over time."""
    nb, t, r = x_ref.shape
    x = x_ref[...].astype(jnp.float32).reshape(nb * t, r)
    xn = _layernorm(x, dln_g[...], dln_b[...])
    x = jnp.dot(_bf16(xn), dw_t[...], preferred_element_type=jnp.float32) + dbias[...]
    x = _res_attn_block(
        x, nb, t, n_head,
        ln1_g[...], ln1_b[...], wq_t[...], bq[...], wk_t[...], wv_t[...], bv[...],
        wo_t[...], bo[...], ln2_g[...], ln2_b[...], w1_t[...], b1[...],
        w2_t[...], b2[...])
    o_ref[0] = _segment_mean(x, nb, t)            # torch.mean(dim=1) fused here


def _layer_kernel(x_ref,
                  ln1_g, ln1_b, wq_t, bq, wk_t, wv_t, bv, wo_t, bo,
                  ln2_g, ln2_b, w1_t, b1, w2_t, b2,
                  hln_g, hln_b, hw_t, hbias,
                  o_ref, *, n_head):
    """layer_tr block + fused mean over layers + mlp head (LN + Linear) epilogue."""
    nb, l, d = x_ref.shape
    x = x_ref[...].astype(jnp.float32).reshape(nb * l, d)
    x = _res_attn_block(
        x, nb, l, n_head,
        ln1_g[...], ln1_b[...], wq_t[...], bq[...], wk_t[...], wv_t[...], bv[...],
        wo_t[...], bo[...], ln2_g[...], ln2_b[...], w1_t[...], b1[...],
        w2_t[...], b2[...])
    m = _segment_mean(x, nb, l)                   # torch.mean(dim=1) fused here
    mn = _layernorm(m, hln_g[...], hln_b[...])
    o_ref[0] = (jnp.dot(_bf16(mn), hw_t[...], preferred_element_type=jnp.float32)
                + hbias[...])


# ------------------------------ pallas drivers --------------------------------

def _const_spec(p):
    # weights / LN params: constant index_map (same block every grid step).
    # NOTE: for large models these could be single-buffered (pl.Buffered(1)) to
    # halve weight VMEM; left default here for lowering robustness.
    nd = p.ndim
    return pl.BlockSpec(p.shape, lambda i, _nd=nd: (0,) * _nd)


def _run_seq_kernel(kernel, x, params, out_feat, nb, n_head):
    """Grid over blocks of `nb` whole sequences; grid axis is 'parallel'."""
    n = x.shape[0]
    pad = (-n) % nb
    if pad:
        x = jnp.concatenate([x, jnp.zeros((pad,) + x.shape[1:], x.dtype)], axis=0)
    g = x.shape[0] // nb
    s, feat_in = x.shape[1], x.shape[2]

    in_specs = [pl.BlockSpec((nb, s, feat_in), lambda i: (i, 0, 0))]
    in_specs += [_const_spec(p) for p in params]

    out = pl.pallas_call(
        functools.partial(kernel, n_head=n_head),
        out_shape=jax.ShapeDtypeStruct((g, nb, out_feat), jnp.float32),
        grid=(g,),
        in_specs=in_specs,
        out_specs=pl.BlockSpec((1, nb, out_feat), lambda i: (i, 0, 0)),
        compiler_params=pltpu.CompilerParams(
            dimension_semantics=("parallel",),
            vmem_limit_bytes=_VMEM_LIMIT),
    )(x, *params)
    return out.reshape(g * nb, out_feat)[:n]


# ------------------------------ parameter setup --------------------------------

def init_linear(key, dout, din, with_bias=True):
    kw, kb = jax.random.split(key)
    w = jax.random.normal(kw, (dout, din), jnp.float32) * 0.05   # PyTorch [out, in]
    if with_bias:
        b = jax.random.normal(kb, (1, dout), jnp.float32) * 0.05
        return w, b
    return w


def init_layernorm(key, d):
    kg, kb = jax.random.split(key)
    g = 1.0 + 0.1 * jax.random.normal(kg, (1, d), jnp.float32)
    b = 0.1 * jax.random.normal(kb, (1, d), jnp.float32)
    return g, b


def init_block(key, d):
    ks = jax.random.split(key, 8)
    ln1_g, ln1_b = init_layernorm(ks[0], d)
    wq, bq = init_linear(ks[1], d, d)
    wk = init_linear(ks[2], d, d, with_bias=False)
    wv, bv = init_linear(ks[3], d, d)
    wo, bo = init_linear(ks[4], d, d)
    ln2_g, ln2_b = init_layernorm(ks[5], d)
    w1, b1 = init_linear(ks[6], 4 * d, d)
    w2, b2 = init_linear(ks[7], d, 4 * d)
    return (ln1_g, ln1_b, wq, bq, wk, wv, bv, wo, bo, ln2_g, ln2_b, w1, b1, w2, b2)


def init_tltr_params(key, rep_dim, inter_dim, label_dim):
    k_dln, k_dw, k_t, k_l, k_hln, k_hw = jax.random.split(key, 6)
    p = {}
    p["down_ln_g"], p["down_ln_b"] = init_layernorm(k_dln, rep_dim)
    p["down_w"], p["down_b"] = init_linear(k_dw, inter_dim, rep_dim)
    p["time_tr"] = init_block(k_t, inter_dim)
    p["layer_tr"] = init_block(k_l, inter_dim)
    p["head_ln_g"], p["head_ln_b"] = init_layernorm(k_hln, inter_dim)
    p["head_w"], p["head_b"] = init_linear(k_hw, label_dim, inter_dim)
    return p


def _prep_block(bp, n_head):
    (ln1_g, ln1_b, wq, bq, wk, wv, bv, wo, bo, ln2_g, ln2_b, w1, b1, w2, b2) = bp
    d = wq.shape[0]
    scale = float(d // n_head) ** (-0.25)
    return (ln1_g, ln1_b,
            _bf16((wq * scale).T), bq * scale,      # fold attention scale into q
            _bf16((wk * scale).T),                  # ... and into k (no bias)
            _bf16(wv.T), bv,
            _bf16(wo.T), bo,
            ln2_g, ln2_b,
            _bf16(w1.T), b1,
            _bf16(w2.T), b2)


def prepare_params(params, n_tatt_head, n_latt_head):
    """One-time layout plumbing outside the kernels: transpose every Linear
    weight to [din, dout], fold the attention scale into wq/bq/wk, and store
    matmul weights in bf16 (f32 accumulation keeps numerics)."""
    return {
        "down": (params["down_ln_g"], params["down_ln_b"],
                 _bf16(params["down_w"].T), params["down_b"]),
        "time_tr": _prep_block(params["time_tr"], n_tatt_head),
        "layer_tr": _prep_block(params["layer_tr"], n_latt_head),
        "head": (params["head_ln_g"], params["head_ln_b"],
                 _bf16(params["head_w"].T), params["head_b"]),
    }


# ------------------------------ TLTR forward -----------------------------------

def tltr_forward(audio_rep, prepared, n_tatt_head, n_latt_head,
                 seq_block_time=4, seq_block_layer=8):
    B, L, T, R = audio_rep.shape
    inter = prepared["down"][2].shape[1]
    label = prepared["head"][2].shape[1]

    x = audio_rep.reshape(B * L, T, R).astype(jnp.float32)

    # kernel 1: down_layer + time_tr + mean over audio_len   -> (B*L, inter)
    nb = max(1, min(seq_block_time, B * L))
    tparams = tuple(prepared["down"]) + tuple(prepared["time_tr"])
    xm = _run_seq_kernel(_time_kernel, x, tparams, inter, nb, n_tatt_head)

    # kernel 2: layer_tr + mean over layers + mlp head       -> (B, label)
    xl = xm.reshape(B, L, inter)
    nb2 = max(1, min(seq_block_layer, B))
    lparams = tuple(prepared["layer_tr"]) + tuple(prepared["head"])
    pred = _run_seq_kernel(_layer_kernel, xl, lparams, label, nb2, n_latt_head)
    return pred


# --------------------------- pure-JAX reference (check) ------------------------

def _ref_ln(x, g, b):
    mu = jnp.mean(x, axis=-1, keepdims=True)
    var = jnp.mean((x - mu) ** 2, axis=-1, keepdims=True)
    return (x - mu) / jnp.sqrt(var + EPS) * g + b


def _ref_block(x, bp, n_head):
    (ln1_g, ln1_b, wq, bq, wk, wv, bv, wo, bo, ln2_g, ln2_b, w1, b1, w2, b2) = bp
    n, s, d = x.shape
    dh = d // n_head
    scale = float(dh) ** (-0.25)
    xn = _ref_ln(x, ln1_g, ln1_b)
    q = xn @ wq.T + bq
    k = xn @ wk.T
    v = xn @ wv.T + bv
    q = q.reshape(n, s, n_head, dh).transpose(0, 2, 1, 3) * scale
    k = k.reshape(n, s, n_head, dh).transpose(0, 2, 3, 1) * scale
    v = v.reshape(n, s, n_head, dh).transpose(0, 2, 1, 3)
    w_ = jax.nn.softmax(q @ k, axis=-1)
    o = (w_ @ v).transpose(0, 2, 1, 3).reshape(n, s, d)
    x = x + o @ wo.T + bo
    xn2 = _ref_ln(x, ln2_g, ln2_b)
    h = xn2 @ w1.T + b1
    h = 0.5 * h * (1.0 + jax.scipy.special.erf(h * 0.7071067811865476))
    return x + h @ w2.T + b2


def tltr_reference(audio_rep, p, n_tatt_head, n_latt_head):
    B, L, T, R = audio_rep.shape
    x = audio_rep.reshape(B * L, T, R).astype(jnp.float32)
    x = _ref_ln(x, p["down_ln_g"], p["down_ln_b"]) @ p["down_w"].T + p["down_b"]
    x = _ref_block(x, p["time_tr"], n_tatt_head).mean(axis=1)
    x = _ref_block(x.reshape(B, L, -1), p["layer_tr"], n_latt_head).mean(axis=1)
    return _ref_ln(x, p["head_ln_g"], p["head_ln_b"]) @ p["head_w"].T + p["head_b"]


# ------------------------------------ main --------------------------------------

if __name__ == "__main__":
    # mode ~ 'tl_down_tr_16_1_8' (inter_rep_dim=16, 1 time head, 8 layer heads)
    B, NUM_LAYER, AUDIO_LEN = 2, 4, 8
    REP_DIM, INTER_DIM, LABEL_DIM = 32, 16, 2
    N_TATT_HEAD, N_LATT_HEAD = 1, 8

    key = jax.random.PRNGKey(0)
    k_inp, k_par = jax.random.split(key)

    audio_rep = jax.random.normal(
        k_inp, (B, NUM_LAYER, AUDIO_LEN, REP_DIM), jnp.float32)
    params = init_tltr_params(k_par, REP_DIM, INTER_DIM, LABEL_DIM)
    prepared = prepare_params(params, N_TATT_HEAD, N_LATT_HEAD)

    fwd = jax.jit(functools.partial(
        tltr_forward, n_tatt_head=N_TATT_HEAD, n_latt_head=N_LATT_HEAD))
    pred = jax.block_until_ready(fwd(audio_rep, prepared))

    assert pred.shape == (B, LABEL_DIM), pred.shape
    assert bool(jnp.all(jnp.isfinite(pred)))

    # Loose-tolerance check vs exact f32 reference (bf16 matmul operands,
    # tanh-GELU and approx softmax reciprocal introduce small deviations).
    ref = tltr_reference(audio_rep, params, N_TATT_HEAD, N_LATT_HEAD)
    assert bool(jnp.allclose(pred, ref, atol=5e-2, rtol=2e-1)), (pred, ref)

    print("KERNEL_OK")
</pallas_src>

<mosaic_0001>
module attributes {stable_mosaic.version = 11 : i64} {
  func.func @_time_kernel(%arg0: i32, %arg1: memref<4x8x32xf32, #tpu.memory_space<vmem>>, %arg2: memref<1x32xf32, #tpu.memory_space<vmem>>, %arg3: memref<1x32xf32, #tpu.memory_space<vmem>>, %arg4: memref<32x16xbf16, #tpu.memory_space<vmem>>, %arg5: memref<1x16xf32, #tpu.memory_space<vmem>>, %arg6: memref<1x16xf32, #tpu.memory_space<vmem>>, %arg7: memref<1x16xf32, #tpu.memory_space<vmem>>, %arg8: memref<16x16xbf16, #tpu.memory_space<vmem>>, %arg9: memref<1x16xf32, #tpu.memory_space<vmem>>, %arg10: memref<16x16xbf16, #tpu.memory_space<vmem>>, %arg11: memref<16x16xbf16, #tpu.memory_space<vmem>>, %arg12: memref<1x16xf32, #tpu.memory_space<vmem>>, %arg13: memref<16x16xbf16, #tpu.memory_space<vmem>>, %arg14: memref<1x16xf32, #tpu.memory_space<vmem>>, %arg15: memref<1x16xf32, #tpu.memory_space<vmem>>, %arg16: memref<1x16xf32, #tpu.memory_space<vmem>>, %arg17: memref<16x64xbf16, #tpu.memory_space<vmem>>, %arg18: memref<1x64xf32, #tpu.memory_space<vmem>>, %arg19: memref<64x16xbf16, #tpu.memory_space<vmem>>, %arg20: memref<1x16xf32, #tpu.memory_space<vmem>>, %arg21: memref<1x4x16xf32, #tpu.memory_space<vmem>>) attributes {dimension_semantics = [#tpu.dimension_semantics<parallel>], iteration_bounds = array<i64: 2>, scalar_prefetch = 0 : i64, scratch_operands = 0 : i64, tpu.core_type = #tpu.core_type<tc>, window_params = [{transform_indices = @transform_0, window_bounds = array<i64: 4, 8, 32>}, {pipeline_mode = #tpu.pipeline_mode<synchronous>, transform_indices = @transform_1, window_bounds = array<i64: 1, 32>}, {pipeline_mode = #tpu.pipeline_mode<synchronous>, transform_indices = @transform_2, window_bounds = array<i64: 1, 32>}, {pipeline_mode = #tpu.pipeline_mode<synchronous>, transform_indices = @transform_3, window_bounds = array<i64: 32, 16>}, {pipeline_mode = #tpu.pipeline_mode<synchronous>, transform_indices = @transform_4, window_bounds = array<i64: 1, 16>}, {pipeline_mode = #tpu.pipeline_mode<synchronous>, transform_indices = @transform_5, window_bounds = array<i64: 1, 16>}, {pipeline_mode = #tpu.pipeline_mode<synchronous>, transform_indices = @transform_6, window_bounds = array<i64: 1, 16>}, {pipeline_mode = #tpu.pipeline_mode<synchronous>, transform_indices = @transform_7, window_bounds = array<i64: 16, 16>}, {pipeline_mode = #tpu.pipeline_mode<synchronous>, transform_indices = @transform_8, window_bounds = array<i64: 1, 16>}, {pipeline_mode = #tpu.pipeline_mode<synchronous>, transform_indices = @transform_9, window_bounds = array<i64: 16, 16>}, {pipeline_mode = #tpu.pipeline_mode<synchronous>, transform_indices = @transform_10, window_bounds = array<i64: 16, 16>}, {pipeline_mode = #tpu.pipeline_mode<synchronous>, transform_indices = @transform_11, window_bounds = array<i64: 1, 16>}, {pipeline_mode = #tpu.pipeline_mode<synchronous>, transform_indices = @transform_12, window_bounds = array<i64: 16, 16>}, {pipeline_mode = #tpu.pipeline_mode<synchronous>, transform_indices = @transform_13, window_bounds = array<i64: 1, 16>}, {pipeline_mode = #tpu.pipeline_mode<synchronous>, transform_indices = @transform_14, window_bounds = array<i64: 1, 16>}, {pipeline_mode = #tpu.pipeline_mode<synchronous>, transform_indices = @transform_15, window_bounds = array<i64: 1, 16>}, {pipeline_mode = #tpu.pipeline_mode<synchronous>, transform_indices = @transform_16, window_bounds = array<i64: 16, 64>}, {pipeline_mode = #tpu.pipeline_mode<synchronous>, transform_indices = @transform_17, window_bounds = array<i64: 1, 64>}, {pipeline_mode = #tpu.pipeline_mode<synchronous>, transform_indices = @transform_18, window_bounds = array<i64: 64, 16>}, {pipeline_mode = #tpu.pipeline_mode<synchronous>, transform_indices = @transform_19, window_bounds = array<i64: 1, 16>}, {transform_indices = @transform_20, window_bounds = array<i64: 1, 4, 16>}]} {
    %c0 = arith.constant 0 : index
    %c0_0 = arith.constant 0 : index
    %c0_1 = arith.constant 0 : index
    %0 = vector.load %arg1[%c0, %c0_0, %c0_1] : memref<4x8x32xf32, #tpu.memory_space<vmem>>, vector<4x8x32xf32>
    %1 = vector.shape_cast %0 : vector<4x8x32xf32> to vector<32x32xf32>
    %c0_2 = arith.constant 0 : index
    %c0_3 = arith.constant 0 : index
    %2 = vector.load %arg2[%c0_2, %c0_3] : memref<1x32xf32, #tpu.memory_space<vmem>>, vector<1x32xf32>
    %c0_4 = arith.constant 0 : index
    %c0_5 = arith.constant 0 : index
    %3 = vector.load %arg3[%c0_4, %c0_5] : memref<1x32xf32, #tpu.memory_space<vmem>>, vector<1x32xf32>
    %cst = arith.constant dense<0.000000e+00> : vector<32xf32>
    %4 = vector.multi_reduction <add>, %1, %cst [1] : vector<32x32xf32> to vector<32xf32>
    %5 = vector.shape_cast %4 : vector<32xf32> to vector<32x1xf32>
    %cst_6 = arith.constant 3.200000e+01 : f32
    %6 = vector.broadcast %cst_6 : f32 to vector<32x1xf32>
    %7 = arith.divf %5, %6 : vector<32x1xf32>
    %8 = vector.broadcast %7 : vector<32x1xf32> to vector<32x32xf32>
    %9 = arith.subf %1, %8 : vector<32x32xf32>
    %10 = arith.mulf %9, %9 : vector<32x32xf32>
    %cst_7 = arith.constant dense<0.000000e+00> : vector<32xf32>
    %11 = vector.multi_reduction <add>, %10, %cst_7 [1] : vector<32x32xf32> to vector<32xf32>
    %12 = vector.shape_cast %11 : vector<32xf32> to vector<32x1xf32>
    %cst_8 = arith.constant 3.200000e+01 : f32
    %13 = vector.broadcast %cst_8 : f32 to vector<32x1xf32>
    %14 = arith.divf %12, %13 : vector<32x1xf32>
    %15 = vector.broadcast %7 : vector<32x1xf32> to vector<32x32xf32>
    %16 = arith.subf %1, %15 : vector<32x32xf32>
    %cst_9 = arith.constant 9.99999974E-6 : f32
    %17 = vector.broadcast %cst_9 : f32 to vector<32x1xf32>
    %18 = arith.addf %14, %17 : vector<32x1xf32>
    %19 = math.rsqrt %18 : vector<32x1xf32>
    %20 = vector.broadcast %19 : vector<32x1xf32> to vector<32x32xf32>
    %21 = arith.mulf %16, %20 : vector<32x32xf32>
    %22 = vector.broadcast %2 : vector<1x32xf32> to vector<32x32xf32>
    %23 = arith.mulf %21, %22 : vector<32x32xf32>
    %24 = vector.broadcast %3 : vector<1x32xf32> to vector<32x32xf32>
    %25 = arith.addf %23, %24 : vector<32x32xf32>
    %26 = arith.truncf %25 : vector<32x32xf32> to vector<32x32xbf16>
    %c0_10 = arith.constant 0 : index
    %c0_11 = arith.constant 0 : index
    %27 = vector.load %arg4[%c0_10, %c0_11] : memref<32x16xbf16, #tpu.memory_space<vmem>>, vector<32x16xbf16>
    %cst_12 = arith.constant dense<0.000000e+00> : vector<32x16xf32>
    %28 = tpu.matmul %26, %27, %cst_12 {dimension_numbers = #tpu.dot_dimension_numbers<[1], [0], [0], [1], [0, 0, 1, 1], [], []>} : vector<32x32xbf16>, vector<32x16xbf16>, vector<32x16xf32> -> vector<32x16xf32>
    %c0_13 = arith.constant 0 : index
    %c0_14 = arith.constant 0 : index
    %29 = vector.load %arg5[%c0_13, %c0_14] : memref<1x16xf32, #tpu.memory_space<vmem>>, vector<1x16xf32>
    %30 = vector.broadcast %29 : vector<1x16xf32> to vector<32x16xf32>
    %31 = arith.addf %28, %30 : vector<32x16xf32>
    %c0_15 = arith.constant 0 : index
    %c0_16 = arith.constant 0 : index
    %32 = vector.load %arg6[%c0_15, %c0_16] : memref<1x16xf32, #tpu.memory_space<vmem>>, vector<1x16xf32>
    %c0_17 = arith.constant 0 : index
    %c0_18 = arith.constant 0 : index
    %33 = vector.load %arg7[%c0_17, %c0_18] : memref<1x16xf32, #tpu.memory_space<vmem>>, vector<1x16xf32>
    %c0_19 = arith.constant 0 : index
    %c0_20 = arith.constant 0 : index
    %34 = vector.load %arg8[%c0_19, %c0_20] : memref<16x16xbf16, #tpu.memory_space<vmem>>, vector<16x16xbf16>
    %c0_21 = arith.constant 0 : index
    %c0_22 = arith.constant 0 : index
    %35 = vector.load %arg9[%c0_21, %c0_22] : memref<1x16xf32, #tpu.memory_space<vmem>>, vector<1x16xf32>
    %c0_23 = arith.constant 0 : index
    %c0_24 = arith.constant 0 : index
    %36 = vector.load %arg10[%c0_23, %c0_24] : memref<16x16xbf16, #tpu.memory_space<vmem>>, vector<16x16xbf16>
    %c0_25 = arith.constant 0 : index
    %c0_26 = arith.constant 0 : index
    %37 = vector.load %arg11[%c0_25, %c0_26] : memref<16x16xbf16, #tpu.memory_space<vmem>>, vector<16x16xbf16>
    %c0_27 = arith.constant 0 : index
    %c0_28 = arith.constant 0 : index
    %38 = vector.load %arg12[%c0_27, %c0_28] : memref<1x16xf32, #tpu.memory_space<vmem>>, vector<1x16xf32>
    %c0_29 = arith.constant 0 : index
    %c0_30 = arith.constant 0 : index
    %39 = vector.load %arg13[%c0_29, %c0_30] : memref<16x16xbf16, #tpu.memory_space<vmem>>, vector<16x16xbf16>
    %c0_31 = arith.constant 0 : index
    %c0_32 = arith.constant 0 : index
    %40 = vector.load %arg14[%c0_31, %c0_32] : memref<1x16xf32, #tpu.memory_space<vmem>>, vector<1x16xf32>
    %c0_33 = arith.constant 0 : index
    %c0_34 = arith.constant 0 : index
    %41 = vector.load %arg15[%c0_33, %c0_34] : memref<1x16xf32, #tpu.memory_space<vmem>>, vector<1x16xf32>
    %c0_35 = arith.constant 0 : index
    %c0_36 = arith.constant 0 : index
    %42 = vector.load %arg16[%c0_35, %c0_36] : memref<1x16xf32, #tpu.memory_space<vmem>>, vector<1x16xf32>
    %c0_37 = arith.constant 0 : index
    %c0_38 = arith.constant 0 : index
    %43 = vector.load %arg17[%c0_37, %c0_38] : memref<16x64xbf16, #tpu.memory_space<vmem>>, vector<16x64xbf16>
    %c0_39 = arith.constant 0 : index
    %c0_40 = arith.constant 0 : index
    %44 = vector.load %arg18[%c0_39, %c0_40] : memref<1x64xf32, #tpu.memory_space<vmem>>, vector<1x64xf32>
    %c0_41 = arith.constant 0 : index
    %c0_42 = arith.constant 0 : index
    %45 = vector.load %arg19[%c0_41, %c0_42] : memref<64x16xbf16, #tpu.memory_space<vmem>>, vector<64x16xbf16>
    %c0_43 = arith.constant 0 : index
    %c0_44 = arith.constant 0 : index
    %46 = vector.load %arg20[%c0_43, %c0_44] : memref<1x16xf32, #tpu.memory_space<vmem>>, vector<1x16xf32>
    %cst_45 = arith.constant dense<0.000000e+00> : vector<32xf32>
    %47 = vector.multi_reduction <add>, %31, %cst_45 [1] : vector<32x16xf32> to vector<32xf32>
    %48 = vector.shape_cast %47 : vector<32xf32> to vector<32x1xf32>
    %cst_46 = arith.constant 1.600000e+01 : f32
    %49 = vector.broadcast %cst_46 : f32 to vector<32x1xf32>
    %50 = arith.divf %48, %49 : vector<32x1xf32>
    %51 = vector.broadcast %50 : vector<32x1xf32> to vector<32x16xf32>
    %52 = arith.subf %31, %51 : vector<32x16xf32>
    %53 = arith.mulf %52, %52 : vector<32x16xf32>
    %cst_47 = arith.constant dense<0.000000e+00> : vector<32xf32>
    %54 = vector.multi_reduction <add>, %53, %cst_47 [1] : vector<32x16xf32> to vector<32xf32>
    %55 = vector.shape_cast %54 : vector<32xf32> to vector<32x1xf32>
    %cst_48 = arith.constant 1.600000e+01 : f32
    %56 = vector.broadcast %cst_48 : f32 to vector<32x1xf32>
    %57 = arith.divf %55, %56 : vector<32x1xf32>
    %58 = vector.broadcast %50 : vector<32x1xf32> to vector<32x16xf32>
    %59 = arith.subf %31, %58 : vector<32x16xf32>
    %cst_49 = arith.constant 9.99999974E-6 : f32
    %60 = vector.broadcast %cst_49 : f32 to vector<32x1xf32>
    %61 = arith.addf %57, %60 : vector<32x1xf32>
    %62 = math.rsqrt %61 : vector<32x1xf32>
    %63 = vector.broadcast %62 : vector<32x1xf32> to vector<32x16xf32>
    %64 = arith.mulf %59, %63 : vector<32x16xf32>
    %65 = vector.broadcast %32 : vector<1x16xf32> to vector<32x16xf32>
    %66 = arith.mulf %64, %65 : vector<32x16xf32>
    %67 = vector.broadcast %33 : vector<1x16xf32> to vector<32x16xf32>
    %68 = arith.addf %66, %67 : vector<32x16xf32>
    %69 = arith.truncf %68 : vector<32x16xf32> to vector<32x16xbf16>
    %cst_50 = arith.constant dense<0.000000e+00> : vector<32x16xf32>
    %70 = tpu.matmul %69, %34, %cst_50 {dimension_numbers = #tpu.dot_dimension_numbers<[1], [0], [0], [1], [0, 0, 1, 1], [], []>} : vector<32x16xbf16>, vector<16x16xbf16>, vector<32x16xf32> -> vector<32x16xf32>
    %71 = vector.broadcast %35 : vector<1x16xf32> to vector<32x16xf32>
    %72 = arith.addf %70, %71 : vector<32x16xf32>
    %cst_51 = arith.constant dense<0.000000e+00> : vector<32x16xf32>
    %73 = tpu.matmul %69, %36, %cst_51 {dimension_numbers = #tpu.dot_dimension_numbers<[1], [0], [0], [1], [0, 0, 1, 1], [], []>} : vector<32x16xbf16>, vector<16x16xbf16>, vector<32x16xf32> -> vector<32x16xf32>
    %cst_52 = arith.constant dense<0.000000e+00> : vector<32x16xf32>
    %74 = tpu.matmul %69, %37, %cst_52 {dimension_numbers = #tpu.dot_dimension_numbers<[1], [0], [0], [1], [0, 0, 1, 1], [], []>} : vector<32x16xbf16>, vector<16x16xbf16>, vector<32x16xf32> -> vector<32x16xf32>
    %75 = vector.broadcast %38 : vector<1x16xf32> to vector<32x16xf32>
    %76 = arith.addf %74, %75 : vector<32x16xf32>
    %77 = vector.shape_cast %72 : vector<32x16xf32> to vector<4x8x16xf32>
    %78 = vector.shape_cast %73 : vector<32x16xf32> to vector<4x8x16xf32>
    %79 = vector.shape_cast %76 : vector<32x16xf32> to vector<4x8x16xf32>
    %cst_53 = arith.constant 0.000000e+00 : f32
    %80 = vector.broadcast %cst_53 : f32 to vector<32x16xf32>
    %81 = arith.truncf %77 : vector<4x8x16xf32> to vector<4x8x16xbf16>
    %82 = arith.truncf %78 : vector<4x8x16xf32> to vector<4x8x16xbf16>
    %83 = arith.truncf %79 : vector<4x8x16xf32> to vector<4x8x16xbf16>
    "tpu.trace_start"() <{level = 10 : i32, message = "bqd,bkd->bqk"}> : () -> ()
    %cst_54 = arith.constant dense<0.000000e+00> : vector<4x8x8xf32>
    %84 = tpu.matmul %81, %82, %cst_54 {dimension_numbers = #tpu.dot_dimension_numbers<[2], [2], [1], [1], [0, 0, 0, 1, 1, 1], [0], [0]>} : vector<4x8x16xbf16>, vector<4x8x16xbf16>, vector<4x8x8xf32> -> vector<4x8x8xf32>
    "tpu.trace_stop"() : () -> ()
    %cst_55 = arith.constant dense<0xFF800000> : vector<4x8xf32>
    %85 = vector.multi_reduction <maximumf>, %84, %cst_55 [2] : vector<4x8x8xf32> to vector<4x8xf32>
    %86 = vector.shape_cast %85 : vector<4x8xf32> to vector<4x8x1xf32>
    %87 = vector.broadcast %86 : vector<4x8x1xf32> to vector<4x8x8xf32>
    %88 = arith.subf %84, %87 : vector<4x8x8xf32>
    %89 = math.exp %88 : vector<4x8x8xf32>
    %cst_56 = arith.constant dense<0.000000e+00> : vector<4x8xf32>
    %90 = vector.multi_reduction <add>, %89, %cst_56 [2] : vector<4x8x8xf32> to vector<4x8xf32>
    %91 = vector.shape_cast %90 : vector<4x8xf32> to vector<4x8x1xf32>
    %92 = tpu.reciprocal %91 {approx = true} : vector<4x8x1xf32> -> vector<4x8x1xf32>
    %93 = vector.broadcast %92 : vector<4x8x1xf32> to vector<4x8x8xf32>
    %94 = arith.mulf %89, %93 : vector<4x8x8xf32>
    %95 = arith.truncf %94 : vector<4x8x8xf32> to vector<4x8x8xbf16>
    "tpu.trace_start"() <{level = 10 : i32, message = "bqk,bkd->bqd"}> : () -> ()
    %cst_57 = arith.constant dense<0.000000e+00> : vector<4x8x16xf32>
    %96 = tpu.matmul %95, %83, %cst_57 {dimension_numbers = #tpu.dot_dimension_numbers<[2], [1], [1], [2], [0, 0, 0, 1, 1, 2], [0], [0]>} : vector<4x8x8xbf16>, vector<4x8x16xbf16>, vector<4x8x16xf32> -> vector<4x8x16xf32>
    "tpu.trace_stop"() : () -> ()
    %97 = vector.shape_cast %96 : vector<4x8x16xf32> to vector<32x16xf32>
    %98 = arith.truncf %97 : vector<32x16xf32> to vector<32x16xbf16>
    %cst_58 = arith.constant dense<0.000000e+00> : vector<32x16xf32>
    %99 = tpu.matmul %98, %39, %cst_58 {dimension_numbers = #tpu.dot_dimension_numbers<[1], [0], [0], [1], [0, 0, 1, 1], [], []>} : vector<32x16xbf16>, vector<16x16xbf16>, vector<32x16xf32> -> vector<32x16xf32>
    %100 = arith.addf %80, %99 : vector<32x16xf32>
    %101 = arith.addf %31, %100 : vector<32x16xf32>
    %102 = vector.broadcast %40 : vector<1x16xf32> to vector<32x16xf32>
    %103 = arith.addf %101, %102 : vector<32x16xf32>
    %cst_59 = arith.constant dense<0.000000e+00> : vector<32xf32>
    %104 = vector.multi_reduction <add>, %103, %cst_59 [1] : vector<32x16xf32> to vector<32xf32>
    %105 = vector.shape_cast %104 : vector<32xf32> to vector<32x1xf32>
    %cst_60 = arith.constant 1.600000e+01 : f32
    %106 = vector.broadcast %cst_60 : f32 to vector<32x1xf32>
    %107 = arith.divf %105, %106 : vector<32x1xf32>
    %108 = vector.broadcast %107 : vector<32x1xf32> to vector<32x16xf32>
    %109 = arith.subf %103, %108 : vector<32x16xf32>
    %110 = arith.mulf %109, %109 : vector<32x16xf32>
    %cst_61 = arith.constant dense<0.000000e+00> : vector<32xf32>
    %111 = vector.multi_reduction <add>, %110, %cst_61 [1] : vector<32x16xf32> to vector<32xf32>
    %112 = vector.shape_cast %111 : vector<32xf32> to vector<32x1xf32>
    %cst_62 = arith.constant 1.600000e+01 : f32
    %113 = vector.broadcast %cst_62 : f32 to vector<32x1xf32>
    %114 = arith.divf %112, %113 : vector<32x1xf32>
    %115 = vector.broadcast %107 : vector<32x1xf32> to vector<32x16xf32>
    %116 = arith.subf %103, %115 : vector<32x16xf32>
    %cst_63 = arith.constant 9.99999974E-6 : f32
    %117 = vector.broadcast %cst_63 : f32 to vector<32x1xf32>
    %118 = arith.addf %114, %117 : vector<32x1xf32>
    %119 = math.rsqrt %118 : vector<32x1xf32>
    %120 = vector.broadcast %119 : vector<32x1xf32> to vector<32x16xf32>
    %121 = arith.mulf %116, %120 : vector<32x16xf32>
    %122 = vector.broadcast %41 : vector<1x16xf32> to vector<32x16xf32>
    %123 = arith.mulf %121, %122 : vector<32x16xf32>
    %124 = vector.broadcast %42 : vector<1x16xf32> to vector<32x16xf32>
    %125 = arith.addf %123, %124 : vector<32x16xf32>
    %126 = arith.truncf %125 : vector<32x16xf32> to vector<32x16xbf16>
    %cst_64 = arith.constant dense<0.000000e+00> : vector<32x64xf32>
    %127 = tpu.matmul %126, %43, %cst_64 {dimension_numbers = #tpu.dot_dimension_numbers<[1], [0], [0], [1], [0, 0, 1, 1], [], []>} : vector<32x16xbf16>, vector<16x64xbf16>, vector<32x64xf32> -> vector<32x64xf32>
    %128 = vector.broadcast %44 : vector<1x64xf32> to vector<32x64xf32>
    %129 = arith.addf %127, %128 : vector<32x64xf32>
    %cst_65 = arith.constant 5.000000e-01 : f32
    %130 = vector.broadcast %cst_65 : f32 to vector<32x64xf32>
    %131 = arith.mulf %130, %129 : vector<32x64xf32>
    %cst_66 = arith.constant 4.471500e-02 : f32
    %132 = vector.broadcast %cst_66 : f32 to vector<32x64xf32>
    %133 = arith.mulf %132, %129 : vector<32x64xf32>
    %134 = arith.mulf %133, %129 : vector<32x64xf32>
    %135 = arith.mulf %134, %129 : vector<32x64xf32>
    %136 = arith.addf %129, %135 : vector<32x64xf32>
    %cst_67 = arith.constant 0.797884583 : f32
    %137 = vector.broadcast %cst_67 : f32 to vector<32x64xf32>
    %138 = arith.mulf %137, %136 : vector<32x64xf32>
    %139 = math.tanh %138 : vector<32x64xf32>
    %cst_68 = arith.constant 1.000000e+00 : f32
    %140 = vector.broadcast %cst_68 : f32 to vector<32x64xf32>
    %141 = arith.addf %140, %139 : vector<32x64xf32>
    %142 = arith.mulf %131, %141 : vector<32x64xf32>
    %143 = arith.truncf %142 : vector<32x64xf32> to vector<32x64xbf16>
    %cst_69 = arith.constant dense<0.000000e+00> : vector<32x16xf32>
    %144 = tpu.matmul %143, %45, %cst_69 {dimension_numbers = #tpu.dot_dimension_numbers<[1], [0], [0], [1], [0, 0, 1, 1], [], []>} : vector<32x64xbf16>, vector<64x16xbf16>, vector<32x16xf32> -> vector<32x16xf32>
    %145 = vector.broadcast %46 : vector<1x16xf32> to vector<32x16xf32>
    %146 = arith.addf %144, %145 : vector<32x16xf32>
    %147 = arith.addf %103, %146 : vector<32x16xf32>
    %148 = tpu.iota {dimensions = array<i32: 0>} : vector<4x32xi32>
    %149 = tpu.iota {dimensions = array<i32: 1>} : vector<4x32xi32>
    %c8_i32 = arith.constant 8 : i32
    %150 = vector.broadcast %c8_i32 : i32 to vector<4x32xi32>
    %151 = arith.muli %148, %150 : vector<4x32xi32>
    %152 = arith.cmpi sge, %149, %151 : vector<4x32xi32>
    %c8_i32_70 = arith.constant 8 : i32
    %153 = vector.broadcast %c8_i32_70 : i32 to vector<4x32xi32>
    %154 = arith.muli %148, %153 : vector<4x32xi32>
    %c8_i32_71 = arith.constant 8 : i32
    %155 = vector.broadcast %c8_i32_71 : i32 to vector<4x32xi32>
    %156 = arith.addi %154, %155 : vector<4x32xi32>
    %157 = arith.cmpi slt, %149, %156 : vector<4x32xi32>
    %158 = arith.andi %152, %157 : vector<4x32xi1>
    %cst_72 = arith.constant 1.250000e-01 : f32
    %cst_73 = arith.constant 0.000000e+00 : f32
    %159 = vector.broadcast %cst_72 : f32 to vector<4x32xf32>
    %160 = vector.broadcast %cst_73 : f32 to vector<4x32xf32>
    %161 = arith.select %158, %159, %160 : vector<4x32xi1>, vector<4x32xf32>
    %cst_74 = arith.constant dense<0.000000e+00> : vector<4x16xf32>
    %162 = tpu.matmul %161, %147, %cst_74 {dimension_numbers = #tpu.dot_dimension_numbers<[1], [0], [0], [1], [0, 0, 1, 1], [], []>} : vector<4x32xf32>, vector<32x16xf32>, vector<4x16xf32> -> vector<4x16xf32>
    %c0_75 = arith.constant 0 : index
    %c0_76 = arith.constant 0 : index
    %c0_77 = arith.constant 0 : index
    %163 = vector.load %arg21[%c0_75, %c0_76, %c0_77] : memref<1x4x16xf32, #tpu.memory_space<vmem>>, vector<1x4x16xf32>
    %164 = vector.shape_cast %163 : vector<1x4x16xf32> to vector<4x16xf32>
    %165 = vector.shape_cast %162 : vector<4x16xf32> to vector<1x4x16xf32>
    tpu.vector_store %arg21[%c0_75, %c0_76, %c0_77], %165 {strides = array<i32>} : memref<1x4x16xf32, #tpu.memory_space<vmem>>, vector<1x4x16xf32>,
    return
  }
  func.func @transform_0(%arg0: i32) -> (i32, i32, i32) {
    %c0_i32 = arith.constant 0 : i32
    %c0_i32_0 = arith.constant 0 : i32
    %c0_i32_1 = arith.constant 0 : i32
    return %arg0, %c0_i32, %c0_i32_0 : i32, i32, i32
  }
  func.func @transform_1(%arg0: i32) -> (i32, i32) {
    %c0_i32 = arith.constant 0 : i32
    %c0_i32_0 = arith.constant 0 : i32
    %c0_i32_1 = arith.constant 0 : i32
    return %c0_i32, %c0_i32_0 : i32, i32
  }
  func.func @transform_2(%arg0: i32) -> (i32, i32) {
    %c0_i32 = arith.constant 0 : i32
    %c0_i32_0 = arith.constant 0 : i32
    %c0_i32_1 = arith.constant 0 : i32
    return %c0_i32, %c0_i32_0 : i32, i32
  }
  func.func @transform_3(%arg0: i32) -> (i32, i32) {
    %c0_i32 = arith.constant 0 : i32
    %c0_i32_0 = arith.constant 0 : i32
    %c0_i32_1 = arith.constant 0 : i32
    return %c0_i32, %c0_i32_0 : i32, i32
  }
  func.func @transform_4(%arg0: i32) -> (i32, i32) {
    %c0_i32 = arith.constant 0 : i32
    %c0_i32_0 = arith.constant 0 : i32
    %c0_i32_1 = arith.constant 0 : i32
    return %c0_i32, %c0_i32_0 : i32, i32
  }
  func.func @transform_5(%arg0: i32) -> (i32, i32) {
    %c0_i32 = arith.constant 0 : i32
    %c0_i32_0 = arith.constant 0 : i32
    %c0_i32_1 = arith.constant 0 : i32
    return %c0_i32, %c0_i32_0 : i32, i32
  }
  func.func @transform_6(%arg0: i32) -> (i32, i32) {
    %c0_i32 = arith.constant 0 : i32
    %c0_i32_0 = arith.constant 0 : i32
    %c0_i32_1 = arith.constant 0 : i32
    return %c0_i32, %c0_i32_0 : i32, i32
  }
  func.func @transform_7(%arg0: i32) -> (i32, i32) {
    %c0_i32 = arith.constant 0 : i32
    %c0_i32_0 = arith.constant 0 : i32
    %c0_i32_1 = arith.constant 0 : i32
    return %c0_i32, %c0_i32_0 : i32, i32
  }
  func.func @transform_8(%arg0: i32) -> (i32, i32) {
    %c0_i32 = arith.constant 0 : i32
    %c0_i32_0 = arith.constant 0 : i32
    %c0_i32_1 = arith.constant 0 : i32
    return %c0_i32, %c0_i32_0 : i32, i32
  }
  func.func @transform_9(%arg0: i32) -> (i32, i32) {
    %c0_i32 = arith.constant 0 : i32
    %c0_i32_0 = arith.constant 0 : i32
    %c0_i32_1 = arith.constant 0 : i32
    return %c0_i32, %c0_i32_0 : i32, i32
  }
  func.func @transform_10(%arg0: i32) -> (i32, i32) {
    %c0_i32 = arith.constant 0 : i32
    %c0_i32_0 = arith.constant 0 : i32
    %c0_i32_1 = arith.constant 0 : i32
    return %c0_i32, %c0_i32_0 : i32, i32
  }
  func.func @transform_11(%arg0: i32) -> (i32, i32) {
    %c0_i32 = arith.constant 0 : i32
    %c0_i32_0 = arith.constant 0 : i32
    %c0_i32_1 = arith.constant 0 : i32
    return %c0_i32, %c0_i32_0 : i32, i32
  }
  func.func @transform_12(%arg0: i32) -> (i32, i32) {
    %c0_i32 = arith.constant 0 : i32
    %c0_i32_0 = arith.constant 0 : i32
    %c0_i32_1 = arith.constant 0 : i32
    return %c0_i32, %c0_i32_0 : i32, i32
  }
  func.func @transform_13(%arg0: i32) -> (i32, i32) {
    %c0_i32 = arith.constant 0 : i32
    %c0_i32_0 = arith.constant 0 : i32
    %c0_i32_1 = arith.constant 0 : i32
    return %c0_i32, %c0_i32_0 : i32, i32
  }
  func.func @transform_14(%arg0: i32) -> (i32, i32) {
    %c0_i32 = arith.constant 0 : i32
    %c0_i32_0 = arith.constant 0 : i32
    %c0_i32_1 = arith.constant 0 : i32
    return %c0_i32, %c0_i32_0 : i32, i32
  }
  func.func @transform_15(%arg0: i32) -> (i32, i32) {
    %c0_i32 = arith.constant 0 : i32
    %c0_i32_0 = arith.constant 0 : i32
    %c0_i32_1 = arith.constant 0 : i32
    return %c0_i32, %c0_i32_0 : i32, i32
  }
  func.func @transform_16(%arg0: i32) -> (i32, i32) {
    %c0_i32 = arith.constant 0 : i32
    %c0_i32_0 = arith.constant 0 : i32
    %c0_i32_1 = arith.constant 0 : i32
    return %c0_i32, %c0_i32_0 : i32, i32
  }
  func.func @transform_17(%arg0: i32) -> (i32, i32) {
    %c0_i32 = arith.constant 0 : i32
    %c0_i32_0 = arith.constant 0 : i32
    %c0_i32_1 = arith.constant 0 : i32
    return %c0_i32, %c0_i32_0 : i32, i32
  }
  func.func @transform_18(%arg0: i32) -> (i32, i32) {
    %c0_i32 = arith.constant 0 : i32
    %c0_i32_0 = arith.constant 0 : i32
    %c0_i32_1 = arith.constant 0 : i32
    return %c0_i32, %c0_i32_0 : i32, i32
  }
  func.func @transform_19(%arg0: i32) -> (i32, i32) {
    %c0_i32 = arith.constant 0 : i32
    %c0_i32_0 = arith.constant 0 : i32
    %c0_i32_1 = arith.constant 0 : i32
    return %c0_i32, %c0_i32_0 : i32, i32
  }
  func.func @transform_20(%arg0: i32) -> (i32, i32, i32) {
    %c0_i32 = arith.constant 0 : i32
    %c0_i32_0 = arith.constant 0 : i32
    %c0_i32_1 = arith.constant 0 : i32
    return %arg0, %c0_i32, %c0_i32_0 : i32, i32, i32
  }
}

module attributes {stable_mosaic.version = 11 : i64} {
  func.func @_layer_kernel(%arg0: i32, %arg1: memref<2x4x16xf32, #tpu.memory_space<vmem>>, %arg2: memref<1x16xf32, #tpu.memory_space<vmem>>, %arg3: memref<1x16xf32, #tpu.memory_space<vmem>>, %arg4: memref<16x16xbf16, #tpu.memory_space<vmem>>, %arg5: memref<1x16xf32, #tpu.memory_space<vmem>>, %arg6: memref<16x16xbf16, #tpu.memory_space<vmem>>, %arg7: memref<16x16xbf16, #tpu.memory_space<vmem>>, %arg8: memref<1x16xf32, #tpu.memory_space<vmem>>, %arg9: memref<16x16xbf16, #tpu.memory_space<vmem>>, %arg10: memref<1x16xf32, #tpu.memory_space<vmem>>, %arg11: memref<1x16xf32, #tpu.memory_space<vmem>>, %arg12: memref<1x16xf32, #tpu.memory_space<vmem>>, %arg13: memref<16x64xbf16, #tpu.memory_space<vmem>>, %arg14: memref<1x64xf32, #tpu.memory_space<vmem>>, %arg15: memref<64x16xbf16, #tpu.memory_space<vmem>>, %arg16: memref<1x16xf32, #tpu.memory_space<vmem>>, %arg17: memref<1x16xf32, #tpu.memory_space<vmem>>, %arg18: memref<1x16xf32, #tpu.memory_space<vmem>>, %arg19: memref<16x2xbf16, #tpu.memory_space<vmem>>, %arg20: memref<1x2xf32, #tpu.memory_space<vmem>>, %arg21: memref<1x2x2xf32, #tpu.memory_space<vmem>>) attributes {dimension_semantics = [#tpu.dimension_semantics<parallel>], iteration_bounds = array<i64: 1>, scalar_prefetch = 0 : i64, scratch_operands = 0 : i64, tpu.core_type = #tpu.core_type<tc>, window_params = [{transform_indices = @transform_0, window_bounds = array<i64: 2, 4, 16>}, {pipeline_mode = #tpu.pipeline_mode<synchronous>, transform_indices = @transform_1, window_bounds = array<i64: 1, 16>}, {pipeline_mode = #tpu.pipeline_mode<synchronous>, transform_indices = @transform_2, window_bounds = array<i64: 1, 16>}, {pipeline_mode = #tpu.pipeline_mode<synchronous>, transform_indices = @transform_3, window_bounds = array<i64: 16, 16>}, {pipeline_mode = #tpu.pipeline_mode<synchronous>, transform_indices = @transform_4, window_bounds = array<i64: 1, 16>}, {pipeline_mode = #tpu.pipeline_mode<synchronous>, transform_indices = @transform_5, window_bounds = array<i64: 16, 16>}, {pipeline_mode = #tpu.pipeline_mode<synchronous>, transform_indices = @transform_6, window_bounds = array<i64: 16, 16>}, {pipeline_mode = #tpu.pipeline_mode<synchronous>, transform_indices = @transform_7, window_bounds = array<i64: 1, 16>}, {pipeline_mode = #tpu.pipeline_mode<synchronous>, transform_indices = @transform_8, window_bounds = array<i64: 16, 16>}, {pipeline_mode = #tpu.pipeline_mode<synchronous>, transform_indices = @transform_9, window_bounds = array<i64: 1, 16>}, {pipeline_mode = #tpu.pipeline_mode<synchronous>, transform_indices = @transform_10, window_bounds = array<i64: 1, 16>}, {pipeline_mode = #tpu.pipeline_mode<synchronous>, transform_indices = @transform_11, window_bounds = array<i64: 1, 16>}, {pipeline_mode = #tpu.pipeline_mode<synchronous>, transform_indices = @transform_12, window_bounds = array<i64: 16, 64>}, {pipeline_mode = #tpu.pipeline_mode<synchronous>, transform_indices = @transform_13, window_bounds = array<i64: 1, 64>}, {pipeline_mode = #tpu.pipeline_mode<synchronous>, transform_indices = @transform_14, window_bounds = array<i64: 64, 16>}, {pipeline_mode = #tpu.pipeline_mode<synchronous>, transform_indices = @transform_15, window_bounds = array<i64: 1, 16>}, {pipeline_mode = #tpu.pipeline_mode<synchronous>, transform_indices = @transform_16, window_bounds = array<i64: 1, 16>}, {pipeline_mode = #tpu.pipeline_mode<synchronous>, transform_indices = @transform_17, window_bounds = array<i64: 1, 16>}, {pipeline_mode = #tpu.pipeline_mode<synchronous>, transform_indices = @transform_18, window_bounds = array<i64: 16, 2>}, {pipeline_mode = #tpu.pipeline_mode<synchronous>, transform_indices = @transform_19, window_bounds = array<i64: 1, 2>}, {transform_indices = @transform_20, window_bounds = array<i64: 1, 2, 2>}]} {
    %c0 = arith.constant 0 : index
    %c0_0 = arith.constant 0 : index
    %c0_1 = arith.constant 0 : index
    %0 = vector.load %arg1[%c0, %c0_0, %c0_1] : memref<2x4x16xf32, #tpu.memory_space<vmem>>, vector<2x4x16xf32>
    %1 = vector.shape_cast %0 : vector<2x4x16xf32> to vector<8x16xf32>
    %c0_2 = arith.constant 0 : index
    %c0_3 = arith.constant 0 : index
    %2 = vector.load %arg2[%c0_2, %c0_3] : memref<1x16xf32, #tpu.memory_space<vmem>>, vector<1x16xf32>
    %c0_4 = arith.constant 0 : index
    %c0_5 = arith.constant 0 : index
    %3 = vector.load %arg3[%c0_4, %c0_5] : memref<1x16xf32, #tpu.memory_space<vmem>>, vector<1x16xf32>
    %c0_6 = arith.constant 0 : index
    %c0_7 = arith.constant 0 : index
    %4 = vector.load %arg4[%c0_6, %c0_7] : memref<16x16xbf16, #tpu.memory_space<vmem>>, vector<16x16xbf16>
    %c0_8 = arith.constant 0 : index
    %c0_9 = arith.constant 0 : index
    %5 = vector.load %arg5[%c0_8, %c0_9] : memref<1x16xf32, #tpu.memory_space<vmem>>, vector<1x16xf32>
    %c0_10 = arith.constant 0 : index
    %c0_11 = arith.constant 0 : index
    %6 = vector.load %arg6[%c0_10, %c0_11] : memref<16x16xbf16, #tpu.memory_space<vmem>>, vector<16x16xbf16>
    %c0_12 = arith.constant 0 : index
    %c0_13 = arith.constant 0 : index
    %7 = vector.load %arg7[%c0_12, %c0_13] : memref<16x16xbf16, #tpu.memory_space<vmem>>, vector<16x16xbf16>
    %c0_14 = arith.constant 0 : index
    %c0_15 = arith.constant 0 : index
    %8 = vector.load %arg8[%c0_14, %c0_15] : memref<1x16xf32, #tpu.memory_space<vmem>>, vector<1x16xf32>
    %c0_16 = arith.constant 0 : index
    %c0_17 = arith.constant 0 : index
    %9 = vector.load %arg9[%c0_16, %c0_17] : memref<16x16xbf16, #tpu.memory_space<vmem>>, vector<16x16xbf16>
    %c0_18 = arith.constant 0 : index
    %c0_19 = arith.constant 0 : index
    %10 = vector.load %arg10[%c0_18, %c0_19] : memref<1x16xf32, #tpu.memory_space<vmem>>, vector<1x16xf32>
    %c0_20 = arith.constant 0 : index
    %c0_21 = arith.constant 0 : index
    %11 = vector.load %arg11[%c0_20, %c0_21] : memref<1x16xf32, #tpu.memory_space<vmem>>, vector<1x16xf32>
    %c0_22 = arith.constant 0 : index
    %c0_23 = arith.constant 0 : index
    %12 = vector.load %arg12[%c0_22, %c0_23] : memref<1x16xf32, #tpu.memory_space<vmem>>, vector<1x16xf32>
    %c0_24 = arith.constant 0 : index
    %c0_25 = arith.constant 0 : index
    %13 = vector.load %arg13[%c0_24, %c0_25] : memref<16x64xbf16, #tpu.memory_space<vmem>>, vector<16x64xbf16>
    %c0_26 = arith.constant 0 : index
    %c0_27 = arith.constant 0 : index
    %14 = vector.load %arg14[%c0_26, %c0_27] : memref<1x64xf32, #tpu.memory_space<vmem>>, vector<1x64xf32>
    %c0_28 = arith.constant 0 : index
    %c0_29 = arith.constant 0 : index
    %15 = vector.load %arg15[%c0_28, %c0_29] : memref<64x16xbf16, #tpu.memory_space<vmem>>, vector<64x16xbf16>
    %c0_30 = arith.constant 0 : index
    %c0_31 = arith.constant 0 : index
    %16 = vector.load %arg16[%c0_30, %c0_31] : memref<1x16xf32, #tpu.memory_space<vmem>>, vector<1x16xf32>
    %cst = arith.constant dense<0.000000e+00> : vector<8xf32>
    %17 = vector.multi_reduction <add>, %1, %cst [1] : vector<8x16xf32> to vector<8xf32>
    %18 = vector.shape_cast %17 : vector<8xf32> to vector<8x1xf32>
    %cst_32 = arith.constant 1.600000e+01 : f32
    %19 = vector.broadcast %cst_32 : f32 to vector<8x1xf32>
    %20 = arith.divf %18, %19 : vector<8x1xf32>
    %21 = vector.broadcast %20 : vector<8x1xf32> to vector<8x16xf32>
    %22 = arith.subf %1, %21 : vector<8x16xf32>
    %23 = arith.mulf %22, %22 : vector<8x16xf32>
    %cst_33 = arith.constant dense<0.000000e+00> : vector<8xf32>
    %24 = vector.multi_reduction <add>, %23, %cst_33 [1] : vector<8x16xf32> to vector<8xf32>
    %25 = vector.shape_cast %24 : vector<8xf32> to vector<8x1xf32>
    %cst_34 = arith.constant 1.600000e+01 : f32
    %26 = vector.broadcast %cst_34 : f32 to vector<8x1xf32>
    %27 = arith.divf %25, %26 : vector<8x1xf32>
    %28 = vector.broadcast %20 : vector<8x1xf32> to vector<8x16xf32>
    %29 = arith.subf %1, %28 : vector<8x16xf32>
    %cst_35 = arith.constant 9.99999974E-6 : f32
    %30 = vector.broadcast %cst_35 : f32 to vector<8x1xf32>
    %31 = arith.addf %27, %30 : vector<8x1xf32>
    %32 = math.rsqrt %31 : vector<8x1xf32>
    %33 = vector.broadcast %32 : vector<8x1xf32> to vector<8x16xf32>
    %34 = arith.mulf %29, %33 : vector<8x16xf32>
    %35 = vector.broadcast %2 : vector<1x16xf32> to vector<8x16xf32>
    %36 = arith.mulf %34, %35 : vector<8x16xf32>
    %37 = vector.broadcast %3 : vector<1x16xf32> to vector<8x16xf32>
    %38 = arith.addf %36, %37 : vector<8x16xf32>
    %39 = arith.truncf %38 : vector<8x16xf32> to vector<8x16xbf16>
    %cst_36 = arith.constant dense<0.000000e+00> : vector<8x16xf32>
    %40 = tpu.matmul %39, %4, %cst_36 {dimension_numbers = #tpu.dot_dimension_numbers<[1], [0], [0], [1], [0, 0, 1, 1], [], []>} : vector<8x16xbf16>, vector<16x16xbf16>, vector<8x16xf32> -> vector<8x16xf32>
    %41 = vector.broadcast %5 : vector<1x16xf32> to vector<8x16xf32>
    %42 = arith.addf %40, %41 : vector<8x16xf32>
    %cst_37 = arith.constant dense<0.000000e+00> : vector<8x16xf32>
    %43 = tpu.matmul %39, %6, %cst_37 {dimension_numbers = #tpu.dot_dimension_numbers<[1], [0], [0], [1], [0, 0, 1, 1], [], []>} : vector<8x16xbf16>, vector<16x16xbf16>, vector<8x16xf32> -> vector<8x16xf32>
    %cst_38 = arith.constant dense<0.000000e+00> : vector<8x16xf32>
    %44 = tpu.matmul %39, %7, %cst_38 {dimension_numbers = #tpu.dot_dimension_numbers<[1], [0], [0], [1], [0, 0, 1, 1], [], []>} : vector<8x16xbf16>, vector<16x16xbf16>, vector<8x16xf32> -> vector<8x16xf32>
    %45 = vector.broadcast %8 : vector<1x16xf32> to vector<8x16xf32>
    %46 = arith.addf %44, %45 : vector<8x16xf32>
    %47 = vector.shape_cast %42 : vector<8x16xf32> to vector<2x4x16xf32>
    %48 = vector.shape_cast %43 : vector<8x16xf32> to vector<2x4x16xf32>
    %49 = vector.shape_cast %46 : vector<8x16xf32> to vector<2x4x16xf32>
    %cst_39 = arith.constant 0.000000e+00 : f32
    %50 = vector.broadcast %cst_39 : f32 to vector<8x16xf32>
    %51 = vector.extract_strided_slice %47 {offsets = [0, 0, 0], sizes = [2, 4, 2], strides = [1, 1, 1]} : vector<2x4x16xf32> to vector<2x4x2xf32>
    %52 = arith.truncf %51 : vector<2x4x2xf32> to vector<2x4x2xbf16>
    %53 = vector.extract_strided_slice %48 {offsets = [0, 0, 0], sizes = [2, 4, 2], strides = [1, 1, 1]} : vector<2x4x16xf32> to vector<2x4x2xf32>
    %54 = arith.truncf %53 : vector<2x4x2xf32> to vector<2x4x2xbf16>
    %55 = vector.extract_strided_slice %49 {offsets = [0, 0, 0], sizes = [2, 4, 2], strides = [1, 1, 1]} : vector<2x4x16xf32> to vector<2x4x2xf32>
    %56 = arith.truncf %55 : vector<2x4x2xf32> to vector<2x4x2xbf16>
    "tpu.trace_start"() <{level = 10 : i32, message = "bqd,bkd->bqk"}> : () -> ()
    %cst_40 = arith.constant dense<0.000000e+00> : vector<2x4x4xf32>
    %57 = tpu.matmul %52, %54, %cst_40 {dimension_numbers = #tpu.dot_dimension_numbers<[2], [2], [1], [1], [0, 0, 0, 1, 1, 1], [0], [0]>} : vector<2x4x2xbf16>, vector<2x4x2xbf16>, vector<2x4x4xf32> -> vector<2x4x4xf32>
    "tpu.trace_stop"() : () -> ()
    %cst_41 = arith.constant dense<0xFF800000> : vector<2x4xf32>
    %58 = vector.multi_reduction <maximumf>, %57, %cst_41 [2] : vector<2x4x4xf32> to vector<2x4xf32>
    %59 = vector.shape_cast %58 : vector<2x4xf32> to vector<2x4x1xf32>
    %60 = vector.broadcast %59 : vector<2x4x1xf32> to vector<2x4x4xf32>
    %61 = arith.subf %57, %60 : vector<2x4x4xf32>
    %62 = math.exp %61 : vector<2x4x4xf32>
    %cst_42 = arith.constant dense<0.000000e+00> : vector<2x4xf32>
    %63 = vector.multi_reduction <add>, %62, %cst_42 [2] : vector<2x4x4xf32> to vector<2x4xf32>
    %64 = vector.shape_cast %63 : vector<2x4xf32> to vector<2x4x1xf32>
    %65 = tpu.reciprocal %64 {approx = true} : vector<2x4x1xf32> -> vector<2x4x1xf32>
    %66 = vector.broadcast %65 : vector<2x4x1xf32> to vector<2x4x4xf32>
    %67 = arith.mulf %62, %66 : vector<2x4x4xf32>
    %68 = arith.truncf %67 : vector<2x4x4xf32> to vector<2x4x4xbf16>
    "tpu.trace_start"() <{level = 10 : i32, message = "bqk,bkd->bqd"}> : () -> ()
    %cst_43 = arith.constant dense<0.000000e+00> : vector<2x4x2xf32>
    %69 = tpu.matmul %68, %56, %cst_43 {dimension_numbers = #tpu.dot_dimension_numbers<[2], [1], [1], [2], [0, 0, 0, 1, 1, 2], [0], [0]>} : vector<2x4x4xbf16>, vector<2x4x2xbf16>, vector<2x4x2xf32> -> vector<2x4x2xf32>
    "tpu.trace_stop"() : () -> ()
    %70 = vector.shape_cast %69 : vector<2x4x2xf32> to vector<8x2xf32>
    %71 = arith.truncf %70 : vector<8x2xf32> to vector<8x2xbf16>
    %72 = vector.extract_strided_slice %9 {offsets = [0, 0], sizes = [2, 16], strides = [1, 1]} : vector<16x16xbf16> to vector<2x16xbf16>
    %cst_44 = arith.constant dense<0.000000e+00> : vector<8x16xf32>
    %73 = tpu.matmul %71, %72, %cst_44 {dimension_numbers = #tpu.dot_dimension_numbers<[1], [0], [0], [1], [0, 0, 1, 1], [], []>} : vector<8x2xbf16>, vector<2x16xbf16>, vector<8x16xf32> -> vector<8x16xf32>
    %74 = arith.addf %50, %73 : vector<8x16xf32>
    %75 = vector.extract_strided_slice %47 {offsets = [0, 0, 2], sizes = [2, 4, 2], strides = [1, 1, 1]} : vector<2x4x16xf32> to vector<2x4x2xf32>
    %76 = arith.truncf %75 : vector<2x4x2xf32> to vector<2x4x2xbf16>
    %77 = vector.extract_strided_slice %48 {offsets = [0, 0, 2], sizes = [2, 4, 2], strides = [1, 1, 1]} : vector<2x4x16xf32> to vector<2x4x2xf32>
    %78 = arith.truncf %77 : vector<2x4x2xf32> to vector<2x4x2xbf16>
    %79 = vector.extract_strided_slice %49 {offsets = [0, 0, 2], sizes = [2, 4, 2], strides = [1, 1, 1]} : vector<2x4x16xf32> to vector<2x4x2xf32>
    %80 = arith.truncf %79 : vector<2x4x2xf32> to vector<2x4x2xbf16>
    "tpu.trace_start"() <{level = 10 : i32, message = "bqd,bkd->bqk"}> : () -> ()
    %cst_45 = arith.constant dense<0.000000e+00> : vector<2x4x4xf32>
    %81 = tpu.matmul %76, %78, %cst_45 {dimension_numbers = #tpu.dot_dimension_numbers<[2], [2], [1], [1], [0, 0, 0, 1, 1, 1], [0], [0]>} : vector<2x4x2xbf16>, vector<2x4x2xbf16>, vector<2x4x4xf32> -> vector<2x4x4xf32>
    "tpu.trace_stop"() : () -> ()
    %cst_46 = arith.constant dense<0xFF800000> : vector<2x4xf32>
    %82 = vector.multi_reduction <maximumf>, %81, %cst_46 [2] : vector<2x4x4xf32> to vector<2x4xf32>
    %83 = vector.shape_cast %82 : vector<2x4xf32> to vector<2x4x1xf32>
    %84 = vector.broadcast %83 : vector<2x4x1xf32> to vector<2x4x4xf32>
    %85 = arith.subf %81, %84 : vector<2x4x4xf32>
    %86 = math.exp %85 : vector<2x4x4xf32>
    %cst_47 = arith.constant dense<0.000000e+00> : vector<2x4xf32>
    %87 = vector.multi_reduction <add>, %86, %cst_47 [2] : vector<2x4x4xf32> to vector<2x4xf32>
    %88 = vector.shape_cast %87 : vector<2x4xf32> to vector<2x4x1xf32>
    %89 = tpu.reciprocal %88 {approx = true} : vector<2x4x1xf32> -> vector<2x4x1xf32>
    %90 = vector.broadcast %89 : vector<2x4x1xf32> to vector<2x4x4xf32>
    %91 = arith.mulf %86, %90 : vector<2x4x4xf32>
    %92 = arith.truncf %91 : vector<2x4x4xf32> to vector<2x4x4xbf16>
    "tpu.trace_start"() <{level = 10 : i32, message = "bqk,bkd->bqd"}> : () -> ()
    %cst_48 = arith.constant dense<0.000000e+00> : vector<2x4x2xf32>
    %93 = tpu.matmul %92, %80, %cst_48 {dimension_numbers = #tpu.dot_dimension_numbers<[2], [1], [1], [2], [0, 0, 0, 1, 1, 2], [0], [0]>} : vector<2x4x4xbf16>, vector<2x4x2xbf16>, vector<2x4x2xf32> -> vector<2x4x2xf32>
    "tpu.trace_stop"() : () -> ()
    %94 = vector.shape_cast %93 : vector<2x4x2xf32> to vector<8x2xf32>
    %95 = arith.truncf %94 : vector<8x2xf32> to vector<8x2xbf16>
    %96 = vector.extract_strided_slice %9 {offsets = [2, 0], sizes = [2, 16], strides = [1, 1]} : vector<16x16xbf16> to vector<2x16xbf16>
    %cst_49 = arith.constant dense<0.000000e+00> : vector<8x16xf32>
    %97 = tpu.matmul %95, %96, %cst_49 {dimension_numbers = #tpu.dot_dimension_numbers<[1], [0], [0], [1], [0, 0, 1, 1], [], []>} : vector<8x2xbf16>, vector<2x16xbf16>, vector<8x16xf32> -> vector<8x16xf32>
    %98 = arith.addf %74, %97 : vector<8x16xf32>
    %99 = vector.extract_strided_slice %47 {offsets = [0, 0, 4], sizes = [2, 4, 2], strides = [1, 1, 1]} : vector<2x4x16xf32> to vector<2x4x2xf32>
    %100 = arith.truncf %99 : vector<2x4x2xf32> to vector<2x4x2xbf16>
    %101 = vector.extract_strided_slice %48 {offsets = [0, 0, 4], sizes = [2, 4, 2], strides = [1, 1, 1]} : vector<2x4x16xf32> to vector<2x4x2xf32>
    %102 = arith.truncf %101 : vector<2x4x2xf32> to vector<2x4x2xbf16>
    %103 = vector.extract_strided_slice %49 {offsets = [0, 0, 4], sizes = [2, 4, 2], strides = [1, 1, 1]} : vector<2x4x16xf32> to vector<2x4x2xf32>
    %104 = arith.truncf %103 : vector<2x4x2xf32> to vector<2x4x2xbf16>
    "tpu.trace_start"() <{level = 10 : i32, message = "bqd,bkd->bqk"}> : () -> ()
    %cst_50 = arith.constant dense<0.000000e+00> : vector<2x4x4xf32>
    %105 = tpu.matmul %100, %102, %cst_50 {dimension_numbers = #tpu.dot_dimension_numbers<[2], [2], [1], [1], [0, 0, 0, 1, 1, 1], [0], [0]>} : vector<2x4x2xbf16>, vector<2x4x2xbf16>, vector<2x4x4xf32> -> vector<2x4x4xf32>
    "tpu.trace_stop"() : () -> ()
    %cst_51 = arith.constant dense<0xFF800000> : vector<2x4xf32>
    %106 = vector.multi_reduction <maximumf>, %105, %cst_51 [2] : vector<2x4x4xf32> to vector<2x4xf32>
    %107 = vector.shape_cast %106 : vector<2x4xf32> to vector<2x4x1xf32>
    %108 = vector.broadcast %107 : vector<2x4x1xf32> to vector<2x4x4xf32>
    %109 = arith.subf %105, %108 : vector<2x4x4xf32>
    %110 = math.exp %109 : vector<2x4x4xf32>
    %cst_52 = arith.constant dense<0.000000e+00> : vector<2x4xf32>
    %111 = vector.multi_reduction <add>, %110, %cst_52 [2] : vector<2x4x4xf32> to vector<2x4xf32>
    %112 = vector.shape_cast %111 : vector<2x4xf32> to vector<2x4x1xf32>
    %113 = tpu.reciprocal %112 {approx = true} : vector<2x4x1xf32> -> vector<2x4x1xf32>
    %114 = vector.broadcast %113 : vector<2x4x1xf32> to vector<2x4x4xf32>
    %115 = arith.mulf %110, %114 : vector<2x4x4xf32>
    %116 = arith.truncf %115 : vector<2x4x4xf32> to vector<2x4x4xbf16>
    "tpu.trace_start"() <{level = 10 : i32, message = "bqk,bkd->bqd"}> : () -> ()
    %cst_53 = arith.constant dense<0.000000e+00> : vector<2x4x2xf32>
    %117 = tpu.matmul %116, %104, %cst_53 {dimension_numbers = #tpu.dot_dimension_numbers<[2], [1], [1], [2], [0, 0, 0, 1, 1, 2], [0], [0]>} : vector<2x4x4xbf16>, vector<2x4x2xbf16>, vector<2x4x2xf32> -> vector<2x4x2xf32>
    "tpu.trace_stop"() : () -> ()
    %118 = vector.shape_cast %117 : vector<2x4x2xf32> to vector<8x2xf32>
    %119 = arith.truncf %118 : vector<8x2xf32> to vector<8x2xbf16>
    %120 = vector.extract_strided_slice %9 {offsets = [4, 0], sizes = [2, 16], strides = [1, 1]} : vector<16x16xbf16> to vector<2x16xbf16>
    %cst_54 = arith.constant dense<0.000000e+00> : vector<8x16xf32>
    %121 = tpu.matmul %119, %120, %cst_54 {dimension_numbers = #tpu.dot_dimension_numbers<[1], [0], [0], [1], [0, 0, 1, 1], [], []>} : vector<8x2xbf16>, vector<2x16xbf16>, vector<8x16xf32> -> vector<8x16xf32>
    %122 = arith.addf %98, %121 : vector<8x16xf32>
    %123 = vector.extract_strided_slice %47 {offsets = [0, 0, 6], sizes = [2, 4, 2], strides = [1, 1, 1]} : vector<2x4x16xf32> to vector<2x4x2xf32>
    %124 = arith.truncf %123 : vector<2x4x2xf32> to vector<2x4x2xbf16>
    %125 = vector.extract_strided_slice %48 {offsets = [0, 0, 6], sizes = [2, 4, 2], strides = [1, 1, 1]} : vector<2x4x16xf32> to vector<2x4x2xf32>
    %126 = arith.truncf %125 : vector<2x4x2xf32> to vector<2x4x2xbf16>
    %127 = vector.extract_strided_slice %49 {offsets = [0, 0, 6], sizes = [2, 4, 2], strides = [1, 1, 1]} : vector<2x4x16xf32> to vector<2x4x2xf32>
    %128 = arith.truncf %127 : vector<2x4x2xf32> to vector<2x4x2xbf16>
    "tpu.trace_start"() <{level = 10 : i32, message = "bqd,bkd->bqk"}> : () -> ()
    %cst_55 = arith.constant dense<0.000000e+00> : vector<2x4x4xf32>
    %129 = tpu.matmul %124, %126, %cst_55 {dimension_numbers = #tpu.dot_dimension_numbers<[2], [2], [1], [1], [0, 0, 0, 1, 1, 1], [0], [0]>} : vector<2x4x2xbf16>, vector<2x4x2xbf16>, vector<2x4x4xf32> -> vector<2x4x4xf32>
    "tpu.trace_stop"() : () -> ()
    %cst_56 = arith.constant dense<0xFF800000> : vector<2x4xf32>
    %130 = vector.multi_reduction <maximumf>, %129, %cst_56 [2] : vector<2x4x4xf32> to vector<2x4xf32>
    %131 = vector.shape_cast %130 : vector<2x4xf32> to vector<2x4x1xf32>
    %132 = vector.broadcast %131 : vector<2x4x1xf32> to vector<2x4x4xf32>
    %133 = arith.subf %129, %132 : vector<2x4x4xf32>
    %134 = math.exp %133 : vector<2x4x4xf32>
    %cst_57 = arith.constant dense<0.000000e+00> : vector<2x4xf32>
    %135 = vector.multi_reduction <add>, %134, %cst_57 [2] : vector<2x4x4xf32> to vector<2x4xf32>
    %136 = vector.shape_cast %135 : vector<2x4xf32> to vector<2x4x1xf32>
    %137 = tpu.reciprocal %136 {approx = true} : vector<2x4x1xf32> -> vector<2x4x1xf32>
    %138 = vector.broadcast %137 : vector<2x4x1xf32> to vector<2x4x4xf32>
    %139 = arith.mulf %134, %138 : vector<2x4x4xf32>
    %140 = arith.truncf %139 : vector<2x4x4xf32> to vector<2x4x4xbf16>
    "tpu.trace_start"() <{level = 10 : i32, message = "bqk,bkd->bqd"}> : () -> ()
    %cst_58 = arith.constant dense<0.000000e+00> : vector<2x4x2xf32>
    %141 = tpu.matmul %140, %128, %cst_58 {dimension_numbers = #tpu.dot_dimension_numbers<[2], [1], [1], [2], [0, 0, 0, 1, 1, 2], [0], [0]>} : vector<2x4x4xbf16>, vector<2x4x2xbf16>, vector<2x4x2xf32> -> vector<2x4x2xf32>
    "tpu.trace_stop"() : () -> ()
    %142 = vector.shape_cast %141 : vector<2x4x2xf32> to vector<8x2xf32>
    %143 = arith.truncf %142 : vector<8x2xf32> to vector<8x2xbf16>
    %144 = vector.extract_strided_slice %9 {offsets = [6, 0], sizes = [2, 16], strides = [1, 1]} : vector<16x16xbf16> to vector<2x16xbf16>
    %cst_59 = arith.constant dense<0.000000e+00> : vector<8x16xf32>
    %145 = tpu.matmul %143, %144, %cst_59 {dimension_numbers = #tpu.dot_dimension_numbers<[1], [0], [0], [1], [0, 0, 1, 1], [], []>} : vector<8x2xbf16>, vector<2x16xbf16>, vector<8x16xf32> -> vector<8x16xf32>
    %146 = arith.addf %122, %145 : vector<8x16xf32>
    %147 = vector.extract_strided_slice %47 {offsets = [0, 0, 8], sizes = [2, 4, 2], strides = [1, 1, 1]} : vector<2x4x16xf32> to vector<2x4x2xf32>
    %148 = arith.truncf %147 : vector<2x4x2xf32> to vector<2x4x2xbf16>
    %149 = vector.extract_strided_slice %48 {offsets = [0, 0, 8], sizes = [2, 4, 2], strides = [1, 1, 1]} : vector<2x4x16xf32> to vector<2x4x2xf32>
    %150 = arith.truncf %149 : vector<2x4x2xf32> to vector<2x4x2xbf16>
    %151 = vector.extract_strided_slice %49 {offsets = [0, 0, 8], sizes = [2, 4, 2], strides = [1, 1, 1]} : vector<2x4x16xf32> to vector<2x4x2xf32>
    %152 = arith.truncf %151 : vector<2x4x2xf32> to vector<2x4x2xbf16>
    "tpu.trace_start"() <{level = 10 : i32, message = "bqd,bkd->bqk"}> : () -> ()
    %cst_60 = arith.constant dense<0.000000e+00> : vector<2x4x4xf32>
    %153 = tpu.matmul %148, %150, %cst_60 {dimension_numbers = #tpu.dot_dimension_numbers<[2], [2], [1], [1], [0, 0, 0, 1, 1, 1], [0], [0]>} : vector<2x4x2xbf16>, vector<2x4x2xbf16>, vector<2x4x4xf32> -> vector<2x4x4xf32>
    "tpu.trace_stop"() : () -> ()
    %cst_61 = arith.constant dense<0xFF800000> : vector<2x4xf32>
    %154 = vector.multi_reduction <maximumf>, %153, %cst_61 [2] : vector<2x4x4xf32> to vector<2x4xf32>
    %155 = vector.shape_cast %154 : vector<2x4xf32> to vector<2x4x1xf32>
    %156 = vector.broadcast %155 : vector<2x4x1xf32> to vector<2x4x4xf32>
    %157 = arith.subf %153, %156 : vector<2x4x4xf32>
    %158 = math.exp %157 : vector<2x4x4xf32>
    %cst_62 = arith.constant dense<0.000000e+00> : vector<2x4xf32>
    %159 = vector.multi_reduction <add>, %158, %cst_62 [2] : vector<2x4x4xf32> to vector<2x4xf32>
    %160 = vector.shape_cast %159 : vector<2x4xf32> to vector<2x4x1xf32>
    %161 = tpu.reciprocal %160 {approx = true} : vector<2x4x1xf32> -> vector<2x4x1xf32>
    %162 = vector.broadcast %161 : vector<2x4x1xf32> to vector<2x4x4xf32>
    %163 = arith.mulf %158, %162 : vector<2x4x4xf32>
    %164 = arith.truncf %163 : vector<2x4x4xf32> to vector<2x4x4xbf16>
    "tpu.trace_start"() <{level = 10 : i32, message = "bqk,bkd->bqd"}> : () -> ()
    %cst_63 = arith.constant dense<0.000000e+00> : vector<2x4x2xf32>
    %165 = tpu.matmul %164, %152, %cst_63 {dimension_numbers = #tpu.dot_dimension_numbers<[2], [1], [1], [2], [0, 0, 0, 1, 1, 2], [0], [0]>} : vector<2x4x4xbf16>, vector<2x4x2xbf16>, vector<2x4x2xf32> -> vector<2x4x2xf32>
    "tpu.trace_stop"() : () -> ()
    %166 = vector.shape_cast %165 : vector<2x4x2xf32> to vector<8x2xf32>
    %167 = arith.truncf %166 : vector<8x2xf32> to vector<8x2xbf16>
    %168 = vector.extract_strided_slice %9 {offsets = [8, 0], sizes = [2, 16], strides = [1, 1]} : vector<16x16xbf16> to vector<2x16xbf16>
    %cst_64 = arith.constant dense<0.000000e+00> : vector<8x16xf32>
    %169 = tpu.matmul %167, %168, %cst_64 {dimension_numbers = #tpu.dot_dimension_numbers<[1], [0], [0], [1], [0, 0, 1, 1], [], []>} : vector<8x2xbf16>, vector<2x16xbf16>, vector<8x16xf32> -> vector<8x16xf32>
    %170 = arith.addf %146, %169 : vector<8x16xf32>
    %171 = vector.extract_strided_slice %47 {offsets = [0, 0, 10], sizes = [2, 4, 2], strides = [1, 1, 1]} : vector<2x4x16xf32> to vector<2x4x2xf32>
    %172 = arith.truncf %171 : vector<2x4x2xf32> to vector<2x4x2xbf16>
    %173 = vector.extract_strided_slice %48 {offsets = [0, 0, 10], sizes = [2, 4, 2], strides = [1, 1, 1]} : vector<2x4x16xf32> to vector<2x4x2xf32>
    %174 = arith.truncf %173 : vector<2x4x2xf32> to vector<2x4x2xbf16>
    %175 = vector.extract_strided_slice %49 {offsets = [0, 0, 10], sizes = [2, 4, 2], strides = [1, 1, 1]} : vector<2x4x16xf32> to vector<2x4x2xf32>
    %176 = arith.truncf %175 : vector<2x4x2xf32> to vector<2x4x2xbf16>
    "tpu.trace_start"() <{level = 10 : i32, message = "bqd,bkd->bqk"}> : () -> ()
    %cst_65 = arith.constant dense<0.000000e+00> : vector<2x4x4xf32>
    %177 = tpu.matmul %172, %174, %cst_65 {dimension_numbers = #tpu.dot_dimension_numbers<[2], [2], [1], [1], [0, 0, 0, 1, 1, 1], [0], [0]>} : vector<2x4x2xbf16>, vector<2x4x2xbf16>, vector<2x4x4xf32> -> vector<2x4x4xf32>
    "tpu.trace_stop"() : () -> ()
    %cst_66 = arith.constant dense<0xFF800000> : vector<2x4xf32>
    %178 = vector.multi_reduction <maximumf>, %177, %cst_66 [2] : vector<2x4x4xf32> to vector<2x4xf32>
    %179 = vector.shape_cast %178 : vector<2x4xf32> to vector<2x4x1xf32>
    %180 = vector.broadcast %179 : vector<2x4x1xf32> to vector<2x4x4xf32>
    %181 = arith.subf %177, %180 : vector<2x4x4xf32>
    %182 = math.exp %181 : vector<2x4x4xf32>
    %cst_67 = arith.constant dense<0.000000e+00> : vector<2x4xf32>
    %183 = vector.multi_reduction <add>, %182, %cst_67 [2] : vector<2x4x4xf32> to vector<2x4xf32>
    %184 = vector.shape_cast %183 : vector<2x4xf32> to vector<2x4x1xf32>
    %185 = tpu.reciprocal %184 {approx = true} : vector<2x4x1xf32> -> vector<2x4x1xf32>
    %186 = vector.broadcast %185 : vector<2x4x1xf32> to vector<2x4x4xf32>
    %187 = arith.mulf %182, %186 : vector<2x4x4xf32>
    %188 = arith.truncf %187 : vector<2x4x4xf32> to vector<2x4x4xbf16>
    "tpu.trace_start"() <{level = 10 : i32, message = "bqk,bkd->bqd"}> : () -> ()
    %cst_68 = arith.constant dense<0.000000e+00> : vector<2x4x2xf32>
    %189 = tpu.matmul %188, %176, %cst_68 {dimension_numbers = #tpu.dot_dimension_numbers<[2], [1], [1], [2], [0, 0, 0, 1, 1, 2], [0], [0]>} : vector<2x4x4xbf16>, vector<2x4x2xbf16>, vector<2x4x2xf32> -> vector<2x4x2xf32>
    "tpu.trace_stop"() : () -> ()
    %190 = vector.shape_cast %189 : vector<2x4x2xf32> to vector<8x2xf32>
    %191 = arith.truncf %190 : vector<8x2xf32> to vector<8x2xbf16>
    %192 = vector.extract_strided_slice %9 {offsets = [10, 0], sizes = [2, 16], strides = [1, 1]} : vector<16x16xbf16> to vector<2x16xbf16>
    %cst_69 = arith.constant dense<0.000000e+00> : vector<8x16xf32>
    %193 = tpu.matmul %191, %192, %cst_69 {dimension_numbers = #tpu.dot_dimension_numbers<[1], [0], [0], [1], [0, 0, 1, 1], [], []>} : vector<8x2xbf16>, vector<2x16xbf16>, vector<8x16xf32> -> vector<8x16xf32>
    %194 = arith.addf %170, %193 : vector<8x16xf32>
    %195 = vector.extract_strided_slice %47 {offsets = [0, 0, 12], sizes = [2, 4, 2], strides = [1, 1, 1]} : vector<2x4x16xf32> to vector<2x4x2xf32>
    %196 = arith.truncf %195 : vector<2x4x2xf32> to vector<2x4x2xbf16>
    %197 = vector.extract_strided_slice %48 {offsets = [0, 0, 12], sizes = [2, 4, 2], strides = [1, 1, 1]} : vector<2x4x16xf32> to vector<2x4x2xf32>
    %198 = arith.truncf %197 : vector<2x4x2xf32> to vector<2x4x2xbf16>
    %199 = vector.extract_strided_slice %49 {offsets = [0, 0, 12], sizes = [2, 4, 2], strides = [1, 1, 1]} : vector<2x4x16xf32> to vector<2x4x2xf32>
    %200 = arith.truncf %199 : vector<2x4x2xf32> to vector<2x4x2xbf16>
    "tpu.trace_start"() <{level = 10 : i32, message = "bqd,bkd->bqk"}> : () -> ()
    %cst_70 = arith.constant dense<0.000000e+00> : vector<2x4x4xf32>
    %201 = tpu.matmul %196, %198, %cst_70 {dimension_numbers = #tpu.dot_dimension_numbers<[2], [2], [1], [1], [0, 0, 0, 1, 1, 1], [0], [0]>} : vector<2x4x2xbf16>, vector<2x4x2xbf16>, vector<2x4x4xf32> -> vector<2x4x4xf32>
    "tpu.trace_stop"() : () -> ()
    %cst_71 = arith.constant dense<0xFF800000> : vector<2x4xf32>
    %202 = vector.multi_reduction <maximumf>, %201, %cst_71 [2] : vector<2x4x4xf32> to vector<2x4xf32>
    %203 = vector.shape_cast %202 : vector<2x4xf32> to vector<2x4x1xf32>
    %204 = vector.broadcast %203 : vector<2x4x1xf32> to vector<2x4x4xf32>
    %205 = arith.subf %201, %204 : vector<2x4x4xf32>
    %206 = math.exp %205 : vector<2x4x4xf32>
    %cst_72 = arith.constant dense<0.000000e+00> : vector<2x4xf32>
    %207 = vector.multi_reduction <add>, %206, %cst_72 [2] : vector<2x4x4xf32> to vector<2x4xf32>
    %208 = vector.shape_cast %207 : vector<2x4xf32> to vector<2x4x1xf32>
    %209 = tpu.reciprocal %208 {approx = true} : vector<2x4x1xf32> -> vector<2x4x1xf32>
    %210 = vector.broadcast %209 : vector<2x4x1xf32> to vector<2x4x4xf32>
    %211 = arith.mulf %206, %210 : vector<2x4x4xf32>
    %212 = arith.truncf %211 : vector<2x4x4xf32> to vector<2x4x4xbf16>
    "tpu.trace_start"() <{level = 10 : i32, message = "bqk,bkd->bqd"}> : () -> ()
    %cst_73 = arith.constant dense<0.000000e+00> : vector<2x4x2xf32>
    %213 = tpu.matmul %212, %200, %cst_73 {dimension_numbers = #tpu.dot_dimension_numbers<[2], [1], [1], [2], [0, 0, 0, 1, 1, 2], [0], [0]>} : vector<2x4x4xbf16>, vector<2x4x2xbf16>, vector<2x4x2xf32> -> vector<2x4x2xf32>
    "tpu.trace_stop"() : () -> ()
    %214 = vector.shape_cast %213 : vector<2x4x2xf32> to vector<8x2xf32>
    %215 = arith.truncf %214 : vector<8x2xf32> to vector<8x2xbf16>
    %216 = vector.extract_strided_slice %9 {offsets = [12, 0], sizes = [2, 16], strides = [1, 1]} : vector<16x16xbf16> to vector<2x16xbf16>
    %cst_74 = arith.constant dense<0.000000e+00> : vector<8x16xf32>
    %217 = tpu.matmul %215, %216, %cst_74 {dimension_numbers = #tpu.dot_dimension_numbers<[1], [0], [0], [1], [0, 0, 1, 1], [], []>} : vector<8x2xbf16>, vector<2x16xbf16>, vector<8x16xf32> -> vector<8x16xf32>
    %218 = arith.addf %194, %217 : vector<8x16xf32>
    %219 = vector.extract_strided_slice %47 {offsets = [0, 0, 14], sizes = [2, 4, 2], strides = [1, 1, 1]} : vector<2x4x16xf32> to vector<2x4x2xf32>
    %220 = arith.truncf %219 : vector<2x4x2xf32> to vector<2x4x2xbf16>
    %221 = vector.extract_strided_slice %48 {offsets = [0, 0, 14], sizes = [2, 4, 2], strides = [1, 1, 1]} : vector<2x4x16xf32> to vector<2x4x2xf32>
    %222 = arith.truncf %221 : vector<2x4x2xf32> to vector<2x4x2xbf16>
    %223 = vector.extract_strided_slice %49 {offsets = [0, 0, 14], sizes = [2, 4, 2], strides = [1, 1, 1]} : vector<2x4x16xf32> to vector<2x4x2xf32>
    %224 = arith.truncf %223 : vector<2x4x2xf32> to vector<2x4x2xbf16>
    "tpu.trace_start"() <{level = 10 : i32, message = "bqd,bkd->bqk"}> : () -> ()
    %cst_75 = arith.constant dense<0.000000e+00> : vector<2x4x4xf32>
    %225 = tpu.matmul %220, %222, %cst_75 {dimension_numbers = #tpu.dot_dimension_numbers<[2], [2], [1], [1], [0, 0, 0, 1, 1, 1], [0], [0]>} : vector<2x4x2xbf16>, vector<2x4x2xbf16>, vector<2x4x4xf32> -> vector<2x4x4xf32>
    "tpu.trace_stop"() : () -> ()
    %cst_76 = arith.constant dense<0xFF800000> : vector<2x4xf32>
    %226 = vector.multi_reduction <maximumf>, %225, %cst_76 [2] : vector<2x4x4xf32> to vector<2x4xf32>
    %227 = vector.shape_cast %226 : vector<2x4xf32> to vector<2x4x1xf32>
    %228 = vector.broadcast %227 : vector<2x4x1xf32> to vector<2x4x4xf32>
    %229 = arith.subf %225, %228 : vector<2x4x4xf32>
    %230 = math.exp %229 : vector<2x4x4xf32>
    %cst_77 = arith.constant dense<0.000000e+00> : vector<2x4xf32>
    %231 = vector.multi_reduction <add>, %230, %cst_77 [2] : vector<2x4x4xf32> to vector<2x4xf32>
    %232 = vector.shape_cast %231 : vector<2x4xf32> to vector<2x4x1xf32>
    %233 = tpu.reciprocal %232 {approx = true} : vector<2x4x1xf32> -> vector<2x4x1xf32>
    %234 = vector.broadcast %233 : vector<2x4x1xf32> to vector<2x4x4xf32>
    %235 = arith.mulf %230, %234 : vector<2x4x4xf32>
    %236 = arith.truncf %235 : vector<2x4x4xf32> to vector<2x4x4xbf16>
    "tpu.trace_start"() <{level = 10 : i32, message = "bqk,bkd->bqd"}> : () -> ()
    %cst_78 = arith.constant dense<0.000000e+00> : vector<2x4x2xf32>
    %237 = tpu.matmul %236, %224, %cst_78 {dimension_numbers = #tpu.dot_dimension_numbers<[2], [1], [1], [2], [0, 0, 0, 1, 1, 2], [0], [0]>} : vector<2x4x4xbf16>, vector<2x4x2xbf16>, vector<2x4x2xf32> -> vector<2x4x2xf32>
    "tpu.trace_stop"() : () -> ()
    %238 = vector.shape_cast %237 : vector<2x4x2xf32> to vector<8x2xf32>
    %239 = arith.truncf %238 : vector<8x2xf32> to vector<8x2xbf16>
    %240 = vector.extract_strided_slice %9 {offsets = [14, 0], sizes = [2, 16], strides = [1, 1]} : vector<16x16xbf16> to vector<2x16xbf16>
    %cst_79 = arith.constant dense<0.000000e+00> : vector<8x16xf32>
    %241 = tpu.matmul %239, %240, %cst_79 {dimension_numbers = #tpu.dot_dimension_numbers<[1], [0], [0], [1], [0, 0, 1, 1], [], []>} : vector<8x2xbf16>, vector<2x16xbf16>, vector<8x16xf32> -> vector<8x16xf32>
    %242 = arith.addf %218, %241 : vector<8x16xf32>
    %243 = arith.addf %1, %242 : vector<8x16xf32>
    %244 = vector.broadcast %10 : vector<1x16xf32> to vector<8x16xf32>
    %245 = arith.addf %243, %244 : vector<8x16xf32>
    %cst_80 = arith.constant dense<0.000000e+00> : vector<8xf32>
    %246 = vector.multi_reduction <add>, %245, %cst_80 [1] : vector<8x16xf32> to vector<8xf32>
    %247 = vector.shape_cast %246 : vector<8xf32> to vector<8x1xf32>
    %cst_81 = arith.constant 1.600000e+01 : f32
    %248 = vector.broadcast %cst_81 : f32 to vector<8x1xf32>
    %249 = arith.divf %247, %248 : vector<8x1xf32>
    %250 = vector.broadcast %249 : vector<8x1xf32> to vector<8x16xf32>
    %251 = arith.subf %245, %250 : vector<8x16xf32>
    %252 = arith.mulf %251, %251 : vector<8x16xf32>
    %cst_82 = arith.constant dense<0.000000e+00> : vector<8xf32>
    %253 = vector.multi_reduction <add>, %252, %cst_82 [1] : vector<8x16xf32> to vector<8xf32>
    %254 = vector.shape_cast %253 : vector<8xf32> to vector<8x1xf32>
    %cst_83 = arith.constant 1.600000e+01 : f32
    %255 = vector.broadcast %cst_83 : f32 to vector<8x1xf32>
    %256 = arith.divf %254, %255 : vector<8x1xf32>
    %257 = vector.broadcast %249 : vector<8x1xf32> to vector<8x16xf32>
    %258 = arith.subf %245, %257 : vector<8x16xf32>
    %cst_84 = arith.constant 9.99999974E-6 : f32
    %259 = vector.broadcast %cst_84 : f32 to vector<8x1xf32>
    %260 = arith.addf %256, %259 : vector<8x1xf32>
    %261 = math.rsqrt %260 : vector<8x1xf32>
    %262 = vector.broadcast %261 : vector<8x1xf32> to vector<8x16xf32>
    %263 = arith.mulf %258, %262 : vector<8x16xf32>
    %264 = vector.broadcast %11 : vector<1x16xf32> to vector<8x16xf32>
    %265 = arith.mulf %263, %264 : vector<8x16xf32>
    %266 = vector.broadcast %12 : vector<1x16xf32> to vector<8x16xf32>
    %267 = arith.addf %265, %266 : vector<8x16xf32>
    %268 = arith.truncf %267 : vector<8x16xf32> to vector<8x16xbf16>
    %cst_85 = arith.constant dense<0.000000e+00> : vector<8x64xf32>
    %269 = tpu.matmul %268, %13, %cst_85 {dimension_numbers = #tpu.dot_dimension_numbers<[1], [0], [0], [1], [0, 0, 1, 1], [], []>} : vector<8x16xbf16>, vector<16x64xbf16>, vector<8x64xf32> -> vector<8x64xf32>
    %270 = vector.broadcast %14 : vector<1x64xf32> to vector<8x64xf32>
    %271 = arith.addf %269, %270 : vector<8x64xf32>
    %cst_86 = arith.constant 5.000000e-01 : f32
    %272 = vector.broadcast %cst_86 : f32 to vector<8x64xf32>
    %273 = arith.mulf %272, %271 : vector<8x64xf32>
    %cst_87 = arith.constant 4.471500e-02 : f32
    %274 = vector.broadcast %cst_87 : f32 to vector<8x64xf32>
    %275 = arith.mulf %274, %271 : vector<8x64xf32>
    %276 = arith.mulf %275, %271 : vector<8x64xf32>
    %277 = arith.mulf %276, %271 : vector<8x64xf32>
    %278 = arith.addf %271, %277 : vector<8x64xf32>
    %cst_88 = arith.constant 0.797884583 : f32
    %279 = vector.broadcast %cst_88 : f32 to vector<8x64xf32>
    %280 = arith.mulf %279, %278 : vector<8x64xf32>
    %281 = math.tanh %280 : vector<8x64xf32>
    %cst_89 = arith.constant 1.000000e+00 : f32
    %282 = vector.broadcast %cst_89 : f32 to vector<8x64xf32>
    %283 = arith.addf %282, %281 : vector<8x64xf32>
    %284 = arith.mulf %273, %283 : vector<8x64xf32>
    %285 = arith.truncf %284 : vector<8x64xf32> to vector<8x64xbf16>
    %cst_90 = arith.constant dense<0.000000e+00> : vector<8x16xf32>
    %286 = tpu.matmul %285, %15, %cst_90 {dimension_numbers = #tpu.dot_dimension_numbers<[1], [0], [0], [1], [0, 0, 1, 1], [], []>} : vector<8x64xbf16>, vector<64x16xbf16>, vector<8x16xf32> -> vector<8x16xf32>
    %287 = vector.broadcast %16 : vector<1x16xf32> to vector<8x16xf32>
    %288 = arith.addf %286, %287 : vector<8x16xf32>
    %289 = arith.addf %245, %288 : vector<8x16xf32>
    %290 = tpu.iota {dimensions = array<i32: 0>} : vector<2x8xi32>
    %291 = tpu.iota {dimensions = array<i32: 1>} : vector<2x8xi32>
    %c4_i32 = arith.constant 4 : i32
    %292 = vector.broadcast %c4_i32 : i32 to vector<2x8xi32>
    %293 = arith.muli %290, %292 : vector<2x8xi32>
    %294 = arith.cmpi sge, %291, %293 : vector<2x8xi32>
    %c4_i32_91 = arith.constant 4 : i32
    %295 = vector.broadcast %c4_i32_91 : i32 to vector<2x8xi32>
    %296 = arith.muli %290, %295 : vector<2x8xi32>
    %c4_i32_92 = arith.constant 4 : i32
    %297 = vector.broadcast %c4_i32_92 : i32 to vector<2x8xi32>
    %298 = arith.addi %296, %297 : vector<2x8xi32>
    %299 = arith.cmpi slt, %291, %298 : vector<2x8xi32>
    %300 = arith.andi %294, %299 : vector<2x8xi1>
    %cst_93 = arith.constant 2.500000e-01 : f32
    %cst_94 = arith.constant 0.000000e+00 : f32
    %301 = vector.broadcast %cst_93 : f32 to vector<2x8xf32>
    %302 = vector.broadcast %cst_94 : f32 to vector<2x8xf32>
    %303 = arith.select %300, %301, %302 : vector<2x8xi1>, vector<2x8xf32>
    %cst_95 = arith.constant dense<0.000000e+00> : vector<2x16xf32>
    %304 = tpu.matmul %303, %289, %cst_95 {dimension_numbers = #tpu.dot_dimension_numbers<[1], [0], [0], [1], [0, 0, 1, 1], [], []>} : vector<2x8xf32>, vector<8x16xf32>, vector<2x16xf32> -> vector<2x16xf32>
    %c0_96 = arith.constant 0 : index
    %c0_97 = arith.constant 0 : index
    %305 = vector.load %arg17[%c0_96, %c0_97] : memref<1x16xf32, #tpu.memory_space<vmem>>, vector<1x16xf32>
    %c0_98 = arith.constant 0 : index
    %c0_99 = arith.constant 0 : index
    %306 = vector.load %arg18[%c0_98, %c0_99] : memref<1x16xf32, #tpu.memory_space<vmem>>, vector<1x16xf32>
    %cst_100 = arith.constant dense<0.000000e+00> : vector<2xf32>
    %307 = vector.multi_reduction <add>, %304, %cst_100 [1] : vector<2x16xf32> to vector<2xf32>
    %308 = vector.shape_cast %307 : vector<2xf32> to vector<2x1xf32>
    %cst_101 = arith.constant 1.600000e+01 : f32
    %309 = vector.broadcast %cst_101 : f32 to vector<2x1xf32>
    %310 = arith.divf %308, %309 : vector<2x1xf32>
    %311 = vector.broadcast %310 : vector<2x1xf32> to vector<2x16xf32>
    %312 = arith.subf %304, %311 : vector<2x16xf32>
    %313 = arith.mulf %312, %312 : vector<2x16xf32>
    %cst_102 = arith.constant dense<0.000000e+00> : vector<2xf32>
    %314 = vector.multi_reduction <add>, %313, %cst_102 [1] : vector<2x16xf32> to vector<2xf32>
    %315 = vector.shape_cast %314 : vector<2xf32> to vector<2x1xf32>
    %cst_103 = arith.constant 1.600000e+01 : f32
    %316 = vector.broadcast %cst_103 : f32 to vector<2x1xf32>
    %317 = arith.divf %315, %316 : vector<2x1xf32>
    %318 = vector.broadcast %310 : vector<2x1xf32> to vector<2x16xf32>
    %319 = arith.subf %304, %318 : vector<2x16xf32>
    %cst_104 = arith.constant 9.99999974E-6 : f32
    %320 = vector.broadcast %cst_104 : f32 to vector<2x1xf32>
    %321 = arith.addf %317, %320 : vector<2x1xf32>
    %322 = math.rsqrt %321 : vector<2x1xf32>
    %323 = vector.broadcast %322 : vector<2x1xf32> to vector<2x16xf32>
    %324 = arith.mulf %319, %323 : vector<2x16xf32>
    %325 = vector.broadcast %305 : vector<1x16xf32> to vector<2x16xf32>
    %326 = arith.mulf %324, %325 : vector<2x16xf32>
    %327 = vector.broadcast %306 : vector<1x16xf32> to vector<2x16xf32>
    %328 = arith.addf %326, %327 : vector<2x16xf32>
    %329 = arith.truncf %328 : vector<2x16xf32> to vector<2x16xbf16>
    %c0_105 = arith.constant 0 : index
    %c0_106 = arith.constant 0 : index
    %330 = vector.load %arg19[%c0_105, %c0_106] : memref<16x2xbf16, #tpu.memory_space<vmem>>, vector<16x2xbf16>
    %cst_107 = arith.constant dense<0.000000e+00> : vector<2x2xf32>
    %331 = tpu.matmul %329, %330, %cst_107 {dimension_numbers = #tpu.dot_dimension_numbers<[1], [0], [0], [1], [0, 0, 1, 1], [], []>} : vector<2x16xbf16>, vector<16x2xbf16>, vector<2x2xf32> -> vector<2x2xf32>
    %c0_108 = arith.constant 0 : index
    %c0_109 = arith.constant 0 : index
    %332 = vector.load %arg20[%c0_108, %c0_109] : memref<1x2xf32, #tpu.memory_space<vmem>>, vector<1x2xf32>
    %333 = vector.broadcast %332 : vector<1x2xf32> to vector<2x2xf32>
    %334 = arith.addf %331, %333 : vector<2x2xf32>
    %c0_110 = arith.constant 0 : index
    %c0_111 = arith.constant 0 : index
    %c0_112 = arith.constant 0 : index
    %335 = vector.load %arg21[%c0_110, %c0_111, %c0_112] : memref<1x2x2xf32, #tpu.memory_space<vmem>>, vector<1x2x2xf32>
    %336 = vector.shape_cast %335 : vector<1x2x2xf32> to vector<2x2xf32>
    %337 = vector.shape_cast %334 : vector<2x2xf32> to vector<1x2x2xf32>
    tpu.vector_store %arg21[%c0_110, %c0_111, %c0_112], %337 {strides = array<i32>} : memref<1x2x2xf32, #tpu.memory_space<vmem>>, vector<1x2x2xf32>,
    return
  }
  func.func @transform_0(%arg0: i32) -> (i32, i32, i32) {
    %c0_i32 = arith.constant 0 : i32
    %c0_i32_0 = arith.constant 0 : i32
    %c0_i32_1 = arith.constant 0 : i32
    return %arg0, %c0_i32, %c0_i32_0 : i32, i32, i32
  }
  func.func @transform_1(%arg0: i32) -> (i32, i32) {
    %c0_i32 = arith.constant 0 : i32
    %c0_i32_0 = arith.constant 0 : i32
    %c0_i32_1 = arith.constant 0 : i32
    return %c0_i32, %c0_i32_0 : i32, i32
  }
  func.func @transform_2(%arg0: i32) -> (i32, i32) {
    %c0_i32 = arith.constant 0 : i32
    %c0_i32_0 = arith.constant 0 : i32
    %c0_i32_1 = arith.constant 0 : i32
    return %c0_i32, %c0_i32_0 : i32, i32
  }
  func.func @transform_3(%arg0: i32) -> (i32, i32) {
    %c0_i32 = arith.constant 0 : i32
    %c0_i32_0 = arith.constant 0 : i32
    %c0_i32_1 = arith.constant 0 : i32
    return %c0_i32, %c0_i32_0 : i32, i32
  }
  func.func @transform_4(%arg0: i32) -> (i32, i32) {
    %c0_i32 = arith.constant 0 : i32
    %c0_i32_0 = arith.constant 0 : i32
    %c0_i32_1 = arith.constant 0 : i32
    return %c0_i32, %c0_i32_0 : i32, i32
  }
  func.func @transform_5(%arg0: i32) -> (i32, i32) {
    %c0_i32 = arith.constant 0 : i32
    %c0_i32_0 = arith.constant 0 : i32
    %c0_i32_1 = arith.constant 0 : i32
    return %c0_i32, %c0_i32_0 : i32, i32
  }
  func.func @transform_6(%arg0: i32) -> (i32, i32) {
    %c0_i32 = arith.constant 0 : i32
    %c0_i32_0 = arith.constant 0 : i32
    %c0_i32_1 = arith.constant 0 : i32
    return %c0_i32, %c0_i32_0 : i32, i32
  }
  func.func @transform_7(%arg0: i32) -> (i32, i32) {
    %c0_i32 = arith.constant 0 : i32
    %c0_i32_0 = arith.constant 0 : i32
    %c0_i32_1 = arith.constant 0 : i32
    return %c0_i32, %c0_i32_0 : i32, i32
  }
  func.func @transform_8(%arg0: i32) -> (i32, i32) {
    %c0_i32 = arith.constant 0 : i32
    %c0_i32_0 = arith.constant 0 : i32
    %c0_i32_1 = arith.constant 0 : i32
    return %c0_i32, %c0_i32_0 : i32, i32
  }
  func.func @transform_9(%arg0: i32) -> (i32, i32) {
    %c0_i32 = arith.constant 0 : i32
    %c0_i32_0 = arith.constant 0 : i32
    %c0_i32_1 = arith.constant 0 : i32
    return %c0_i32, %c0_i32_0 : i32, i32
  }
  func.func @transform_10(%arg0: i32) -> (i32, i32) {
    %c0_i32 = arith.constant 0 : i32
    %c0_i32_0 = arith.constant 0 : i32
    %c0_i32_1 = arith.constant 0 : i32
    return %c0_i32, %c0_i32_0 : i32, i32
  }
  func.func @transform_11(%arg0: i32) -> (i32, i32) {
    %c0_i32 = arith.constant 0 : i32
    %c0_i32_0 = arith.constant 0 : i32
    %c0_i32_1 = arith.constant 0 : i32
    return %c0_i32, %c0_i32_0 : i32, i32
  }
  func.func @transform_12(%arg0: i32) -> (i32, i32) {
    %c0_i32 = arith.constant 0 : i32
    %c0_i32_0 = arith.constant 0 : i32
    %c0_i32_1 = arith.constant 0 : i32
    return %c0_i32, %c0_i32_0 : i32, i32
  }
  func.func @transform_13(%arg0: i32) -> (i32, i32) {
    %c0_i32 = arith.constant 0 : i32
    %c0_i32_0 = arith.constant 0 : i32
    %c0_i32_1 = arith.constant 0 : i32
    return %c0_i32, %c0_i32_0 : i32, i32
  }
  func.func @transform_14(%arg0: i32) -> (i32, i32) {
    %c0_i32 = arith.constant 0 : i32
    %c0_i32_0 = arith.constant 0 : i32
    %c0_i32_1 = arith.constant 0 : i32
    return %c0_i32, %c0_i32_0 : i32, i32
  }
  func.func @transform_15(%arg0: i32) -> (i32, i32) {
    %c0_i32 = arith.constant 0 : i32
    %c0_i32_0 = arith.constant 0 : i32
    %c0_i32_1 = arith.constant 0 : i32
    return %c0_i32, %c0_i32_0 : i32, i32
  }
  func.func @transform_16(%arg0: i32) -> (i32, i32) {
    %c0_i32 = arith.constant 0 : i32
    %c0_i32_0 = arith.constant 0 : i32
    %c0_i32_1 = arith.constant 0 : i32
    return %c0_i32, %c0_i32_0 : i32, i32
  }
  func.func @transform_17(%arg0: i32) -> (i32, i32) {
    %c0_i32 = arith.constant 0 : i32
    %c0_i32_0 = arith.constant 0 : i32
    %c0_i32_1 = arith.constant 0 : i32
    return %c0_i32, %c0_i32_0 : i32, i32
  }
  func.func @transform_18(%arg0: i32) -> (i32, i32) {
    %c0_i32 = arith.constant 0 : i32
    %c0_i32_0 = arith.constant 0 : i32
    %c0_i32_1 = arith.constant 0 : i32
    return %c0_i32, %c0_i32_0 : i32, i32
  }
  func.func @transform_19(%arg0: i32) -> (i32, i32) {
    %c0_i32 = arith.constant 0 : i32
    %c0_i32_0 = arith.constant 0 : i32
    %c0_i32_1 = arith.constant 0 : i32
    return %c0_i32, %c0_i32_0 : i32, i32
  }
  func.func @transform_20(%arg0: i32) -> (i32, i32, i32) {
    %c0_i32 = arith.constant 0 : i32
    %c0_i32_0 = arith.constant 0 : i32
    %c0_i32_1 = arith.constant 0 : i32
    return %arg0, %c0_i32, %c0_i32_0 : i32, i32, i32
  }
}

</mosaic_0001>

<llo_original>
// kernel: tltr_forward.2
$region0: #{tltr_forward.2}
  #allocation0 [shape = 'u32[]', space=smem, size = 0x4, offset = 0x4, fixed_abs, tag = 'smem constant byte address 0x4 - core index']
  #allocation1 [shape = 'u32[144,128]{1,0:T(1,128)}', space=vmem, size = 0x12000, scoped, tag = 'internal scratch']
  %s0 = inlined_call_operand.vmem [shape: f32[8,8,32], index: 0, kind: input, shape index: {}]
  %s1 = inlined_call_operand.vmem [shape: f32[1,32], index: 1, kind: input, shape index: {}]
  %s2 = inlined_call_operand.vmem [shape: f32[1,32], index: 2, kind: input, shape index: {}]
  %s3 = inlined_call_operand.vmem [shape: bf16[32,16], index: 3, kind: input, shape index: {}]
  %s4 = inlined_call_operand.vmem [shape: f32[1,16], index: 4, kind: input, shape index: {}]
  %s5 = inlined_call_operand.vmem [shape: f32[1,16], index: 5, kind: input, shape index: {}]
  %s6 = inlined_call_operand.vmem [shape: f32[1,16], index: 6, kind: input, shape index: {}]
  %s7 = inlined_call_operand.vmem [shape: bf16[16,16], index: 7, kind: input, shape index: {}]
  %s8 = inlined_call_operand.vmem [shape: f32[1,16], index: 8, kind: input, shape index: {}]
  %s9 = inlined_call_operand.vmem [shape: bf16[16,16], index: 9, kind: input, shape index: {}]
  %s10 = inlined_call_operand.vmem [shape: bf16[16,16], index: 10, kind: input, shape index: {}]
  %s11 = inlined_call_operand.vmem [shape: f32[1,16], index: 11, kind: input, shape index: {}]
  %s12 = inlined_call_operand.vmem [shape: bf16[16,16], index: 12, kind: input, shape index: {}]
  %s13 = inlined_call_operand.vmem [shape: f32[1,16], index: 13, kind: input, shape index: {}]
  %s14 = inlined_call_operand.vmem [shape: f32[1,16], index: 14, kind: input, shape index: {}]
  %s15 = inlined_call_operand.hbm [shape: f32[1,16], index: 15, kind: input, shape index: {}]
  %s16 = inlined_call_operand.vmem [shape: bf16[16,64], index: 16, kind: input, shape index: {}]
  %s17 = inlined_call_operand.hbm [shape: f32[1,64], index: 17, kind: input, shape index: {}]
  %s18 = inlined_call_operand.vmem [shape: bf16[64,16], index: 18, kind: input, shape index: {}]
  %s19 = inlined_call_operand.hbm [shape: f32[1,16], index: 19, kind: input, shape index: {}]
  %s20 = inlined_call_operand.vmem [shape: f32[2,4,16], index: 20, kind: output, shape index: {}]
  %s21 = sld [smem:[#allocation0]]
  $region125: #{tltr_forward.2} parent=0
    _
  %s23 = ssub.s32 1, %s21
  %s24 = scalar_select 0, %s23, %s21
  $region1: #{tltr_forward.2} parent=0
    #allocation2 [shape = 'u8[512]{0}', space=vmem, size = 0x400, scoped, tag = 'input window, operand 15, single buffered']
    #allocation3 [shape = 's32[2]{0}', space=sflag, size = 0x8, scoped, tag = 'scoped memory for tltr_forward.2']
    #allocation4 [shape = 'u8[512]{0}', space=vmem, size = 0x400, scoped, tag = 'input window, operand 17, single buffered']
    #allocation5 [shape = 's32[1]{0}', space=sflag, size = 0x4, scoped, tag = 'scoped memory for tltr_forward.2']
    #allocation6 [shape = 'u8[512]{0}', space=vmem, size = 0x400, scoped, tag = 'input window, operand 19, single buffered']
    %25 = vsyncpa [#allocation3], 0
    %26 = vsyncpa [#allocation5], 0
    loop: start=0, step=1, limit=4
    $region2: #{tltr_forward.2} parent=1 // loop_pre_header
      _
    $region3: #{tltr_forward.2} parent=1 // loop_header
      %s28 = sphi 0, %s32
      %p29 = scmp.ge.s32.totalorder %s28, 4
      %s38 = sphi 0, %s40
      %s41 = sphi 0, %s38
      %s42 = sphi 0, %s41
      %s58 = sphi 0, %s42
      %s62 = sphi 0, %s62
      %s64 = sphi 0, %s62
      %s65 = sphi 0, %s64
      %s79 = sphi 0, %s65
      %s83 = sphi 0, %s83
      %s85 = sphi 0, %s83
      %s86 = sphi 0, %s85
      %s100 = sphi 0, %s86
      %s104 = sphi 0, %s104
      %s106 = sphi 0, %s104
      %s107 = sphi 0, %s106
      %s121 = sphi 0, %s107
      %s125 = sphi 0, %s125
      %s127 = sphi 0, %s125
      %s128 = sphi 0, %s127
      %s142 = sphi 0, %s128
      %s146 = sphi 0, %s146
      %s148 = sphi 0, %s146
      %s149 = sphi 0, %s148
      %s163 = sphi 0, %s149
      %s167 = sphi 0, %s167
      %s169 = sphi 0, %s167
      %s170 = sphi 0, %s169
      %s184 = sphi 0, %s170
      %s188 = sphi 0, %s188
      %s190 = sphi 0, %s188
      %s191 = sphi 0, %s190
      %s205 = sphi 0, %s191
      %s209 = sphi 0, %s209
      %s211 = sphi 0, %s209
      %s212 = sphi 0, %s211
      %s226 = sphi 0, %s212
      %s230 = sphi 0, %s230
      %s232 = sphi 0, %s230
      %s233 = sphi 0, %s232
      %s247 = sphi 0, %s233
      %s251 = sphi 0, %s251
      %s253 = sphi 0, %s251
      %s254 = sphi 0, %s253
      %s268 = sphi 0, %s254
      %s272 = sphi 0, %s272
      %s274 = sphi 0, %s272
      %s275 = sphi 0, %s274
      %s289 = sphi 0, %s275
      %s293 = sphi 0, %s293
      %s295 = sphi 0, %s293
      %s296 = sphi 0, %s295
      %s310 = sphi 0, %s296
      %s314 = sphi 0, %s314
      %s316 = sphi 0, %s314
      %s317 = sphi 0, %s316
      %s331 = sphi 0, %s317
      %s335 = sphi 0, %s335
      %s337 = sphi 0, %s335
      %s338 = sphi 0, %s337
      %s352 = sphi 0, %s338
      %s356 = sphi 0, %s356
      %s358 = sphi 0, %s356
      %s359 = sphi 0, %s358
      %s373 = sphi 0, %s359
      %s377 = sphi 0, %s377
      %s379 = sphi 0, %s377
      %s380 = sphi 0, %s379
      %s394 = sphi 0, %s380
      %s398 = sphi 0, %s398
      %s400 = sphi 0, %s398
      %s401 = sphi 0, %s400
      %s415 = sphi 0, %s401
      %s419 = sphi 0, %s419
      %s421 = sphi 0, %s419
      %s422 = sphi 0, %s421
      %s436 = sphi 0, %s422
      %s440 = sphi 0, %s440
      %s442 = sphi 0, %s440
      %s443 = sphi 0, %s442
      %s457 = sphi 0, %s443
      %s463 = sphi 0, %s465
      %s466 = sphi 0, %s463
      %s467 = sphi 0, %s466
      %s483 = sphi 0, %s467
    $region4: #{tltr_forward.2} parent=1 // loop_header_branch
      %31 = sbr.rel (%p29) target = $region8
    $region5: #{tltr_forward.2} parent=1 // loop_body
      %s33 = ssub.s32 %s28, 1
      %s34 = ssub.s32 %s28, 2
      %s35 = sadd.s32 %s28, 1
      %s36 = ssub.s32 %s28, %s35
      %p37 = scmp.eq.s32.totalorder %s36, 0
      %s39 = sadd.s32 %s38, 1
      %s40 = scalar_select %p37, %s38, %s39
      %p43 = pneg %p37
      %p44 = scmp.eq.s32.totalorder %s28, 1
      %p45 = por %p43, %p44
      %p46 = scmp.ne.s32.totalorder %s38, %s41
      %p47 = scmp.eq.s32.totalorder %s28, 0
      %p48 = por %p46, %p47
      %p49 = scmp.ne.s32.totalorder %s38, %s41
      %p50 = scmp.eq.s32.totalorder %s33, 1
      %p51 = por %p49, %p50
      %p52 = scmp.ne.s32.totalorder %s41, %s42
      %p53 = scmp.eq.s32.totalorder %s33, 0
      %p54 = por %p52, %p53
      %p55 = scmp.ne.s32.totalorder %s41, %s42
      %p56 = scmp.eq.s32.totalorder %s34, 1
      %p57 = por %p55, %p56
      %p59 = scmp.ne.s32.totalorder %s42, %s58
      %p60 = scmp.eq.s32.totalorder %s34, 0
      %p61 = por %p59, %p60
      %s63 = sadd.s32 %s62, 1
      %p66 = scmp.eq.s32.totalorder %s28, 1
      %p67 = scmp.ne.s32.totalorder %s62, %s64
      %p68 = scmp.eq.s32.totalorder %s28, 0
      %p69 = por %p67, %p68
      %p70 = scmp.ne.s32.totalorder %s62, %s64
      %p71 = scmp.eq.s32.totalorder %s33, 1
      %p72 = por %p70, %p71
      %p73 = scmp.ne.s32.totalorder %s64, %s65
      %p74 = scmp.eq.s32.totalorder %s33, 0
      %p75 = por %p73, %p74
      %p76 = scmp.ne.s32.totalorder %s64, %s65
      %p77 = scmp.eq.s32.totalorder %s34, 1
      %p78 = por %p76, %p77
      %p80 = scmp.ne.s32.totalorder %s65, %s79
      %p81 = scmp.eq.s32.totalorder %s34, 0
      %p82 = por %p80, %p81
      %s84 = sadd.s32 %s83, 1
      %p87 = scmp.eq.s32.totalorder %s28, 1
      %p88 = scmp.ne.s32.totalorder %s83, %s85
      %p89 = scmp.eq.s32.totalorder %s28, 0
      %p90 = por %p88, %p89
      %p91 = scmp.ne.s32.totalorder %s83, %s85
      %p92 = scmp.eq.s32.totalorder %s33, 1
      %p93 = por %p91, %p92
      %p94 = scmp.ne.s32.totalorder %s85, %s86
      %p95 = scmp.eq.s32.totalorder %s33, 0
      %p96 = por %p94, %p95
      %p97 = scmp.ne.s32.totalorder %s85, %s86
      %p98 = scmp.eq.s32.totalorder %s34, 1
      %p99 = por %p97, %p98
      %p101 = scmp.ne.s32.totalorder %s86, %s100
      %p102 = scmp.eq.s32.totalorder %s34, 0
      %p103 = por %p101, %p102
      %s105 = sadd.s32 %s104, 1
      %p108 = scmp.eq.s32.totalorder %s28, 1
      %p109 = scmp.ne.s32.totalorder %s104, %s106
      %p110 = scmp.eq.s32.totalorder %s28, 0
      %p111 = por %p109, %p110
      %p112 = scmp.ne.s32.totalorder %s104, %s106
      %p113 = scmp.eq.s32.totalorder %s33, 1
      %p114 = por %p112, %p113
      %p115 = scmp.ne.s32.totalorder %s106, %s107
      %p116 = scmp.eq.s32.totalorder %s33, 0
      %p117 = por %p115, %p116
      %p118 = scmp.ne.s32.totalorder %s106, %s107
      %p119 = scmp.eq.s32.totalorder %s34, 1
      %p120 = por %p118, %p119
      %p122 = scmp.ne.s32.totalorder %s107, %s121
      %p123 = scmp.eq.s32.totalorder %s34, 0
      %p124 = por %p122, %p123
      %s126 = sadd.s32 %s125, 1
      %p129 = scmp.eq.s32.totalorder %s28, 1
      %p130 = scmp.ne.s32.totalorder %s125, %s127
      %p131 = scmp.eq.s32.totalorder %s28, 0
      %p132 = por %p130, %p131
      %p133 = scmp.ne.s32.totalorder %s125, %s127
      %p134 = scmp.eq.s32.totalorder %s33, 1
      %p135 = por %p133, %p134
      %p136 = scmp.ne.s32.totalorder %s127, %s128
      %p137 = scmp.eq.s32.totalorder %s33, 0
      %p138 = por %p136, %p137
      %p139 = scmp.ne.s32.totalorder %s127, %s128
      %p140 = scmp.eq.s32.totalorder %s34, 1
      %p141 = por %p139, %p140
      %p143 = scmp.ne.s32.totalorder %s128, %s142
      %p144 = scmp.eq.s32.totalorder %s34, 0
      %p145 = por %p143, %p144
      %s147 = sadd.s32 %s146, 1
      %p150 = scmp.eq.s32.totalorder %s28, 1
      %p151 = scmp.ne.s32.totalorder %s146, %s148
      %p152 = scmp.eq.s32.totalorder %s28, 0
      %p153 = por %p151, %p152
      %p154 = scmp.ne.s32.totalorder %s146, %s148
      %p155 = scmp.eq.s32.totalorder %s33, 1
      %p156 = por %p154, %p155
      %p157 = scmp.ne.s32.totalorder %s148, %s149
      %p158 = scmp.eq.s32.totalorder %s33, 0
      %p159 = por %p157, %p158
      %p160 = scmp.ne.s32.totalorder %s148, %s149
      %p161 = scmp.eq.s32.totalorder %s34, 1
      %p162 = por %p160, %p161
      %p164 = scmp.ne.s32.totalorder %s149, %s163
      %p165 = scmp.eq.s32.totalorder %s34, 0
      %p166 = por %p164, %p165
      %s168 = sadd.s32 %s167, 1
      %p171 = scmp.eq.s32.totalorder %s28, 1
      %p172 = scmp.ne.s32.totalorder %s167, %s169
      %p173 = scmp.eq.s32.totalorder %s28, 0
      %p174 = por %p172, %p173
      %p175 = scmp.ne.s32.totalorder %s167, %s169
      %p176 = scmp.eq.s32.totalorder %s33, 1
      %p177 = por %p175, %p176
      %p178 = scmp.ne.s32.totalorder %s169, %s170
      %p179 = scmp.eq.s32.totalorder %s33, 0
      %p180 = por %p178, %p179
      %p181 = scmp.ne.s32.totalorder %s169, %s170
      %p182 = scmp.eq.s32.totalorder %s34, 1
      %p183 = por %p181, %p182
      %p185 = scmp.ne.s32.totalorder %s170, %s184
      %p186 = scmp.eq.s32.totalorder %s34, 0
      %p187 = por %p185, %p186
      %s189 = sadd.s32 %s188, 1
      %p192 = scmp.eq.s32.totalorder %s28, 1
      %p193 = scmp.ne.s32.totalorder %s188, %s190
      %p194 = scmp.eq.s32.totalorder %s28, 0
      %p195 = por %p193, %p194
      %p196 = scmp.ne.s32.totalorder %s188, %s190
      %p197 = scmp.eq.s32.totalorder %s33, 1
      %p198 = por %p196, %p197
      %p199 = scmp.ne.s32.totalorder %s190, %s191
      %p200 = scmp.eq.s32.totalorder %s33, 0
      %p201 = por %p199, %p200
      %p202 = scmp.ne.s32.totalorder %s190, %s191
      %p203 = scmp.eq.s32.totalorder %s34, 1
      %p204 = por %p202, %p203
      %p206 = scmp.ne.s32.totalorder %s191, %s205
      %p207 = scmp.eq.s32.totalorder %s34, 0
      %p208 = por %p206, %p207
      %s210 = sadd.s32 %s209, 1
      %p213 = scmp.eq.s32.totalorder %s28, 1
      %p214 = scmp.ne.s32.totalorder %s209, %s211
      %p215 = scmp.eq.s32.totalorder %s28, 0
      %p216 = por %p214, %p215
      %p217 = scmp.ne.s32.totalorder %s209, %s211
      %p218 = scmp.eq.s32.totalorder %s33, 1
      %p219 = por %p217, %p218
      %p220 = scmp.ne.s32.totalorder %s211, %s212
      %p221 = scmp.eq.s32.totalorder %s33, 0
      %p222 = por %p220, %p221
      %p223 = scmp.ne.s32.totalorder %s211, %s212
      %p224 = scmp.eq.s32.totalorder %s34, 1
      %p225 = por %p223, %p224
      %p227 = scmp.ne.s32.totalorder %s212, %s226
      %p228 = scmp.eq.s32.totalorder %s34, 0
      %p229 = por %p227, %p228
      %s231 = sadd.s32 %s230, 1
      %p234 = scmp.eq.s32.totalorder %s28, 1
      %p235 = scmp.ne.s32.totalorder %s230, %s232
      %p236 = scmp.eq.s32.totalorder %s28, 0
      %p237 = por %p235, %p236
      %p238 = scmp.ne.s32.totalorder %s230, %s232
      %p239 = scmp.eq.s32.totalorder %s33, 1
      %p240 = por %p238, %p239
      %p241 = scmp.ne.s32.totalorder %s232, %s233
      %p242 = scmp.eq.s32.totalorder %s33, 0
      %p243 = por %p241, %p242
      %p244 = scmp.ne.s32.totalorder %s232, %s233
      %p245 = scmp.eq.s32.totalorder %s34, 1
      %p246 = por %p244, %p245
      %p248 = scmp.ne.s32.totalorder %s233, %s247
      %p249 = scmp.eq.s32.totalorder %s34, 0
      %p250 = por %p248, %p249
      %s252 = sadd.s32 %s251, 1
      %p255 = scmp.eq.s32.totalorder %s28, 1
      %p256 = scmp.ne.s32.totalorder %s251, %s253
      %p257 = scmp.eq.s32.totalorder %s28, 0
      %p258 = por %p256, %p257
      %p259 = scmp.ne.s32.totalorder %s251, %s253
      %p260 = scmp.eq.s32.totalorder %s33, 1
      %p261 = por %p259, %p260
      %p262 = scmp.ne.s32.totalorder %s253, %s254
      %p263 = scmp.eq.s32.totalorder %s33, 0
      %p264 = por %p262, %p263
      %p265 = scmp.ne.s32.totalorder %s253, %s254
      %p266 = scmp.eq.s32.totalorder %s34, 1
      %p267 = por %p265, %p266
      %p269 = scmp.ne.s32.totalorder %s254, %s268
      %p270 = scmp.eq.s32.totalorder %s34, 0
      %p271 = por %p269, %p270
      %s273 = sadd.s32 %s272, 1
      %p276 = scmp.eq.s32.totalorder %s28, 1
      %p277 = scmp.ne.s32.totalorder %s272, %s274
      %p278 = scmp.eq.s32.totalorder %s28, 0
      %p279 = por %p277, %p278
      %p280 = scmp.ne.s32.totalorder %s272, %s274
      %p281 = scmp.eq.s32.totalorder %s33, 1
      %p282 = por %p280, %p281
      %p283 = scmp.ne.s32.totalorder %s274, %s275
      %p284 = scmp.eq.s32.totalorder %s33, 0
      %p285 = por %p283, %p284
      %p286 = scmp.ne.s32.totalorder %s274, %s275
      %p287 = scmp.eq.s32.totalorder %s34, 1
      %p288 = por %p286, %p287
      %p290 = scmp.ne.s32.totalorder %s275, %s289
      %p291 = scmp.eq.s32.totalorder %s34, 0
      %p292 = por %p290, %p291
      %s294 = sadd.s32 %s293, 1
      %p297 = scmp.eq.s32.totalorder %s28, 1
      %p298 = scmp.ne.s32.totalorder %s293, %s295
      %p299 = scmp.eq.s32.totalorder %s28, 0
      %p300 = por %p298, %p299
      %p301 = scmp.ne.s32.totalorder %s293, %s295
      %p302 = scmp.eq.s32.totalorder %s33, 1
      %p303 = por %p301, %p302
      %p304 = scmp.ne.s32.totalorder %s295, %s296
      %p305 = scmp.eq.s32.totalorder %s33, 0
      %p306 = por %p304, %p305
      %p307 = scmp.ne.s32.totalorder %s295, %s296
      %p308 = scmp.eq.s32.totalorder %s34, 1
      %p309 = por %p307, %p308
      %p311 = scmp.ne.s32.totalorder %s296, %s310
      %p312 = scmp.eq.s32.totalorder %s34, 0
      %p313 = por %p311, %p312
      %s315 = sadd.s32 %s314, 1
      %p318 = scmp.eq.s32.totalorder %s28, 1
      %p319 = scmp.ne.s32.totalorder %s314, %s316
      %p320 = scmp.eq.s32.totalorder %s28, 0
      %p321 = por %p319, %p320
      %p322 = scmp.ne.s32.totalorder %s314, %s316
      %p323 = scmp.eq.s32.totalorder %s33, 1
      %p324 = por %p322, %p323
      %p325 = scmp.ne.s32.totalorder %s316, %s317
      %p326 = scmp.eq.s32.totalorder %s33, 0
      %p327 = por %p325, %p326
      %p328 = scmp.ne.s32.totalorder %s316, %s317
      %p329 = scmp.eq.s32.totalorder %s34, 1
      %p330 = por %p328, %p329
      %p332 = scmp.ne.s32.totalorder %s317, %s331
      %p333 = scmp.eq.s32.totalorder %s34, 0
      %p334 = por %p332, %p333
      %s336 = sadd.s32 %s335, 1
      %p339 = scmp.eq.s32.totalorder %s28, 1
      %p340 = scmp.ne.s32.totalorder %s335, %s337
      %p341 = scmp.eq.s32.totalorder %s28, 0
      %p342 = por %p340, %p341
      %p343 = scmp.ne.s32.totalorder %s335, %s337
      %p344 = scmp.eq.s32.totalorder %s33, 1
      %p345 = por %p343, %p344
      %p346 = scmp.ne.s32.totalorder %s337, %s338
      %p347 = scmp.eq.s32.totalorder %s33, 0
      %p348 = por %p346, %p347
      %p349 = scmp.ne.s32.totalorder %s337, %s338
      %p350 = scmp.eq.s32.totalorder %s34, 1
      %p351 = por %p349, %p350
      %p353 = scmp.ne.s32.totalorder %s338, %s352
      %p354 = scmp.eq.s32.totalorder %s34, 0
      %p355 = por %p353, %p354
      %s357 = sadd.s32 %s356, 1
      %p360 = scmp.eq.s32.totalorder %s28, 1
      %p361 = scmp.ne.s32.totalorder %s356, %s358
      %p362 = scmp.eq.s32.totalorder %s28, 0
      %p363 = por %p361, %p362
      %p364 = scmp.ne.s32.totalorder %s356, %s358
      %p365 = scmp.eq.s32.totalorder %s33, 1
      %p366 = por %p364, %p365
      %p367 = scmp.ne.s32.totalorder %s358, %s359
      %p368 = scmp.eq.s32.totalorder %s33, 0
      %p369 = por %p367, %p368
      %p370 = scmp.ne.s32.totalorder %s358, %s359
      %p371 = scmp.eq.s32.totalorder %s34, 1
      %p372 = por %p370, %p371
      %p374 = scmp.ne.s32.totalorder %s359, %s373
      %p375 = scmp.eq.s32.totalorder %s34, 0
      %p376 = por %p374, %p375
      %s378 = sadd.s32 %s377, 1
      %p381 = scmp.eq.s32.totalorder %s28, 1
      %p382 = scmp.ne.s32.totalorder %s377, %s379
      %p383 = scmp.eq.s32.totalorder %s28, 0
      %p384 = por %p382, %p383
      %p385 = scmp.ne.s32.totalorder %s377, %s379
      %p386 = scmp.eq.s32.totalorder %s33, 1
      %p387 = por %p385, %p386
      %p388 = scmp.ne.s32.totalorder %s379, %s380
      %p389 = scmp.eq.s32.totalorder %s33, 0
      %p390 = por %p388, %p389
      %p391 = scmp.ne.s32.totalorder %s379, %s380
      %p392 = scmp.eq.s32.totalorder %s34, 1
      %p393 = por %p391, %p392
      %p395 = scmp.ne.s32.totalorder %s380, %s394
      %p396 = scmp.eq.s32.totalorder %s34, 0
      %p397 = por %p395, %p396
      %s399 = sadd.s32 %s398, 1
      %p402 = scmp.eq.s32.totalorder %s28, 1
      %p403 = scmp.ne.s32.totalorder %s398, %s400
      %p404 = scmp.eq.s32.totalorder %s28, 0
      %p405 = por %p403, %p404
      %p406 = scmp.ne.s32.totalorder %s398, %s400
      %p407 = scmp.eq.s32.totalorder %s33, 1
      %p408 = por %p406, %p407
      %p409 = scmp.ne.s32.totalorder %s400, %s401
      %p410 = scmp.eq.s32.totalorder %s33, 0
      %p411 = por %p409, %p410
      %p412 = scmp.ne.s32.totalorder %s400, %s401
      %p413 = scmp.eq.s32.totalorder %s34, 1
      %p414 = por %p412, %p413
      %p416 = scmp.ne.s32.totalorder %s401, %s415
      %p417 = scmp.eq.s32.totalorder %s34, 0
      %p418 = por %p416, %p417
      %s420 = sadd.s32 %s419, 1
      %p423 = scmp.eq.s32.totalorder %s28, 1
      %p424 = scmp.ne.s32.totalorder %s419, %s421
      %p425 = scmp.eq.s32.totalorder %s28, 0
      %p426 = por %p424, %p425
      %p427 = scmp.ne.s32.totalorder %s419, %s421
      %p428 = scmp.eq.s32.totalorder %s33, 1
      %p429 = por %p427, %p428
      %p430 = scmp.ne.s32.totalorder %s421, %s422
      %p431 = scmp.eq.s32.totalorder %s33, 0
      %p432 = por %p430, %p431
      %p433 = scmp.ne.s32.totalorder %s421, %s422
      %p434 = scmp.eq.s32.totalorder %s34, 1
      %p435 = por %p433, %p434
      %p437 = scmp.ne.s32.totalorder %s422, %s436
      %p438 = scmp.eq.s32.totalorder %s34, 0
      %p439 = por %p437, %p438
      %s441 = sadd.s32 %s440, 1
      %p444 = scmp.eq.s32.totalorder %s28, 1
      %p445 = scmp.ne.s32.totalorder %s440, %s442
      %p446 = scmp.eq.s32.totalorder %s28, 0
      %p447 = por %p445, %p446
      %p448 = scmp.ne.s32.totalorder %s440, %s442
      %p449 = scmp.eq.s32.totalorder %s33, 1
      %p450 = por %p448, %p449
      %p451 = scmp.ne.s32.totalorder %s442, %s443
      %p452 = scmp.eq.s32.totalorder %s33, 0
      %p453 = por %p451, %p452
      %p454 = scmp.ne.s32.totalorder %s442, %s443
      %p455 = scmp.eq.s32.totalorder %s34, 1
      %p456 = por %p454, %p455
      %p458 = scmp.ne.s32.totalorder %s443, %s457
      %p459 = scmp.eq.s32.totalorder %s34, 0
      %p460 = por %p458, %p459
      %s461 = ssub.s32 %s28, %s35
      %p462 = scmp.eq.s32.totalorder %s461, 0
      %s464 = sadd.s32 %s463, 1
      %s465 = scalar_select %p462, %s463, %s464
      %p468 = pneg %p462
      %p469 = scmp.eq.s32.totalorder %s28, 1
      %p470 = por %p468, %p469
      %p471 = scmp.ne.s32.totalorder %s463, %s466
      %p472 = scmp.eq.s32.totalorder %s28, 0
      %p473 = por %p471, %p472
      %p474 = scmp.ne.s32.totalorder %s463, %s466
      %p475 = scmp.eq.s32.totalorder %s33, 1
      %p476 = por %p474, %p475
      %p477 = scmp.ne.s32.totalorder %s466, %s467
      %p478 = scmp.eq.s32.totalorder %s33, 0
      %p479 = por %p477, %p478
      %p480 = scmp.ne.s32.totalorder %s466, %s467
      %p481 = scmp.eq.s32.totalorder %s34, 1
      %p482 = por %p480, %p481
      %p484 = scmp.ne.s32.totalorder %s467, %s483
      %p485 = scmp.eq.s32.totalorder %s34, 0
      %p486 = por %p484, %p485
      %p487 = scmp.le.s32.totalorder 1, %s28
      %p488 = scmp.lt.s32.totalorder %s28, 3
      %p489 = pnand %p487, %p488
      %p490 = pneg %p489
      // Predicated region
      $region9: #{tltr_forward.2} parent=5 // pred_check
        _
      $region10: #{tltr_forward.2} parent=5 // pred_check_branch
        %492 = sbr.rel (%p489) target = $region12
      $region11: #{tltr_forward.2} parent=5 // pred_region
        %s493 = ssub.s32 %s28, 1
        // Predicated region
        $region13: #{tltr_forward.2} parent=11 // pred_check
          %p494 = pneg %p75
        $region14: #{tltr_forward.2} parent=11 // pred_check_branch
          %496 = sbr.rel (%p494) target = $region16
        $region15: #{tltr_forward.2} parent=11 // pred_region
          _
        $region16: #{tltr_forward.2} parent=11 // pred_fallthru
          _
        // Predicated region
        $region17: #{tltr_forward.2} parent=11 // pred_check
          %p497 = pneg %p96
        $region18: #{tltr_forward.2} parent=11 // pred_check_branch
          %499 = sbr.rel (%p497) target = $region20
        $region19: #{tltr_forward.2} parent=11 // pred_region
          _
        $region20: #{tltr_forward.2} parent=11 // pred_fallthru
          _
        // Predicated region
        $region21: #{tltr_forward.2} parent=11 // pred_check
          %p500 = pneg %p117
        $region22: #{tltr_forward.2} parent=11 // pred_check_branch
          %502 = sbr.rel (%p500) target = $region24
        $region23: #{tltr_forward.2} parent=11 // pred_region
          _
        $region24: #{tltr_forward.2} parent=11 // pred_fallthru
          _
        // Predicated region
        $region25: #{tltr_forward.2} parent=11 // pred_check
          %p503 = pneg %p138
        $region26: #{tltr_forward.2} parent=11 // pred_check_branch
          %505 = sbr.rel (%p503) target = $region28
        $region27: #{tltr_forward.2} parent=11 // pred_region
          _
        $region28: #{tltr_forward.2} parent=11 // pred_fallthru
          _
        // Predicated region
        $region29: #{tltr_forward.2} parent=11 // pred_check
          %p506 = pneg %p159
        $region30: #{tltr_forward.2} parent=11 // pred_check_branch
          %508 = sbr.rel (%p506) target = $region32
        $region31: #{tltr_forward.2} parent=11 // pred_region
          _
        $region32: #{tltr_forward.2} parent=11 // pred_fallthru
          _
        // Predicated region
        $region33: #{tltr_forward.2} parent=11 // pred_check
          %p509 = pneg %p180
        $region34: #{tltr_forward.2} parent=11 // pred_check_branch
          %511 = sbr.rel (%p509) target = $region36
        $region35: #{tltr_forward.2} parent=11 // pred_region
          _
        $region36: #{tltr_forward.2} parent=11 // pred_fallthru
          _
        // Predicated region
        $region37: #{tltr_forward.2} parent=11 // pred_check
          %p512 = pneg %p201
        $region38: #{tltr_forward.2} parent=11 // pred_check_branch
          %514 = sbr.rel (%p512) target = $region40
        $region39: #{tltr_forward.2} parent=11 // pred_region
          _
        $region40: #{tltr_forward.2} parent=11 // pred_fallthru
          _
        // Predicated region
        $region41: #{tltr_forward.2} parent=11 // pred_check
          %p515 = pneg %p222
        $region42: #{tltr_forward.2} parent=11 // pred_check_branch
          %517 = sbr.rel (%p515) target = $region44
        $region43: #{tltr_forward.2} parent=11 // pred_region
          _
        $region44: #{tltr_forward.2} parent=11 // pred_fallthru
          _
        // Predicated region
        $region45: #{tltr_forward.2} parent=11 // pred_check
          %p518 = pneg %p243
        $region46: #{tltr_forward.2} parent=11 // pred_check_branch
          %520 = sbr.rel (%p518) target = $region48
        $region47: #{tltr_forward.2} parent=11 // pred_region
          _
        $region48: #{tltr_forward.2} parent=11 // pred_fallthru
          _
        // Predicated region
        $region49: #{tltr_forward.2} parent=11 // pred_check
          %p521 = pneg %p264
        $region50: #{tltr_forward.2} parent=11 // pred_check_branch
          %523 = sbr.rel (%p521) target = $region52
        $region51: #{tltr_forward.2} parent=11 // pred_region
          _
        $region52: #{tltr_forward.2} parent=11 // pred_fallthru
          _
        // Predicated region
        $region53: #{tltr_forward.2} parent=11 // pred_check
          %p524 = pneg %p285
        $region54: #{tltr_forward.2} parent=11 // pred_check_branch
          %526 = sbr.rel (%p524) target = $region56
        $region55: #{tltr_forward.2} parent=11 // pred_region
          _
        $region56: #{tltr_forward.2} parent=11 // pred_fallthru
          _
        // Predicated region
        $region57: #{tltr_forward.2} parent=11 // pred_check
          %p527 = pneg %p306
        $region58: #{tltr_forward.2} parent=11 // pred_check_branch
          %529 = sbr.rel (%p527) target = $region60
        $region59: #{tltr_forward.2} parent=11 // pred_region
          _
        $region60: #{tltr_forward.2} parent=11 // pred_fallthru
          _
        // Predicated region
        $region61: #{tltr_forward.2} parent=11 // pred_check
          %p530 = pneg %p327
        $region62: #{tltr_forward.2} parent=11 // pred_check_branch
          %532 = sbr.rel (%p530) target = $region64
        $region63: #{tltr_forward.2} parent=11 // pred_region
          _
        $region64: #{tltr_forward.2} parent=11 // pred_fallthru
          _
        // Predicated region
        $region65: #{tltr_forward.2} parent=11 // pred_check
          %p533 = pneg %p348
        $region66: #{tltr_forward.2} parent=11 // pred_check_branch
          %535 = sbr.rel (%p533) target = $region68
        $region67: #{tltr_forward.2} parent=11 // pred_region
          _
        $region68: #{tltr_forward.2} parent=11 // pred_fallthru
          _
        // Predicated region
        $region69: #{tltr_forward.2} parent=11 // pred_check
          %p536 = pneg %p369
        $region70: #{tltr_forward.2} parent=11 // pred_check_branch
          %538 = sbr.rel (%p536) target = $region72
        $region71: #{tltr_forward.2} parent=11 // pred_region
          %s540 = ssub.s32 16, 16
          %541 = vsyncadd [#allocation3], %s540
          %s543 = sshll.u32 [#allocation2], 4
          %s544 = int_to_ptr.vmem [resolvable:$true] %s543
          %546 = dma.hbm_to_vmem [thread:$0]  %s15, 16, %s544, [#allocation3]
        $region72: #{tltr_forward.2} parent=11 // pred_fallthru
          _
        // Predicated region
        $region73: #{tltr_forward.2} parent=11 // pred_check
          %p547 = pneg %p390
        $region74: #{tltr_forward.2} parent=11 // pred_check_branch
          %549 = sbr.rel (%p547) target = $region76
        $region75: #{tltr_forward.2} parent=11 // pred_region
          _
        $region76: #{tltr_forward.2} parent=11 // pred_fallthru
          _
        // Predicated region
        $region77: #{tltr_forward.2} parent=11 // pred_check
          %p550 = pneg %p411
        $region78: #{tltr_forward.2} parent=11 // pred_check_branch
          %552 = sbr.rel (%p550) target = $region80
        $region79: #{tltr_forward.2} parent=11 // pred_region
          %s554 = ssub.s32 16, 16
          %555 = vsyncadd [#allocation5], %s554
          %s557 = sshll.u32 [#allocation4], 4
          %s558 = int_to_ptr.vmem [resolvable:$true] %s557
          %560 = dma.hbm_to_vmem [thread:$0]  %s17, 16, %s558, [#allocation5]
        $region80: #{tltr_forward.2} parent=11 // pred_fallthru
          _
        // Predicated region
        $region81: #{tltr_forward.2} parent=11 // pred_check
          %p561 = pneg %p432
        $region82: #{tltr_forward.2} parent=11 // pred_check_branch
          %563 = sbr.rel (%p561) target = $region84
        $region83: #{tltr_forward.2} parent=11 // pred_region
          _
        $region84: #{tltr_forward.2} parent=11 // pred_fallthru
          _
        // Predicated region
        $region85: #{tltr_forward.2} parent=11 // pred_check
          %p564 = pneg %p453
        $region86: #{tltr_forward.2} parent=11 // pred_check_branch
          %566 = sbr.rel (%p564) target = $region88
        $region87: #{tltr_forward.2} parent=11 // pred_region
          %s568 = ssub.s32 16, 16
          %569 = vsyncadd [#allocation5], %s568
          %s571 = sshll.u32 [#allocation6], 4
          %s572 = int_to_ptr.vmem [resolvable:$true] %s571
          %574 = dma.hbm_to_vmem [thread:$0]  %s19, 16, %s572, [#allocation5]
        $region88: #{tltr_forward.2} parent=11 // pred_fallthru
          _
      $region12: #{tltr_forward.2} parent=5 // pred_fallthru
        _
      %p575 = scmp.lt.s32.totalorder %s28, 2
      // Predicated region
      $region89: #{tltr_forward.2} parent=5 // pred_check
        %p576 = pneg %p575
      $region90: #{tltr_forward.2} parent=5 // pred_check_branch
        %578 = sbr.rel (%p576) target = $region92
      $region91: #{tltr_forward.2} parent=5 // pred_region
        // Predicated region
        $region93: #{tltr_forward.2} parent=91 // pred_check
          %p579 = pneg %p48
        $region94: #{tltr_forward.2} parent=91 // pred_check_branch
          %581 = sbr.rel (%p579) target = $region96
        $region95: #{tltr_forward.2} parent=91 // pred_region
          %s582 = smul.u32 4, %s28
          %p583 = scmp.lt.s32.totalorder %s582, 7
          %s584 = scalar_select %p583, %s582, 7
          %s585 = smul.addr %s584, 8
          %s586 = scalar_lea.vmem %s0, %s585
          %s587 = smul.u32 4, %s28
        $region96: #{tltr_forward.2} parent=91 // pred_fallthru
          _
      $region92: #{tltr_forward.2} parent=5 // pred_fallthru
        _
      %p588 = scmp.le.s32.totalorder 1, %s28
      %p589 = scmp.lt.s32.totalorder %s28, 3
      %p590 = pnand %p588, %p589
      %p591 = pneg %p590
      // Predicated region
      $region97: #{tltr_forward.2} parent=5 // pred_check
        _
      $region98: #{tltr_forward.2} parent=5 // pred_check_branch
        %593 = sbr.rel (%p590) target = $region100
      $region99: #{tltr_forward.2} parent=5 // pred_region
        %s594 = ssub.s32 %s28, 1
        // Predicated region
        $region101: #{tltr_forward.2} parent=99 // pred_check
          %p595 = pneg %p369
        $region102: #{tltr_forward.2} parent=99 // pred_check_branch
          %597 = sbr.rel (%p595) target = $region104
        $region103: #{tltr_forward.2} parent=99 // pred_region
          %598 = dma.done [#allocation3], 16
        $region104: #{tltr_forward.2} parent=99 // pred_fallthru
          _
        // Predicated region
        $region105: #{tltr_forward.2} parent=99 // pred_check
          %p599 = pneg %p411
        $region106: #{tltr_forward.2} parent=99 // pred_check_branch
          %601 = sbr.rel (%p599) target = $region108
        $region107: #{tltr_forward.2} parent=99 // pred_region
          %602 = dma.done [#allocation5], 16
        $region108: #{tltr_forward.2} parent=99 // pred_fallthru
          _
        // Predicated region
        $region109: #{tltr_forward.2} parent=99 // pred_check
          %p603 = pneg %p453
        $region110: #{tltr_forward.2} parent=99 // pred_check_branch
          %605 = sbr.rel (%p603) target = $region112
        $region111: #{tltr_forward.2} parent=99 // pred_region
          %606 = dma.done [#allocation5], 16
        $region112: #{tltr_forward.2} parent=99 // pred_fallthru
          _
        %s607 = smul.u32 4, %s33
        %p608 = scmp.lt.s32.totalorder %s607, 7
        %s609 = scalar_select %p608, %s607, 7
        %s610 = smul.addr %s609, 8
        %s611 = scalar_lea.vmem %s0, %s610
        %p612 = pneg %p54
        %p613 = pneg %p51
        %p614 = pneg %p75
        %p615 = pneg %p72
        %p616 = pneg %p96
        %p617 = pneg %p93
        %p618 = pneg %p117
        %p619 = pneg %p114
        %p620 = pneg %p138
        %p621 = pneg %p135
        %p622 = pneg %p159
        %p623 = pneg %p156
        %p624 = pneg %p180
        %p625 = pneg %p177
        %p626 = pneg %p201
        %p627 = pneg %p198
        %p628 = pneg %p222
        %p629 = pneg %p219
        %p630 = pneg %p243
        %p631 = pneg %p240
        %p632 = pneg %p264
        %p633 = pneg %p261
        %p634 = pneg %p285
        %p635 = pneg %p282
        %p636 = pneg %p306
        %p637 = pneg %p303
        %p638 = pneg %p327
        %p639 = pneg %p324
        %p640 = pneg %p348
        %p641 = pneg %p345
        %p642 = pneg %p369
        %p643 = pneg %p366
        %p644 = pneg %p390
        %p645 = pneg %p387
        %p646 = pneg %p411
        %p647 = pneg %p408
        %p648 = pneg %p432
        %p649 = pneg %p429
        %p650 = pneg %p453
        %p651 = pneg %p450
        %p652 = pneg %p479
        %p653 = pneg %p476
        %p654 = scmp.lt.s32.totalorder %s33, 1
        %s655 = scalar_select %p654, %s33, 1
        %s656 = smul.addr %s655, 4
        %s657 = scalar_lea.vmem %s20, %s656
        %s658 = smul.u32 4, %s33
        %p659 = scmp.lt.s32.totalorder %s658, 7
        %s660 = scalar_select %p659, %s658, 7
        %s661 = smul.addr %s660, 8
        %s662 = scalar_lea.vmem %s0, %s661
        %s663 = smul.u32 4, %s33
        %p664 = scmp.lt.s32.totalorder %s33, 1
        %s665 = scalar_select %p664, %s33, 1
        %s666 = smul.addr %s665, 4
        %s667 = scalar_lea.vmem %s20, %s666
        %v669 = vld [vmem:[%s662] sm:$0xff]
        %v670 = vld [vmem:[%s662 + $0x8] sm:$0xff]
        %v671 = vld [vmem:[%s662 + $0x10] sm:$0xff]
        %v672 = vld [vmem:[%s662 + $0x18] sm:$0xff]
        %v673 = vld [vmem:[%s1] sm:$0x1]
        %v674 = vld [vmem:[%s2] sm:$0x1]
        %vm675 = vcmask 261120
        %v676 = vsel %vm675, %v669, 0.0
        %677 = vadd.xlane.f32.xlu0 %v676
        %v678 = vpop.xlane.xlu0 %677
        %v679 = vsel %vm675, %v670, 0.0
        %680 = vadd.xlane.f32.xlu0 %v679
        %v681 = vpop.xlane.xlu0 %680
        %v682 = vsel %vm675, %v671, 0.0
        %683 = vadd.xlane.f32.xlu0 %v682
        %v684 = vpop.xlane.xlu0 %683
        %v685 = vsel %vm675, %v672, 0.0
        %686 = vadd.xlane.f32.xlu0 %v685
        %v687 = vpop.xlane.xlu0 %686
        %v688 = vrcp.pop 32.0
        %v689 = vmul.f32 %v678, %v688
        %v690 = vmul.f32 %v681, %v688
        %v691 = vmul.f32 %v684, %v688
        %v692 = vmul.f32 %v687, %v688
        %v693 = vsub.f32 %v669, %v689
        %v694 = vsub.f32 %v670, %v690
        %v695 = vsub.f32 %v671, %v691
        %v696 = vsub.f32 %v672, %v692
        %v697 = vmul.f32 %v693, %v693
        %v698 = vmul.f32 %v694, %v694
        %v699 = vmul.f32 %v695, %v695
        %v700 = vmul.f32 %v696, %v696
        %v701 = vsel %vm675, %v697, 0.0
        %702 = vadd.xlane.f32.xlu0 %v701
        %v703 = vpop.xlane.xlu0 %702
        %v704 = vsel %vm675, %v698, 0.0
        %705 = vadd.xlane.f32.xlu0 %v704
        %v706 = vpop.xlane.xlu0 %705
        %v707 = vsel %vm675, %v699, 0.0
        %708 = vadd.xlane.f32.xlu0 %v707
        %v709 = vpop.xlane.xlu0 %708
        %v710 = vsel %vm675, %v700, 0.0
        %711 = vadd.xlane.f32.xlu0 %v710
        %v712 = vpop.xlane.xlu0 %711
        %v713 = vmul.f32 %v703, %v688
        %v714 = vmul.f32 %v706, %v688
        %v715 = vmul.f32 %v709, %v688
        %v716 = vmul.f32 %v712, %v688
        %v717 = vadd.f32 %v713, 1e-05
        %v718 = vadd.f32 %v714, 1e-05
        %v719 = vadd.f32 %v715, 1e-05
        %v720 = vadd.f32 %v716, 1e-05
        %v721 = vrsqrt.pop %v717
        %v722 = vrsqrt.pop %v718
        %v723 = vrsqrt.pop %v719
        %v724 = vrsqrt.pop %v720
        %v725 = vmul.f32 %v693, %v721
        %v726 = vmul.f32 %v694, %v722
        %v727 = vmul.f32 %v695, %v723
        %v728 = vmul.f32 %v696, %v724
        %v730 = vlaneseq
        %v731 = vshrl.u32 %v730, 7
        %v732 = vsub.s32 0, %v731
        %v733 = vrot.slane %v673, %v732
        %v735 = vmul.f32 %v725, %v733
        %v736 = vmul.f32 %v726, %v733
        %v737 = vmul.f32 %v727, %v733
        %v738 = vmul.f32 %v728, %v733
        %v740 = vlaneseq
        %v741 = vshrl.u32 %v740, 7
        %v742 = vsub.s32 0, %v741
        %v743 = vrot.slane %v674, %v742
        %v745 = vadd.f32 %v735, %v743
        %v746 = vadd.f32 %v736, %v743
        %v747 = vadd.f32 %v737, %v743
        %v748 = vadd.f32 %v738, %v743
        %v749 = vpack.c.bf16 %v746, %v745
        %v750 = vpack.c.bf16 %v748, %v747
        %v751 = vld [vmem:[%s3] sm:$0xf]
        %v752 = vld [vmem:[%s3 + $0x4] sm:$0xf]
        %v753 = vld [vmem:[%s3 + $0x8] sm:$0xf]
        %v754 = vld [vmem:[%s3 + $0xc] sm:$0xf]
        %v755 = vld [vmem:[%s4] sm:$0x1]
        %v757 = vlaneseq
        %v758 = vshrl.u32 %v757, 7
        %v759 = vsub.s32 0, %v758
        %v760 = vrot.slane %v755, %v759
        %v766 = vunpack.c.l.b16 %v751
        %v767 = vunpack.c.l.b16 %v752
        %v768 = vunpack.c.l.b16 %v753
        %v769 = vunpack.c.l.b16 %v754
        %v770 = vpack.c.b16 %v767, %v766
        %v771 = vpack.c.b16 %v769, %v768
        %v775 = vsel %vm675, %v749, 0
        %v778 = vsel %vm675, %v750, 0
        %780 = vmatprep.subr.bf16.mxu0 0
        %781 = vmatpush1.bf16.msra.mxu0 0
        %782 = vmatprep.subr.bf16.mxu0 0
        %783 = vmatpush1.bf16.msra.mxu0 0
        %784 = vmatprep.subr.bf16.mxu0 0
        %785 = vmatpush1.bf16.msra.mxu0 0
        %786 = vmatprep.subr.bf16.mxu0 0
        %787 = vmatpush1.bf16.msra.mxu0 0
        %788 = vmatprep.subr.bf16.mxu0 0
        %789 = vmatpush1.bf16.msra.mxu0 0
        %790 = vmatprep.subr.bf16.mxu0 0
        %791 = vmatpush1.bf16.msra.mxu0 0
        %792 = vmatprep.subr.bf16.mxu0 0
        %793 = vmatpush1.bf16.msra.mxu0 %v771
        %794 = vmatprep.subr.bf16.mxu0 0
        %795 = vmatpush1.bf16.msra.mxu0 %v770
        %796 = vmatprep.subr.bf16.mxu0 0
        %797 = vmatpush2.bf16.msra.mxu0 0
        %798 = vmatprep.subr.bf16.mxu0 0
        %799 = vmatpush2.bf16.msra.mxu0 0
        %800 = vmatprep.subr.bf16.mxu0 0
        %801 = vmatpush2.bf16.msra.mxu0 0
        %802 = vmatprep.subr.bf16.mxu0 0
        %803 = vmatpush2.bf16.msra.mxu0 0
        %804 = vmatprep.subr.bf16.mxu0 0
        %805 = vmatpush2.bf16.msra.mxu0 0
        %806 = vmatprep.subr.bf16.mxu0 0
        %807 = vmatpush2.bf16.msra.mxu0 0
        %808 = vmatprep.subr.bf16.mxu0 0
        %809 = vmatpush2.bf16.msra.mxu0 0
        %810 = vmatprep.subr.bf16.mxu0 0
        %811 = vmatpush2.bf16.msra.mxu0 0
        %812 = vmatprep.mubr.bf16.mxu0 0
        %813 = vmatmul.mubr.bf16.gmra.mxu0 %v775
        %v814 = vpop.f32.mrf.mxu0
        %v815 = vadd.f32 %v760, %v814
        %v816 = vpop.f32.mrf.mxu0
        %v817 = vpop.f32.mrf.mxu0
        %v818 = vadd.f32 %v760, %v817
        %v819 = vpop.f32.mrf.mxu0
        %820 = vmatprep.mubr.bf16.mxu0 0
        %821 = vmatmul.mubr.bf16.gmra.mxu0 %v778
        %v822 = vpop.f32.mrf.mxu0
        %v823 = vadd.f32 %v760, %v822
        %v824 = vpop.f32.mrf.mxu0
        %v825 = vpop.f32.mrf.mxu0
        %v826 = vadd.f32 %v760, %v825
        %v827 = vpop.f32.mrf.mxu0
        %828 = vdwg.mxu0
        %v829 = vld [vmem:[%s5] sm:$0x1]
        %v830 = vld [vmem:[%s6] sm:$0x1]
        %v831 = vld [vmem:[%s7] sm:$0xf]
        %v832 = vld [vmem:[%s7 + $0x4] sm:$0xf]
        %v833 = vld [vmem:[%s8] sm:$0x1]
        %v834 = vld [vmem:[%s9] sm:$0xf]
        %v835 = vld [vmem:[%s9 + $0x4] sm:$0xf]
        %v836 = vld [vmem:[%s10] sm:$0xf]
        %v837 = vld [vmem:[%s10 + $0x4] sm:$0xf]
        %v838 = vld [vmem:[%s11] sm:$0x1]
        %v839 = vld [vmem:[%s12] sm:$0xf]
        %v840 = vld [vmem:[%s12 + $0x4] sm:$0xf]
        %v841 = vld [vmem:[%s13] sm:$0x1]
        %v842 = vld [vmem:[%s14] sm:$0x1]
        %v843 = vld [vmem:[#allocation2] sm:$0x1]
        %v844 = vld [vmem:[%s16] sm:$0xf]
        %v845 = vld [vmem:[%s16 + $0x4] sm:$0xf]
        %v846 = vld [vmem:[#allocation4] sm:$0x1]
        %v847 = vld [vmem:[%s18] sm:$0xf]
        %v848 = vld [vmem:[%s18 + $0x4] sm:$0xf]
        %v849 = vld [vmem:[%s18 + $0x8] sm:$0xf]
        %v850 = vld [vmem:[%s18 + $0xc] sm:$0xf]
        %v851 = vld [vmem:[%s18 + $0x10] sm:$0xf]
        %v852 = vld [vmem:[%s18 + $0x14] sm:$0xf]
        %v853 = vld [vmem:[%s18 + $0x18] sm:$0xf]
        %v854 = vld [vmem:[%s18 + $0x1c] sm:$0xf]
        %v855 = vld [vmem:[#allocation6] sm:$0x1]
        %vm856 = vcmask 130048
        %v857 = vsel %vm856, %v815, 0.0
        %858 = vadd.xlane.f32.xlu0 %v857
        %v859 = vpop.xlane.xlu0 %858
        %v860 = vsel %vm856, %v818, 0.0
        %861 = vadd.xlane.f32.xlu0 %v860
        %v862 = vpop.xlane.xlu0 %861
        %v863 = vsel %vm856, %v823, 0.0
        %864 = vadd.xlane.f32.xlu0 %v863
        %v865 = vpop.xlane.xlu0 %864
        %v866 = vsel %vm856, %v826, 0.0
        %867 = vadd.xlane.f32.xlu0 %v866
        %v868 = vpop.xlane.xlu0 %867
        %v869 = vrcp.pop 16.0
        %v870 = vmul.f32 %v859, %v869
        %v871 = vmul.f32 %v862, %v869
        %v872 = vmul.f32 %v865, %v869
        %v873 = vmul.f32 %v868, %v869
        %v874 = vsub.f32 %v815, %v870
        %v875 = vsub.f32 %v818, %v871
        %v876 = vsub.f32 %v823, %v872
        %v877 = vsub.f32 %v826, %v873
        %v878 = vmul.f32 %v874, %v874
        %v879 = vmul.f32 %v875, %v875
        %v880 = vmul.f32 %v876, %v876
        %v881 = vmul.f32 %v877, %v877
        %v882 = vsel %vm856, %v878, 0.0
        %883 = vadd.xlane.f32.xlu0 %v882
        %v884 = vpop.xlane.xlu0 %883
        %v885 = vsel %vm856, %v879, 0.0
        %886 = vadd.xlane.f32.xlu0 %v885
        %v887 = vpop.xlane.xlu0 %886
        %v888 = vsel %vm856, %v880, 0.0
        %889 = vadd.xlane.f32.xlu0 %v888
        %v890 = vpop.xlane.xlu0 %889
        %v891 = vsel %vm856, %v881, 0.0
        %892 = vadd.xlane.f32.xlu0 %v891
        %v893 = vpop.xlane.xlu0 %892
        %v894 = vmul.f32 %v884, %v869
        %v895 = vmul.f32 %v887, %v869
        %v896 = vmul.f32 %v890, %v869
        %v897 = vmul.f32 %v893, %v869
        %v898 = vadd.f32 %v894, 1e-05
        %v899 = vadd.f32 %v895, 1e-05
        %v900 = vadd.f32 %v896, 1e-05
        %v901 = vadd.f32 %v897, 1e-05
        %v902 = vrsqrt.pop %v898
        %v903 = vrsqrt.pop %v899
        %v904 = vrsqrt.pop %v900
        %v905 = vrsqrt.pop %v901
        %v906 = vmul.f32 %v874, %v902
        %v907 = vmul.f32 %v875, %v903
        %v908 = vmul.f32 %v876, %v904
        %v909 = vmul.f32 %v877, %v905
        %v911 = vlaneseq
        %v912 = vshrl.u32 %v911, 7
        %v913 = vsub.s32 0, %v912
        %v914 = vrot.slane %v829, %v913
        %v916 = vmul.f32 %v906, %v914
        %v917 = vmul.f32 %v907, %v914
        %v918 = vmul.f32 %v908, %v914
        %v919 = vmul.f32 %v909, %v914
        %v921 = vlaneseq
        %v922 = vshrl.u32 %v921, 7
        %v923 = vsub.s32 0, %v922
        %v924 = vrot.slane %v830, %v923
        %v926 = vadd.f32 %v916, %v924
        %v927 = vadd.f32 %v917, %v924
        %v928 = vadd.f32 %v918, %v924
        %v929 = vadd.f32 %v919, %v924
        %v930 = vpack.c.bf16 %v927, %v926
        %v931 = vpack.c.bf16 %v929, %v928
        %v933 = vlaneseq
        %v934 = vshrl.u32 %v933, 7
        %v935 = vsub.s32 0, %v934
        %v936 = vrot.slane %v833, %v935
        %v940 = vunpack.c.l.b16 %v831
        %v941 = vunpack.c.l.b16 %v832
        %v942 = vpack.c.b16 %v941, %v940
        %v945 = vsel %vm856, %v930, 0
        %v948 = vsel %vm856, %v931, 0
        %950 = vmatprep.subr.bf16.mxu0 0
        %951 = vmatpush1.bf16.msra.mxu0 0
        %952 = vmatprep.subr.bf16.mxu0 0
        %953 = vmatpush1.bf16.msra.mxu0 0
        %954 = vmatprep.subr.bf16.mxu0 0
        %955 = vmatpush1.bf16.msra.mxu0 0
        %956 = vmatprep.subr.bf16.mxu0 0
        %957 = vmatpush1.bf16.msra.mxu0 0
        %958 = vmatprep.subr.bf16.mxu0 0
        %959 = vmatpush1.bf16.msra.mxu0 0
        %960 = vmatprep.subr.bf16.mxu0 0
        %961 = vmatpush1.bf16.msra.mxu0 0
        %962 = vmatprep.subr.bf16.mxu0 0
        %963 = vmatpush1.bf16.msra.mxu0 0
        %964 = vmatprep.subr.bf16.mxu0 0
        %965 = vmatpush1.bf16.msra.mxu0 %v942
        %966 = vmatprep.subr.bf16.mxu0 0
        %967 = vmatpush2.bf16.msra.mxu0 0
        %968 = vmatprep.subr.bf16.mxu0 0
        %969 = vmatpush2.bf16.msra.mxu0 0
        %970 = vmatprep.subr.bf16.mxu0 0
        %971 = vmatpush2.bf16.msra.mxu0 0
        %972 = vmatprep.subr.bf16.mxu0 0
        %973 = vmatpush2.bf16.msra.mxu0 0
        %974 = vmatprep.subr.bf16.mxu0 0
        %975 = vmatpush2.bf16.msra.mxu0 0
        %976 = vmatprep.subr.bf16.mxu0 0
        %977 = vmatpush2.bf16.msra.mxu0 0
        %978 = vmatprep.subr.bf16.mxu0 0
        %979 = vmatpush2.bf16.msra.mxu0 0
        %980 = vmatprep.subr.bf16.mxu0 0
        %981 = vmatpush2.bf16.msra.mxu0 0
        %982 = vmatprep.mubr.bf16.mxu0 0
        %983 = vmatmul.mubr.bf16.gmra.mxu0 %v945
        %v984 = vpop.f32.mrf.mxu0
        %v985 = vadd.f32 %v936, %v984
        %v986 = vpop.f32.mrf.mxu0
        %v987 = vpop.f32.mrf.mxu0
        %v988 = vadd.f32 %v936, %v987
        %v989 = vpop.f32.mrf.mxu0
        %990 = vmatprep.mubr.bf16.mxu0 0
        %991 = vmatmul.mubr.bf16.gmra.mxu0 %v948
        %v992 = vpop.f32.mrf.mxu0
        %v993 = vadd.f32 %v936, %v992
        %v994 = vpop.f32.mrf.mxu0
        %v995 = vpop.f32.mrf.mxu0
        %v996 = vadd.f32 %v936, %v995
        %v997 = vpop.f32.mrf.mxu0
        %998 = vdwg.mxu0
        %v1001 = vunpack.c.l.b16 %v834
        %v1002 = vunpack.c.l.b16 %v835
        %v1003 = vpack.c.b16 %v1002, %v1001
        %1005 = vmatprep.subr.bf16.mxu0 0
        %1006 = vmatpush1.bf16.msra.mxu0 0
        %1007 = vmatprep.subr.bf16.mxu0 0
        %1008 = vmatpush1.bf16.msra.mxu0 0
        %1009 = vmatprep.subr.bf16.mxu0 0
        %1010 = vmatpush1.bf16.msra.mxu0 0
        %1011 = vmatprep.subr.bf16.mxu0 0
        %1012 = vmatpush1.bf16.msra.mxu0 0
        %1013 = vmatprep.subr.bf16.mxu0 0
        %1014 = vmatpush1.bf16.msra.mxu0 0
        %1015 = vmatprep.subr.bf16.mxu0 0
        %1016 = vmatpush1.bf16.msra.mxu0 0
        %1017 = vmatprep.subr.bf16.mxu0 0
        %1018 = vmatpush1.bf16.msra.mxu0 0
        %1019 = vmatprep.subr.bf16.mxu0 0
        %1020 = vmatpush1.bf16.msra.mxu0 %v1003
        %1021 = vmatprep.subr.bf16.mxu0 0
        %1022 = vmatpush2.bf16.msra.mxu0 0
        %1023 = vmatprep.subr.bf16.mxu0 0
        %1024 = vmatpush2.bf16.msra.mxu0 0
        %1025 = vmatprep.subr.bf16.mxu0 0
        %1026 = vmatpush2.bf16.msra.mxu0 0
        %1027 = vmatprep.subr.bf16.mxu0 0
        %1028 = vmatpush2.bf16.msra.mxu0 0
        %1029 = vmatprep.subr.bf16.mxu0 0
        %1030 = vmatpush2.bf16.msra.mxu0 0
        %1031 = vmatprep.subr.bf16.mxu0 0
        %1032 = vmatpush2.bf16.msra.mxu0 0
        %1033 = vmatprep.subr.bf16.mxu0 0
        %1034 = vmatpush2.bf16.msra.mxu0 0
        %1035 = vmatprep.subr.bf16.mxu0 0
        %1036 = vmatpush2.bf16.msra.mxu0 0
        %1037 = vmatprep.mubr.bf16.mxu0 0
        %1038 = vmatmul.mubr.bf16.gmra.mxu0 %v945
        %v1039 = vpop.f32.mrf.mxu0
        %v1040 = vadd.f32 0.0, %v1039
        %v1041 = vpop.f32.mrf.mxu0
        %v1042 = vpop.f32.mrf.mxu0
        %v1043 = vadd.f32 0.0, %v1042
        %v1044 = vpop.f32.mrf.mxu0
        %1045 = vmatprep.mubr.bf16.mxu0 0
        %1046 = vmatmul.mubr.bf16.gmra.mxu0 %v948
        %v1047 = vpop.f32.mrf.mxu0
        %v1048 = vadd.f32 0.0, %v1047
        %v1049 = vpop.f32.mrf.mxu0
        %v1050 = vpop.f32.mrf.mxu0
        %v1051 = vadd.f32 0.0, %v1050
        %v1052 = vpop.f32.mrf.mxu0
        %1053 = vdwg.mxu0
        %v1055 = vlaneseq
        %v1056 = vshrl.u32 %v1055, 7
        %v1057 = vsub.s32 0, %v1056
        %v1058 = vrot.slane %v838, %v1057
        %v1062 = vunpack.c.l.b16 %v836
        %v1063 = vunpack.c.l.b16 %v837
        %v1064 = vpack.c.b16 %v1063, %v1062
        %1066 = vmatprep.subr.bf16.mxu0 0
        %1067 = vmatpush1.bf16.msra.mxu0 0
        %1068 = vmatprep.subr.bf16.mxu0 0
        %1069 = vmatpush1.bf16.msra.mxu0 0
        %1070 = vmatprep.subr.bf16.mxu0 0
        %1071 = vmatpush1.bf16.msra.mxu0 0
        %1072 = vmatprep.subr.bf16.mxu0 0
        %1073 = vmatpush1.bf16.msra.mxu0 0
        %1074 = vmatprep.subr.bf16.mxu0 0
        %1075 = vmatpush1.bf16.msra.mxu0 0
        %1076 = vmatprep.subr.bf16.mxu0 0
        %1077 = vmatpush1.bf16.msra.mxu0 0
        %1078 = vmatprep.subr.bf16.mxu0 0
        %1079 = vmatpush1.bf16.msra.mxu0 0
        %1080 = vmatprep.subr.bf16.mxu0 0
        %1081 = vmatpush1.bf16.msra.mxu0 %v1064
        %1082 = vmatprep.subr.bf16.mxu0 0
        %1083 = vmatpush2.bf16.msra.mxu0 0
        %1084 = vmatprep.subr.bf16.mxu0 0
        %1085 = vmatpush2.bf16.msra.mxu0 0
        %1086 = vmatprep.subr.bf16.mxu0 0
        %1087 = vmatpush2.bf16.msra.mxu0 0
        %1088 = vmatprep.subr.bf16.mxu0 0
        %1089 = vmatpush2.bf16.msra.mxu0 0
        %1090 = vmatprep.subr.bf16.mxu0 0
        %1091 = vmatpush2.bf16.msra.mxu0 0
        %1092 = vmatprep.subr.bf16.mxu0 0
        %1093 = vmatpush2.bf16.msra.mxu0 0
        %1094 = vmatprep.subr.bf16.mxu0 0
        %1095 = vmatpush2.bf16.msra.mxu0 0
        %1096 = vmatprep.subr.bf16.mxu0 0
        %1097 = vmatpush2.bf16.msra.mxu0 0
        %1098 = vmatprep.mubr.bf16.mxu0 0
        %1099 = vmatmul.mubr.bf16.gmra.mxu0 %v945
        %v1100 = vpop.f32.mrf.mxu0
        %v1101 = vadd.f32 %v1058, %v1100
        %v1102 = vpop.f32.mrf.mxu0
        %v1103 = vpop.f32.mrf.mxu0
        %v1104 = vadd.f32 %v1058, %v1103
        %v1105 = vpop.f32.mrf.mxu0
        %1106 = vmatprep.mubr.bf16.mxu0 0
        %1107 = vmatmul.mubr.bf16.gmra.mxu0 %v948
        %v1108 = vpop.f32.mrf.mxu0
        %v1109 = vadd.f32 %v1058, %v1108
        %v1110 = vpop.f32.mrf.mxu0
        %v1111 = vpop.f32.mrf.mxu0
        %v1112 = vadd.f32 %v1058, %v1111
        %v1113 = vpop.f32.mrf.mxu0
        %1114 = vdwg.mxu0
        %v1115 = vpack.c.bf16 %v985, %v985
        %v1116 = vpack.c.bf16 %v988, %v988
        %v1117 = vpack.c.bf16 %v993, %v993
        %v1118 = vpack.c.bf16 %v996, %v996
        %v1119 = vpack.c.bf16 %v1040, %v1040
        %v1120 = vpack.c.bf16 %v1043, %v1043
        %v1121 = vpack.c.bf16 %v1048, %v1048
        %v1122 = vpack.c.bf16 %v1051, %v1051
        %v1123 = vpack.c.bf16 %v1101, %v1101
        %v1124 = vpack.c.bf16 %v1104, %v1104
        %v1125 = vpack.c.bf16 %v1109, %v1109
        %v1126 = vpack.c.bf16 %v1112, %v1112
        %v1128 = vsel %vm856, %v1115, 0
        %v1131 = vsel %vm856, %v1119, 0
        %1133 = vmatprep.subr.bf16.mxu0 0
        %1134 = vmatpush1.bf16.xpose.msra.mxu0 0
        %1135 = vmatprep.subr.bf16.mxu0 0
        %1136 = vmatpush1.bf16.xpose.msra.mxu0 0
        %1137 = vmatprep.subr.bf16.mxu0 0
        %1138 = vmatpush1.bf16.xpose.msra.mxu0 0
        %1139 = vmatprep.subr.bf16.mxu0 0
        %1140 = vmatpush1.bf16.xpose.msra.mxu0 0
        %1141 = vmatprep.subr.bf16.mxu0 0
        %1142 = vmatpush1.bf16.xpose.msra.mxu0 0
        %1143 = vmatprep.subr.bf16.mxu0 0
        %1144 = vmatpush1.bf16.xpose.msra.mxu0 0
        %1145 = vmatprep.subr.bf16.mxu0 0
        %1146 = vmatpush1.bf16.xpose.msra.mxu0 0
        %1147 = vmatprep.subr.bf16.mxu0 0
        %1148 = vmatpush1.bf16.xpose.msra.mxu0 %v1131
        %1149 = vmatprep.subr.bf16.mxu0 0
        %1150 = vmatpush2.bf16.xpose.msra.mxu0 0
        %1151 = vmatprep.subr.bf16.mxu0 0
        %1152 = vmatpush2.bf16.xpose.msra.mxu0 0
        %1153 = vmatprep.subr.bf16.mxu0 0
        %1154 = vmatpush2.bf16.xpose.msra.mxu0 0
        %1155 = vmatprep.subr.bf16.mxu0 0
        %1156 = vmatpush2.bf16.xpose.msra.mxu0 0
        %1157 = vmatprep.subr.bf16.mxu0 0
        %1158 = vmatpush2.bf16.xpose.msra.mxu0 0
        %1159 = vmatprep.subr.bf16.mxu0 0
        %1160 = vmatpush2.bf16.xpose.msra.mxu0 0
        %1161 = vmatprep.subr.bf16.mxu0 0
        %1162 = vmatpush2.bf16.xpose.msra.mxu0 0
        %1163 = vmatprep.subr.bf16.mxu0 0
        %1164 = vmatpush2.bf16.xpose.msra.mxu0 0
        %1165 = vmatprep.mubr.bf16.mxu0 0
        %1166 = vmatmul.mubr.bf16.gmra.mxu0 %v1128
        %v1167 = vpop.f32.mrf.mxu0
        %v1168 = vadd.f32 0.0, %v1167
        %v1169 = vpop.f32.mrf.mxu0
        %v1170 = vpop.f32.mrf.mxu0
        %v1171 = vpop.f32.mrf.mxu0
        %1172 = vdwg.mxu0
        %v1174 = vsel %vm856, %v1116, 0
        %v1177 = vsel %vm856, %v1120, 0
        %1179 = vmatprep.subr.bf16.mxu0 0
        %1180 = vmatpush1.bf16.xpose.msra.mxu0 0
        %1181 = vmatprep.subr.bf16.mxu0 0
        %1182 = vmatpush1.bf16.xpose.msra.mxu0 0
        %1183 = vmatprep.subr.bf16.mxu0 0
        %1184 = vmatpush1.bf16.xpose.msra.mxu0 0
        %1185 = vmatprep.subr.bf16.mxu0 0
        %1186 = vmatpush1.bf16.xpose.msra.mxu0 0
        %1187 = vmatprep.subr.bf16.mxu0 0
        %1188 = vmatpush1.bf16.xpose.msra.mxu0 0
        %1189 = vmatprep.subr.bf16.mxu0 0
        %1190 = vmatpush1.bf16.xpose.msra.mxu0 0
        %1191 = vmatprep.subr.bf16.mxu0 0
        %1192 = vmatpush1.bf16.xpose.msra.mxu0 0
        %1193 = vmatprep.subr.bf16.mxu0 0
        %1194 = vmatpush1.bf16.xpose.msra.mxu0 %v1177
        %1195 = vmatprep.subr.bf16.mxu0 0
        %1196 = vmatpush2.bf16.xpose.msra.mxu0 0
        %1197 = vmatprep.subr.bf16.mxu0 0
        %1198 = vmatpush2.bf16.xpose.msra.mxu0 0
        %1199 = vmatprep.subr.bf16.mxu0 0
        %1200 = vmatpush2.bf16.xpose.msra.mxu0 0
        %1201 = vmatprep.subr.bf16.mxu0 0
        %1202 = vmatpush2.bf16.xpose.msra.mxu0 0
        %1203 = vmatprep.subr.bf16.mxu0 0
        %1204 = vmatpush2.bf16.xpose.msra.mxu0 0
        %1205 = vmatprep.subr.bf16.mxu0 0
        %1206 = vmatpush2.bf16.xpose.msra.mxu0 0
        %1207 = vmatprep.subr.bf16.mxu0 0
        %1208 = vmatpush2.bf16.xpose.msra.mxu0 0
        %1209 = vmatprep.subr.bf16.mxu0 0
        %1210 = vmatpush2.bf16.xpose.msra.mxu0 0
        %1211 = vmatprep.mubr.bf16.mxu0 0
        %1212 = vmatmul.mubr.bf16.gmra.mxu0 %v1174
        %v1213 = vpop.f32.mrf.mxu0
        %v1214 = vadd.f32 0.0, %v1213
        %v1215 = vpop.f32.mrf.mxu0
        %v1216 = vpop.f32.mrf.mxu0
        %v1217 = vpop.f32.mrf.mxu0
        %1218 = vdwg.mxu0
        %v1220 = vsel %vm856, %v1117, 0
        %v1223 = vsel %vm856, %v1121, 0
        %1225 = vmatprep.subr.bf16.mxu0 0
        %1226 = vmatpush1.bf16.xpose.msra.mxu0 0
        %1227 = vmatprep.subr.bf16.mxu0 0
        %1228 = vmatpush1.bf16.xpose.msra.mxu0 0
        %1229 = vmatprep.subr.bf16.mxu0 0
        %1230 = vmatpush1.bf16.xpose.msra.mxu0 0
        %1231 = vmatprep.subr.bf16.mxu0 0
        %1232 = vmatpush1.bf16.xpose.msra.mxu0 0
        %1233 = vmatprep.subr.bf16.mxu0 0
        %1234 = vmatpush1.bf16.xpose.msra.mxu0 0
        %1235 = vmatprep.subr.bf16.mxu0 0
        %1236 = vmatpush1.bf16.xpose.msra.mxu0 0
        %1237 = vmatprep.subr.bf16.mxu0 0
        %1238 = vmatpush1.bf16.xpose.msra.mxu0 0
        %1239 = vmatprep.subr.bf16.mxu0 0
        %1240 = vmatpush1.bf16.xpose.msra.mxu0 %v1223
        %1241 = vmatprep.subr.bf16.mxu0 0
        %1242 = vmatpush2.bf16.xpose.msra.mxu0 0
        %1243 = vmatprep.subr.bf16.mxu0 0
        %1244 = vmatpush2.bf16.xpose.msra.mxu0 0
        %1245 = vmatprep.subr.bf16.mxu0 0
        %1246 = vmatpush2.bf16.xpose.msra.mxu0 0
        %1247 = vmatprep.subr.bf16.mxu0 0
        %1248 = vmatpush2.bf16.xpose.msra.mxu0 0
        %1249 = vmatprep.subr.bf16.mxu0 0
        %1250 = vmatpush2.bf16.xpose.msra.mxu0 0
        %1251 = vmatprep.subr.bf16.mxu0 0
        %1252 = vmatpush2.bf16.xpose.msra.mxu0 0
        %1253 = vmatprep.subr.bf16.mxu0 0
        %1254 = vmatpush2.bf16.xpose.msra.mxu0 0
        %1255 = vmatprep.subr.bf16.mxu0 0
        %1256 = vmatpush2.bf16.xpose.msra.mxu0 0
        %1257 = vmatprep.mubr.bf16.mxu0 0
        %1258 = vmatmul.mubr.bf16.gmra.mxu0 %v1220
        %v1259 = vpop.f32.mrf.mxu0
        %v1260 = vadd.f32 0.0, %v1259
        %v1261 = vpop.f32.mrf.mxu0
        %v1262 = vpop.f32.mrf.mxu0
        %v1263 = vpop.f32.mrf.mxu0
        %1264 = vdwg.mxu0
        %v1266 = vsel %vm856, %v1118, 0
        %v1269 = vsel %vm856, %v1122, 0
        %1271 = vmatprep.subr.bf16.mxu0 0
        %1272 = vmatpush1.bf16.xpose.msra.mxu0 0
        %1273 = vmatprep.subr.bf16.mxu0 0
        %1274 = vmatpush1.bf16.xpose.msra.mxu0 0
        %1275 = vmatprep.subr.bf16.mxu0 0
        %1276 = vmatpush1.bf16.xpose.msra.mxu0 0
        %1277 = vmatprep.subr.bf16.mxu0 0
        %1278 = vmatpush1.bf16.xpose.msra.mxu0 0
        %1279 = vmatprep.subr.bf16.mxu0 0
        %1280 = vmatpush1.bf16.xpose.msra.mxu0 0
        %1281 = vmatprep.subr.bf16.mxu0 0
        %1282 = vmatpush1.bf16.xpose.msra.mxu0 0
        %1283 = vmatprep.subr.bf16.mxu0 0
        %1284 = vmatpush1.bf16.xpose.msra.mxu0 0
        %1285 = vmatprep.subr.bf16.mxu0 0
        %1286 = vmatpush1.bf16.xpose.msra.mxu0 %v1269
        %1287 = vmatprep.subr.bf16.mxu0 0
        %1288 = vmatpush2.bf16.xpose.msra.mxu0 0
        %1289 = vmatprep.subr.bf16.mxu0 0
        %1290 = vmatpush2.bf16.xpose.msra.mxu0 0
        %1291 = vmatprep.subr.bf16.mxu0 0
        %1292 = vmatpush2.bf16.xpose.msra.mxu0 0
        %1293 = vmatprep.subr.bf16.mxu0 0
        %1294 = vmatpush2.bf16.xpose.msra.mxu0 0
        %1295 = vmatprep.subr.bf16.mxu0 0
        %1296 = vmatpush2.bf16.xpose.msra.mxu0 0
        %1297 = vmatprep.subr.bf16.mxu0 0
        %1298 = vmatpush2.bf16.xpose.msra.mxu0 0
        %1299 = vmatprep.subr.bf16.mxu0 0
        %1300 = vmatpush2.bf16.xpose.msra.mxu0 0
        %1301 = vmatprep.subr.bf16.mxu0 0
        %1302 = vmatpush2.bf16.xpose.msra.mxu0 0
        %1303 = vmatprep.mubr.bf16.mxu0 0
        %1304 = vmatmul.mubr.bf16.gmra.mxu0 %v1266
        %v1305 = vpop.f32.mrf.mxu0
        %v1306 = vadd.f32 0.0, %v1305
        %v1307 = vpop.f32.mrf.mxu0
        %v1308 = vpop.f32.mrf.mxu0
        %v1309 = vpop.f32.mrf.mxu0
        %1310 = vdwg.mxu0
        %vm1311 = vcmask 64512
        %v1312 = vsel %vm1311, %v1168, -inf
        %1313 = vmax.xlane.f32.xlu0 %v1312
        %v1314 = vpop.xlane.xlu0 %1313
        %v1315 = vsel %vm1311, %v1214, -inf
        %1316 = vmax.xlane.f32.xlu0 %v1315
        %v1317 = vpop.xlane.xlu0 %1316
        %v1318 = vsel %vm1311, %v1260, -inf
        %1319 = vmax.xlane.f32.xlu0 %v1318
        %v1320 = vpop.xlane.xlu0 %1319
        %v1321 = vsel %vm1311, %v1306, -inf
        %1322 = vmax.xlane.f32.xlu0 %v1321
        %v1323 = vpop.xlane.xlu0 %1322
        %v1324 = vsub.f32 %v1168, %v1314
        %v1325 = vsub.f32 %v1214, %v1317
        %v1326 = vsub.f32 %v1260, %v1320
        %v1327 = vsub.f32 %v1306, %v1323
        %v1328 = vmul.f32 %v1324, 1.442695
        %v1329 = vpow.pop %v1328
        %v1330 = vmul.f32 %v1325, 1.442695
        %v1331 = vpow.pop %v1330
        %v1332 = vmul.f32 %v1326, 1.442695
        %v1333 = vpow.pop %v1332
        %v1334 = vmul.f32 %v1327, 1.442695
        %v1335 = vpow.pop %v1334
        %v1336 = vsel %vm1311, %v1329, 0.0
        %1337 = vadd.xlane.f32.xlu0 %v1336
        %v1338 = vpop.xlane.xlu0 %1337
        %v1339 = vsel %vm1311, %v1331, 0.0
        %1340 = vadd.xlane.f32.xlu0 %v1339
        %v1341 = vpop.xlane.xlu0 %1340
        %v1342 = vsel %vm1311, %v1333, 0.0
        %1343 = vadd.xlane.f32.xlu0 %v1342
        %v1344 = vpop.xlane.xlu0 %1343
        %v1345 = vsel %vm1311, %v1335, 0.0
        %1346 = vadd.xlane.f32.xlu0 %v1345
        %v1347 = vpop.xlane.xlu0 %1346
        %v1348 = vrcp.pop %v1338
        %v1349 = vrcp.pop %v1341
        %v1350 = vrcp.pop %v1344
        %v1351 = vrcp.pop %v1347
        %v1352 = vmul.f32 %v1329, %v1348
        %v1353 = vmul.f32 %v1331, %v1349
        %v1354 = vmul.f32 %v1333, %v1350
        %v1355 = vmul.f32 %v1335, %v1351
        %v1356 = vpack.c.bf16 %v1352, %v1352
        %v1357 = vpack.c.bf16 %v1353, %v1353
        %v1358 = vpack.c.bf16 %v1354, %v1354
        %v1359 = vpack.c.bf16 %v1355, %v1355
        %v1361 = vsel %vm1311, %v1356, 0
        %vm1363 = vcmask 1043456
        %v1365 = vsel %vm1363, %v1123, 0
        %1367 = vmatprep.subr.bf16.mxu0 0
        %1368 = vmatpush1.bf16.msra.mxu0 0
        %1369 = vmatprep.subr.bf16.mxu0 0
        %1370 = vmatpush1.bf16.msra.mxu0 0
        %1371 = vmatprep.subr.bf16.mxu0 0
        %1372 = vmatpush1.bf16.msra.mxu0 0
        %1373 = vmatprep.subr.bf16.mxu0 0
        %1374 = vmatpush1.bf16.msra.mxu0 0
        %1375 = vmatprep.subr.bf16.mxu0 0
        %1376 = vmatpush1.bf16.msra.mxu0 0
        %1377 = vmatprep.subr.bf16.mxu0 0
        %1378 = vmatpush1.bf16.msra.mxu0 0
        %1379 = vmatprep.subr.bf16.mxu0 0
        %1380 = vmatpush1.bf16.msra.mxu0 0
        %1381 = vmatprep.subr.bf16.mxu0 0
        %1382 = vmatpush1.bf16.msra.mxu0 %v1365
        %1383 = vmatprep.subr.bf16.mxu0 0
        %1384 = vmatpush2.bf16.msra.mxu0 0
        %1385 = vmatprep.subr.bf16.mxu0 0
        %1386 = vmatpush2.bf16.msra.mxu0 0
        %1387 = vmatprep.subr.bf16.mxu0 0
        %1388 = vmatpush2.bf16.msra.mxu0 0
        %1389 = vmatprep.subr.bf16.mxu0 0
        %1390 = vmatpush2.bf16.msra.mxu0 0
        %1391 = vmatprep.subr.bf16.mxu0 0
        %1392 = vmatpush2.bf16.msra.mxu0 0
        %1393 = vmatprep.subr.bf16.mxu0 0
        %1394 = vmatpush2.bf16.msra.mxu0 0
        %1395 = vmatprep.subr.bf16.mxu0 0
        %1396 = vmatpush2.bf16.msra.mxu0 0
        %1397 = vmatprep.subr.bf16.mxu0 0
        %1398 = vmatpush2.bf16.msra.mxu0 0
        %1399 = vmatprep.mubr.bf16.mxu0 0
        %1400 = vmatmul.mubr.bf16.gmra.mxu0 %v1361
        %v1401 = vpop.f32.mrf.mxu0
        %v1402 = vadd.f32 0.0, %v1401
        %v1403 = vpop.f32.mrf.mxu0
        %v1404 = vpop.f32.mrf.mxu0
        %v1405 = vpop.f32.mrf.mxu0
        %1406 = vdwg.mxu0
        %v1408 = vsel %vm1311, %v1357, 0
        %v1411 = vsel %vm1363, %v1124, 0
        %1413 = vmatprep.subr.bf16.mxu0 0
        %1414 = vmatpush1.bf16.msra.mxu0 0
        %1415 = vmatprep.subr.bf16.mxu0 0
        %1416 = vmatpush1.bf16.msra.mxu0 0
        %1417 = vmatprep.subr.bf16.mxu0 0
        %1418 = vmatpush1.bf16.msra.mxu0 0
        %1419 = vmatprep.subr.bf16.mxu0 0
        %1420 = vmatpush1.bf16.msra.mxu0 0
        %1421 = vmatprep.subr.bf16.mxu0 0
        %1422 = vmatpush1.bf16.msra.mxu0 0
        %1423 = vmatprep.subr.bf16.mxu0 0
        %1424 = vmatpush1.bf16.msra.mxu0 0
        %1425 = vmatprep.subr.bf16.mxu0 0
        %1426 = vmatpush1.bf16.msra.mxu0 0
        %1427 = vmatprep.subr.bf16.mxu0 0
        %1428 = vmatpush1.bf16.msra.mxu0 %v1411
        %1429 = vmatprep.subr.bf16.mxu0 0
        %1430 = vmatpush2.bf16.msra.mxu0 0
        %1431 = vmatprep.subr.bf16.mxu0 0
        %1432 = vmatpush2.bf16.msra.mxu0 0
        %1433 = vmatprep.subr.bf16.mxu0 0
        %1434 = vmatpush2.bf16.msra.mxu0 0
        %1435 = vmatprep.subr.bf16.mxu0 0
        %1436 = vmatpush2.bf16.msra.mxu0 0
        %1437 = vmatprep.subr.bf16.mxu0 0
        %1438 = vmatpush2.bf16.msra.mxu0 0
        %1439 = vmatprep.subr.bf16.mxu0 0
        %1440 = vmatpush2.bf16.msra.mxu0 0
        %1441 = vmatprep.subr.bf16.mxu0 0
        %1442 = vmatpush2.bf16.msra.mxu0 0
        %1443 = vmatprep.subr.bf16.mxu0 0
        %1444 = vmatpush2.bf16.msra.mxu0 0
        %1445 = vmatprep.mubr.bf16.mxu0 0
        %1446 = vmatmul.mubr.bf16.gmra.mxu0 %v1408
        %v1447 = vpop.f32.mrf.mxu0
        %v1448 = vadd.f32 0.0, %v1447
        %v1449 = vpop.f32.mrf.mxu0
        %v1450 = vpop.f32.mrf.mxu0
        %v1451 = vpop.f32.mrf.mxu0
        %1452 = vdwg.mxu0
        %v1454 = vsel %vm1311, %v1358, 0
        %v1457 = vsel %vm1363, %v1125, 0
        %1459 = vmatprep.subr.bf16.mxu0 0
        %1460 = vmatpush1.bf16.msra.mxu0 0
        %1461 = vmatprep.subr.bf16.mxu0 0
        %1462 = vmatpush1.bf16.msra.mxu0 0
        %1463 = vmatprep.subr.bf16.mxu0 0
        %1464 = vmatpush1.bf16.msra.mxu0 0
        %1465 = vmatprep.subr.bf16.mxu0 0
        %1466 = vmatpush1.bf16.msra.mxu0 0
        %1467 = vmatprep.subr.bf16.mxu0 0
        %1468 = vmatpush1.bf16.msra.mxu0 0
        %1469 = vmatprep.subr.bf16.mxu0 0
        %1470 = vmatpush1.bf16.msra.mxu0 0
        %1471 = vmatprep.subr.bf16.mxu0 0
        %1472 = vmatpush1.bf16.msra.mxu0 0
        %1473 = vmatprep.subr.bf16.mxu0 0
        %1474 = vmatpush1.bf16.msra.mxu0 %v1457
        %1475 = vmatprep.subr.bf16.mxu0 0
        %1476 = vmatpush2.bf16.msra.mxu0 0
        %1477 = vmatprep.subr.bf16.mxu0 0
        %1478 = vmatpush2.bf16.msra.mxu0 0
        %1479 = vmatprep.subr.bf16.mxu0 0
        %1480 = vmatpush2.bf16.msra.mxu0 0
        %1481 = vmatprep.subr.bf16.mxu0 0
        %1482 = vmatpush2.bf16.msra.mxu0 0
        %1483 = vmatprep.subr.bf16.mxu0 0
        %1484 = vmatpush2.bf16.msra.mxu0 0
        %1485 = vmatprep.subr.bf16.mxu0 0
        %1486 = vmatpush2.bf16.msra.mxu0 0
        %1487 = vmatprep.subr.bf16.mxu0 0
        %1488 = vmatpush2.bf16.msra.mxu0 0
        %1489 = vmatprep.subr.bf16.mxu0 0
        %1490 = vmatpush2.bf16.msra.mxu0 0
        %1491 = vmatprep.mubr.bf16.mxu0 0
        %1492 = vmatmul.mubr.bf16.gmra.mxu0 %v1454
        %v1493 = vpop.f32.mrf.mxu0
        %v1494 = vadd.f32 0.0, %v1493
        %v1495 = vpop.f32.mrf.mxu0
        %v1496 = vpop.f32.mrf.mxu0
        %v1497 = vpop.f32.mrf.mxu0
        %1498 = vdwg.mxu0
        %v1500 = vsel %vm1311, %v1359, 0
        %v1503 = vsel %vm1363, %v1126, 0
        %1505 = vmatprep.subr.bf16.mxu0 0
        %1506 = vmatpush1.bf16.msra.mxu0 0
        %1507 = vmatprep.subr.bf16.mxu0 0
        %1508 = vmatpush1.bf16.msra.mxu0 0
        %1509 = vmatprep.subr.bf16.mxu0 0
        %1510 = vmatpush1.bf16.msra.mxu0 0
        %1511 = vmatprep.subr.bf16.mxu0 0
        %1512 = vmatpush1.bf16.msra.mxu0 0
        %1513 = vmatprep.subr.bf16.mxu0 0
        %1514 = vmatpush1.bf16.msra.mxu0 0
        %1515 = vmatprep.subr.bf16.mxu0 0
        %1516 = vmatpush1.bf16.msra.mxu0 0
        %1517 = vmatprep.subr.bf16.mxu0 0
        %1518 = vmatpush1.bf16.msra.mxu0 0
        %1519 = vmatprep.subr.bf16.mxu0 0
        %1520 = vmatpush1.bf16.msra.mxu0 %v1503
        %1521 = vmatprep.subr.bf16.mxu0 0
        %1522 = vmatpush2.bf16.msra.mxu0 0
        %1523 = vmatprep.subr.bf16.mxu0 0
        %1524 = vmatpush2.bf16.msra.mxu0 0
        %1525 = vmatprep.subr.bf16.mxu0 0
        %1526 = vmatpush2.bf16.msra.mxu0 0
        %1527 = vmatprep.subr.bf16.mxu0 0
        %1528 = vmatpush2.bf16.msra.mxu0 0
        %1529 = vmatprep.subr.bf16.mxu0 0
        %1530 = vmatpush2.bf16.msra.mxu0 0
        %1531 = vmatprep.subr.bf16.mxu0 0
        %1532 = vmatpush2.bf16.msra.mxu0 0
        %1533 = vmatprep.subr.bf16.mxu0 0
        %1534 = vmatpush2.bf16.msra.mxu0 0
        %1535 = vmatprep.subr.bf16.mxu0 0
        %1536 = vmatpush2.bf16.msra.mxu0 0
        %1537 = vmatprep.mubr.bf16.mxu0 0
        %1538 = vmatmul.mubr.bf16.gmra.mxu0 %v1500
        %v1539 = vpop.f32.mrf.mxu0
        %v1540 = vadd.f32 0.0, %v1539
        %v1541 = vpop.f32.mrf.mxu0
        %v1542 = vpop.f32.mrf.mxu0
        %v1543 = vpop.f32.mrf.mxu0
        %1544 = vdwg.mxu0
        %v1545 = vpack.c.bf16 %v1448, %v1402
        %v1546 = vpack.c.bf16 %v1540, %v1494
        %v1549 = vunpack.c.l.b16 %v839
        %v1550 = vunpack.c.l.b16 %v840
        %v1551 = vpack.c.b16 %v1550, %v1549
        %v1554 = vsel %vm856, %v1545, 0
        %v1557 = vsel %vm856, %v1546, 0
        %1559 = vmatprep.subr.bf16.mxu0 0
        %1560 = vmatpush1.bf16.msra.mxu0 0
        %1561 = vmatprep.subr.bf16.mxu0 0
        %1562 = vmatpush1.bf16.msra.mxu0 0
        %1563 = vmatprep.subr.bf16.mxu0 0
        %1564 = vmatpush1.bf16.msra.mxu0 0
        %1565 = vmatprep.subr.bf16.mxu0 0
        %1566 = vmatpush1.bf16.msra.mxu0 0
        %1567 = vmatprep.subr.bf16.mxu0 0
        %1568 = vmatpush1.bf16.msra.mxu0 0
        %1569 = vmatprep.subr.bf16.mxu0 0
        %1570 = vmatpush1.bf16.msra.mxu0 0
        %1571 = vmatprep.subr.bf16.mxu0 0
        %1572 = vmatpush1.bf16.msra.mxu0 0
        %1573 = vmatprep.subr.bf16.mxu0 0
        %1574 = vmatpush1.bf16.msra.mxu0 %v1551
        %1575 = vmatprep.subr.bf16.mxu0 0
        %1576 = vmatpush2.bf16.msra.mxu0 0
        %1577 = vmatprep.subr.bf16.mxu0 0
        %1578 = vmatpush2.bf16.msra.mxu0 0
        %1579 = vmatprep.subr.bf16.mxu0 0
        %1580 = vmatpush2.bf16.msra.mxu0 0
        %1581 = vmatprep.subr.bf16.mxu0 0
        %1582 = vmatpush2.bf16.msra.mxu0 0
        %1583 = vmatprep.subr.bf16.mxu0 0
        %1584 = vmatpush2.bf16.msra.mxu0 0
        %1585 = vmatprep.subr.bf16.mxu0 0
        %1586 = vmatpush2.bf16.msra.mxu0 0
        %1587 = vmatprep.subr.bf16.mxu0 0
        %1588 = vmatpush2.bf16.msra.mxu0 0
        %1589 = vmatprep.subr.bf16.mxu0 0
        %1590 = vmatpush2.bf16.msra.mxu0 0
        %1591 = vmatprep.mubr.bf16.mxu0 0
        %1592 = vmatmul.mubr.bf16.gmra.mxu0 %v1554
        %v1593 = vpop.f32.mrf.mxu0
        %v1594 = vadd.f32 0.0, %v1593
        %v1595 = vpop.f32.mrf.mxu0
        %v1596 = vpop.f32.mrf.mxu0
        %v1597 = vadd.f32 0.0, %v1596
        %v1598 = vpop.f32.mrf.mxu0
        %1599 = vmatprep.mubr.bf16.mxu0 0
        %1600 = vmatmul.mubr.bf16.gmra.mxu0 %v1557
        %v1601 = vpop.f32.mrf.mxu0
        %v1602 = vadd.f32 0.0, %v1601
        %v1603 = vpop.f32.mrf.mxu0
        %v1604 = vpop.f32.mrf.mxu0
        %v1605 = vadd.f32 0.0, %v1604
        %v1606 = vpop.f32.mrf.mxu0
        %1607 = vdwg.mxu0
        %v1608 = vadd.f32 %v815, %v1594
        %v1609 = vadd.f32 %v818, %v1597
        %v1610 = vadd.f32 %v823, %v1602
        %v1611 = vadd.f32 %v826, %v1605
        %v1613 = vlaneseq
        %v1614 = vshrl.u32 %v1613, 7
        %v1615 = vsub.s32 0, %v1614
        %v1616 = vrot.slane %v841, %v1615
        %v1618 = vadd.f32 %v1608, %v1616
        %v1619 = vadd.f32 %v1609, %v1616
        %v1620 = vadd.f32 %v1610, %v1616
        %v1621 = vadd.f32 %v1611, %v1616
        %v1622 = vsel %vm856, %v1618, 0.0
        %1623 = vadd.xlane.f32.xlu0 %v1622
        %v1624 = vpop.xlane.xlu0 %1623
        %v1625 = vsel %vm856, %v1619, 0.0
        %1626 = vadd.xlane.f32.xlu0 %v1625
        %v1627 = vpop.xlane.xlu0 %1626
        %v1628 = vsel %vm856, %v1620, 0.0
        %1629 = vadd.xlane.f32.xlu0 %v1628
        %v1630 = vpop.xlane.xlu0 %1629
        %v1631 = vsel %vm856, %v1621, 0.0
        %1632 = vadd.xlane.f32.xlu0 %v1631
        %v1633 = vpop.xlane.xlu0 %1632
        %v1634 = vmul.f32 %v1624, %v869
        %v1635 = vmul.f32 %v1627, %v869
        %v1636 = vmul.f32 %v1630, %v869
        %v1637 = vmul.f32 %v1633, %v869
        %v1638 = vsub.f32 %v1618, %v1634
        %v1639 = vsub.f32 %v1619, %v1635
        %v1640 = vsub.f32 %v1620, %v1636
        %v1641 = vsub.f32 %v1621, %v1637
        %v1642 = vmul.f32 %v1638, %v1638
        %v1643 = vmul.f32 %v1639, %v1639
        %v1644 = vmul.f32 %v1640, %v1640
        %v1645 = vmul.f32 %v1641, %v1641
        %v1646 = vsel %vm856, %v1642, 0.0
        %1647 = vadd.xlane.f32.xlu0 %v1646
        %v1648 = vpop.xlane.xlu0 %1647
        %v1649 = vsel %vm856, %v1643, 0.0
        %1650 = vadd.xlane.f32.xlu0 %v1649
        %v1651 = vpop.xlane.xlu0 %1650
        %v1652 = vsel %vm856, %v1644, 0.0
        %1653 = vadd.xlane.f32.xlu0 %v1652
        %v1654 = vpop.xlane.xlu0 %1653
        %v1655 = vsel %vm856, %v1645, 0.0
        %1656 = vadd.xlane.f32.xlu0 %v1655
        %v1657 = vpop.xlane.xlu0 %1656
        %v1658 = vmul.f32 %v1648, %v869
        %v1659 = vmul.f32 %v1651, %v869
        %v1660 = vmul.f32 %v1654, %v869
        %v1661 = vmul.f32 %v1657, %v869
        %v1662 = vadd.f32 %v1658, 1e-05
        %v1663 = vadd.f32 %v1659, 1e-05
        %v1664 = vadd.f32 %v1660, 1e-05
        %v1665 = vadd.f32 %v1661, 1e-05
        %v1666 = vrsqrt.pop %v1662
        %v1667 = vrsqrt.pop %v1663
        %v1668 = vrsqrt.pop %v1664
        %v1669 = vrsqrt.pop %v1665
        %v1670 = vmul.f32 %v1638, %v1666
        %v1671 = vmul.f32 %v1639, %v1667
        %v1672 = vmul.f32 %v1640, %v1668
        %v1673 = vmul.f32 %v1641, %v1669
        %v1675 = vlaneseq
        %v1676 = vshrl.u32 %v1675, 7
        %v1677 = vsub.s32 0, %v1676
        %v1678 = vrot.slane %v842, %v1677
        %v1680 = vmul.f32 %v1670, %v1678
        %v1681 = vmul.f32 %v1671, %v1678
        %v1682 = vmul.f32 %v1672, %v1678
        %v1683 = vmul.f32 %v1673, %v1678
        %v1685 = vlaneseq
        %v1686 = vshrl.u32 %v1685, 7
        %v1687 = vsub.s32 0, %v1686
        %v1688 = vrot.slane %v843, %v1687
        %v1690 = vadd.f32 %v1680, %v1688
        %v1691 = vadd.f32 %v1681, %v1688
        %v1692 = vadd.f32 %v1682, %v1688
        %v1693 = vadd.f32 %v1683, %v1688
        %v1694 = vpack.c.bf16 %v1691, %v1690
        %v1695 = vpack.c.bf16 %v1693, %v1692
        %v1697 = vlaneseq
        %v1698 = vshrl.u32 %v1697, 7
        %v1699 = vsub.s32 0, %v1698
        %v1700 = vrot.slane %v846, %v1699
        %v1704 = vunpack.c.l.b16 %v844
        %v1705 = vunpack.c.l.b16 %v845
        %v1706 = vpack.c.b16 %v1705, %v1704
        %v1709 = vsel %vm856, %v1694, 0
        %v1712 = vsel %vm856, %v1695, 0
        %1714 = vmatprep.subr.bf16.mxu0 0
        %1715 = vmatpush1.bf16.msra.mxu0 0
        %1716 = vmatprep.subr.bf16.mxu0 0
        %1717 = vmatpush1.bf16.msra.mxu0 0
        %1718 = vmatprep.subr.bf16.mxu0 0
        %1719 = vmatpush1.bf16.msra.mxu0 0
        %1720 = vmatprep.subr.bf16.mxu0 0
        %1721 = vmatpush1.bf16.msra.mxu0 0
        %1722 = vmatprep.subr.bf16.mxu0 0
        %1723 = vmatpush1.bf16.msra.mxu0 0
        %1724 = vmatprep.subr.bf16.mxu0 0
        %1725 = vmatpush1.bf16.msra.mxu0 0
        %1726 = vmatprep.subr.bf16.mxu0 0
        %1727 = vmatpush1.bf16.msra.mxu0 0
        %1728 = vmatprep.subr.bf16.mxu0 0
        %1729 = vmatpush1.bf16.msra.mxu0 %v1706
        %1730 = vmatprep.subr.bf16.mxu0 0
        %1731 = vmatpush2.bf16.msra.mxu0 0
        %1732 = vmatprep.subr.bf16.mxu0 0
        %1733 = vmatpush2.bf16.msra.mxu0 0
        %1734 = vmatprep.subr.bf16.mxu0 0
        %1735 = vmatpush2.bf16.msra.mxu0 0
        %1736 = vmatprep.subr.bf16.mxu0 0
        %1737 = vmatpush2.bf16.msra.mxu0 0
        %1738 = vmatprep.subr.bf16.mxu0 0
        %1739 = vmatpush2.bf16.msra.mxu0 0
        %1740 = vmatprep.subr.bf16.mxu0 0
        %1741 = vmatpush2.bf16.msra.mxu0 0
        %1742 = vmatprep.subr.bf16.mxu0 0
        %1743 = vmatpush2.bf16.msra.mxu0 0
        %1744 = vmatprep.subr.bf16.mxu0 0
        %1745 = vmatpush2.bf16.msra.mxu0 0
        %1746 = vmatprep.mubr.bf16.mxu0 0
        %1747 = vmatmul.mubr.bf16.gmra.mxu0 %v1709
        %v1748 = vpop.f32.mrf.mxu0
        %v1749 = vadd.f32 %v1700, %v1748
        %v1750 = vpop.f32.mrf.mxu0
        %v1751 = vpop.f32.mrf.mxu0
        %v1752 = vadd.f32 %v1700, %v1751
        %v1753 = vpop.f32.mrf.mxu0
        %1754 = vmatprep.mubr.bf16.mxu0 0
        %1755 = vmatmul.mubr.bf16.gmra.mxu0 %v1712
        %v1756 = vpop.f32.mrf.mxu0
        %v1757 = vadd.f32 %v1700, %v1756
        %v1758 = vpop.f32.mrf.mxu0
        %v1759 = vpop.f32.mrf.mxu0
        %v1760 = vadd.f32 %v1700, %v1759
        %v1761 = vpop.f32.mrf.mxu0
        %1762 = vdwg.mxu0
        %v1763 = vmul.f32 %v1749, 0.5
        %v1764 = vmul.f32 %v1752, 0.5
        %v1765 = vmul.f32 %v1757, 0.5
        %v1766 = vmul.f32 %v1760, 0.5
        %v1767 = vmul.f32 %v1749, 0.044715
        %v1768 = vmul.f32 %v1752, 0.044715
        %v1769 = vmul.f32 %v1757, 0.044715
        %v1770 = vmul.f32 %v1760, 0.044715
        %v1771 = vmul.f32 %v1767, %v1749
        %v1772 = vmul.f32 %v1768, %v1752
        %v1773 = vmul.f32 %v1769, %v1757
        %v1774 = vmul.f32 %v1770, %v1760
        %v1775 = vmul.f32 %v1771, %v1749
        %v1776 = vmul.f32 %v1772, %v1752
        %v1777 = vmul.f32 %v1773, %v1757
        %v1778 = vmul.f32 %v1774, %v1760
        %v1779 = vadd.f32 %v1749, %v1775
        %v1780 = vadd.f32 %v1752, %v1776
        %v1781 = vadd.f32 %v1757, %v1777
        %v1782 = vadd.f32 %v1760, %v1778
        %v1783 = vmul.f32 %v1779, 0.7978846
        %v1784 = vmul.f32 %v1780, 0.7978846
        %v1785 = vmul.f32 %v1781, 0.7978846
        %v1786 = vmul.f32 %v1782, 0.7978846
        %v1787 = vtanh.pop %v1783
        %v1788 = vtanh.pop %v1784
        %v1789 = vtanh.pop %v1785
        %v1790 = vtanh.pop %v1786
        %v1791 = vadd.f32 %v1787, 1.0
        %v1792 = vadd.f32 %v1788, 1.0
        %v1793 = vadd.f32 %v1789, 1.0
        %v1794 = vadd.f32 %v1790, 1.0
        %v1795 = vmul.f32 %v1763, %v1791
        %v1796 = vmul.f32 %v1764, %v1792
        %v1797 = vmul.f32 %v1765, %v1793
        %v1798 = vmul.f32 %v1766, %v1794
        %v1799 = vpack.c.bf16 %v1796, %v1795
        %v1800 = vpack.c.bf16 %v1798, %v1797
        %v1802 = vlaneseq
        %v1803 = vshrl.u32 %v1802, 7
        %v1804 = vsub.s32 0, %v1803
        %v1805 = vrot.slane %v855, %v1804
        %v1815 = vunpack.c.l.b16 %v847
        %v1816 = vunpack.c.l.b16 %v848
        %v1817 = vunpack.c.l.b16 %v849
        %v1818 = vunpack.c.l.b16 %v850
        %v1819 = vunpack.c.l.b16 %v851
        %v1820 = vunpack.c.l.b16 %v852
        %v1821 = vunpack.c.l.b16 %v853
        %v1822 = vunpack.c.l.b16 %v854
        %v1823 = vpack.c.b16 %v1816, %v1815
        %v1824 = vpack.c.b16 %v1818, %v1817
        %v1825 = vpack.c.b16 %v1820, %v1819
        %v1826 = vpack.c.b16 %v1822, %v1821
        %vm1831 = vcmask 523264
        %v1833 = vsel %vm1831, %v1799, 0
        %v1836 = vsel %vm1831, %v1800, 0
        %1838 = vmatprep.subr.bf16.mxu0 0
        %1839 = vmatpush1.bf16.msra.mxu0 0
        %1840 = vmatprep.subr.bf16.mxu0 0
        %1841 = vmatpush1.bf16.msra.mxu0 0
        %1842 = vmatprep.subr.bf16.mxu0 0
        %1843 = vmatpush1.bf16.msra.mxu0 0
        %1844 = vmatprep.subr.bf16.mxu0 0
        %1845 = vmatpush1.bf16.msra.mxu0 0
        %1846 = vmatprep.subr.bf16.mxu0 0
        %1847 = vmatpush1.bf16.msra.mxu0 %v1826
        %1848 = vmatprep.subr.bf16.mxu0 0
        %1849 = vmatpush1.bf16.msra.mxu0 %v1825
        %1850 = vmatprep.subr.bf16.mxu0 0
        %1851 = vmatpush1.bf16.msra.mxu0 %v1824
        %1852 = vmatprep.subr.bf16.mxu0 0
        %1853 = vmatpush1.bf16.msra.mxu0 %v1823
        %1854 = vmatprep.subr.bf16.mxu0 0
        %1855 = vmatpush2.bf16.msra.mxu0 0
        %1856 = vmatprep.subr.bf16.mxu0 0
        %1857 = vmatpush2.bf16.msra.mxu0 0
        %1858 = vmatprep.subr.bf16.mxu0 0
        %1859 = vmatpush2.bf16.msra.mxu0 0
        %1860 = vmatprep.subr.bf16.mxu0 0
        %1861 = vmatpush2.bf16.msra.mxu0 0
        %1862 = vmatprep.subr.bf16.mxu0 0
        %1863 = vmatpush2.bf16.msra.mxu0 0
        %1864 = vmatprep.subr.bf16.mxu0 0
        %1865 = vmatpush2.bf16.msra.mxu0 0
        %1866 = vmatprep.subr.bf16.mxu0 0
        %1867 = vmatpush2.bf16.msra.mxu0 0
        %1868 = vmatprep.subr.bf16.mxu0 0
        %1869 = vmatpush2.bf16.msra.mxu0 0
        %1870 = vmatprep.mubr.bf16.mxu0 0
        %1871 = vmatmul.mubr.bf16.gmra.mxu0 %v1833
        %v1872 = vpop.f32.mrf.mxu0
        %v1873 = vadd.f32 %v1805, %v1872
        %v1874 = vpop.f32.mrf.mxu0
        %v1875 = vpop.f32.mrf.mxu0
        %v1876 = vadd.f32 %v1805, %v1875
        %v1877 = vpop.f32.mrf.mxu0
        %1878 = vmatprep.mubr.bf16.mxu0 0
        %1879 = vmatmul.mubr.bf16.gmra.mxu0 %v1836
        %v1880 = vpop.f32.mrf.mxu0
        %v1881 = vadd.f32 %v1805, %v1880
        %v1882 = vpop.f32.mrf.mxu0
        %v1883 = vpop.f32.mrf.mxu0
        %v1884 = vadd.f32 %v1805, %v1883
        %v1885 = vpop.f32.mrf.mxu0
        %1886 = vdwg.mxu0
        %v1887 = vadd.f32 %v1618, %v1873
        %v1888 = vadd.f32 %v1619, %v1876
        %v1889 = vadd.f32 %v1620, %v1881
        %v1890 = vadd.f32 %v1621, %v1884
        %v1891 = vlaneseq
        %v1892 = vshrl.u32 %v1891, 7
        %v1893 = vlaneseq
        %v1894 = vand.u32 %v1893, 127
        %v1895 = vmul.u32 %v1892, 8
        %vm1896 = vcmp.ge.s32.totalorder %v1894, %v1895
        %v1897 = vadd.s32 %v1895, 8
        %vm1898 = vcmp.lt.s32.totalorder %v1894, %v1897
        %vm1899 = vmand %vm1896, %vm1898
        %v1900 = vsel %vm1899, 0.125, 0.0
        %v1902 = vsel %vm675, %v1900, 0
        %1904 = vmatprep.subr.mxu0 0.0
        %1905 = vmatpush1.msra.mxu0 0.0
        %1906 = vmatprep.subr.mxu0 0.0
        %1907 = vmatpush1.msra.mxu0 0.0
        %1908 = vmatprep.subr.mxu0 0.0
        %1909 = vmatpush1.msra.mxu0 0.0
        %1910 = vmatprep.subr.mxu0 0.0
        %1911 = vmatpush1.msra.mxu0 0.0
        %1912 = vmatprep.subr.mxu0 0.0
        %1913 = vmatpush1.msra.mxu0 0.0
        %1914 = vmatprep.subr.mxu0 0.0
        %1915 = vmatpush1.msra.mxu0 0.0
        %1916 = vmatprep.subr.mxu0 0.0
        %1917 = vmatpush1.msra.mxu0 0.0
        %1918 = vmatprep.subr.mxu0 0.0
        %1919 = vmatpush1.msra.mxu0 0.0
        %1920 = vmatprep.subr.mxu0 0.0
        %1921 = vmatpush1.msra.mxu0 0.0
        %1922 = vmatprep.subr.mxu0 0.0
        %1923 = vmatpush1.msra.mxu0 0.0
        %1924 = vmatprep.subr.mxu0 0.0
        %1925 = vmatpush1.msra.mxu0 0.0
        %1926 = vmatprep.subr.mxu0 0.0
        %1927 = vmatpush1.msra.mxu0 0.0
        %1928 = vmatprep.subr.mxu0 0.0
        %1929 = vmatpush1.msra.mxu0 %v1890
        %1930 = vmatprep.subr.mxu0 0.0
        %1931 = vmatpush1.msra.mxu0 %v1889
        %1932 = vmatprep.subr.mxu0 0.0
        %1933 = vmatpush1.msra.mxu0 %v1888
        %1934 = vmatprep.subr.mxu0 0.0
        %1935 = vmatpush1.msra.mxu0 %v1887
        %1936 = vmatprep.subr.mxu0 0.0
        %1937 = vmatpush2.msra.mxu0 0.0
        %1938 = vmatprep.subr.mxu0 0.0
        %1939 = vmatpush2.msra.mxu0 0.0
        %1940 = vmatprep.subr.mxu0 0.0
        %1941 = vmatpush2.msra.mxu0 0.0
        %1942 = vmatprep.subr.mxu0 0.0
        %1943 = vmatpush2.msra.mxu0 0.0
        %1944 = vmatprep.subr.mxu0 0.0
        %1945 = vmatpush2.msra.mxu0 0.0
        %1946 = vmatprep.subr.mxu0 0.0
        %1947 = vmatpush2.msra.mxu0 0.0
        %1948 = vmatprep.subr.mxu0 0.0
        %1949 = vmatpush2.msra.mxu0 0.0
        %1950 = vmatprep.subr.mxu0 0.0
        %1951 = vmatpush2.msra.mxu0 0.0
        %1952 = vmatprep.subr.mxu0 0.0
        %1953 = vmatpush2.msra.mxu0 0.0
        %1954 = vmatprep.subr.mxu0 0.0
        %1955 = vmatpush2.msra.mxu0 0.0
        %1956 = vmatprep.subr.mxu0 0.0
        %1957 = vmatpush2.msra.mxu0 0.0
        %1958 = vmatprep.subr.mxu0 0.0
        %1959 = vmatpush2.msra.mxu0 0.0
        %1960 = vmatprep.subr.mxu0 0.0
        %1961 = vmatpush2.msra.mxu0 0.0
        %1962 = vmatprep.subr.mxu0 0.0
        %1963 = vmatpush2.msra.mxu0 0.0
        %1964 = vmatprep.subr.mxu0 0.0
        %1965 = vmatpush2.msra.mxu0 0.0
        %1966 = vmatprep.subr.mxu0 0.0
        %1967 = vmatpush2.msra.mxu0 0.0
        %1968 = vmatprep.mubr.f32.mxu0 0.0
        %1969 = vmatmul.mubr.f32.gmra.mxu0 %v1902
        %v1970 = vpop.f32.mrf.mxu0
        %v1971 = vadd.f32 0.0, %v1970
        %v1972 = vpop.f32.mrf.mxu0
        %1973 = vdwg.mxu0
        %vm1974 = vcmask 125952
        %1975 = vst.msk [vmem:[%s667] sm:$0xf] %vm1974, %v1971
        %p1976 = scmp.lt.s32.totalorder %s33, 1
        %s1977 = scalar_select %p1976, %s33, 1
        %s1978 = smul.addr %s1977, 4
        %s1979 = scalar_lea.vmem %s20, %s1978
        // Predicated region
        $region113: #{tltr_forward.2} parent=99 // pred_check
          %p1980 = pneg %p476
        $region114: #{tltr_forward.2} parent=99 // pred_check_branch
          %1982 = sbr.rel (%p1980) target = $region116
        $region115: #{tltr_forward.2} parent=99 // pred_region
          _
        $region116: #{tltr_forward.2} parent=99 // pred_fallthru
          _
      $region100: #{tltr_forward.2} parent=5 // pred_fallthru
        _
      %p1983 = scmp.le.s32.totalorder 2, %s28
      // Predicated region
      $region117: #{tltr_forward.2} parent=5 // pred_check
        %p1984 = pneg %p1983
      $region118: #{tltr_forward.2} parent=5 // pred_check_branch
        %1986 = sbr.rel (%p1984) target = $region120
      $region119: #{tltr_forward.2} parent=5 // pred_region
        %s1987 = ssub.s32 %s28, 2
        // Predicated region
        $region121: #{tltr_forward.2} parent=119 // pred_check
          %p1988 = pneg %p482
        $region122: #{tltr_forward.2} parent=119 // pred_check_branch
          %1990 = sbr.rel (%p1988) target = $region124
        $region123: #{tltr_forward.2} parent=119 // pred_region
          %p1991 = scmp.lt.s32.totalorder %s34, 1
          %s1992 = scalar_select %p1991, %s34, 1
          %s1993 = smul.addr %s1992, 4
          %s1994 = scalar_lea.vmem %s20, %s1993
        $region124: #{tltr_forward.2} parent=119 // pred_fallthru
          _
      $region120: #{tltr_forward.2} parent=5 // pred_fallthru
        _
    $region6: #{tltr_forward.2} parent=1 // loop_footer
      %s32 = sadd.s32 1, %s28
    $region7: #{tltr_forward.2} parent=1 // loop_footer_branch
      %27 = sbr.rel target = $region3
    $region8: #{tltr_forward.2} parent=1 // loop_exit
      _
    %1995 = vsyncpa [#allocation3], 1
    %s1996 = scalar_lea.sflag [#allocation3], 1
    %1997 = vsyncpa %s1996, 1
    %1998 = vsyncpa [#allocation5], 1

// kernel: tltr_forward.3
$region0: #{tltr_forward.3}
  #allocation0 [shape = 'u32[]', space=smem, size = 0x4, offset = 0x4, fixed_abs, tag = 'smem constant byte address 0x4 - core index']
  #allocation1 [shape = 'u32[144,128]{1,0:T(1,128)}', space=vmem, size = 0x12000, scoped, tag = 'internal scratch']
  %s0 = inlined_call_operand.vmem [shape: f32[2,4,16], index: 0, kind: input, shape index: {}]
  %s1 = inlined_call_operand.vmem [shape: f32[1,16], index: 1, kind: input, shape index: {}]
  %s2 = inlined_call_operand.vmem [shape: f32[1,16], index: 2, kind: input, shape index: {}]
  %s3 = inlined_call_operand.vmem [shape: bf16[16,16], index: 3, kind: input, shape index: {}]
  %s4 = inlined_call_operand.vmem [shape: f32[1,16], index: 4, kind: input, shape index: {}]
  %s5 = inlined_call_operand.vmem [shape: bf16[16,16], index: 5, kind: input, shape index: {}]
  %s6 = inlined_call_operand.vmem [shape: bf16[16,16], index: 6, kind: input, shape index: {}]
  %s7 = inlined_call_operand.vmem [shape: f32[1,16], index: 7, kind: input, shape index: {}]
  %s8 = inlined_call_operand.vmem [shape: bf16[16,16], index: 8, kind: input, shape index: {}]
  %s9 = inlined_call_operand.vmem [shape: f32[1,16], index: 9, kind: input, shape index: {}]
  %s10 = inlined_call_operand.vmem [shape: f32[1,16], index: 10, kind: input, shape index: {}]
  %s11 = inlined_call_operand.vmem [shape: f32[1,16], index: 11, kind: input, shape index: {}]
  %s12 = inlined_call_operand.vmem [shape: bf16[16,64], index: 12, kind: input, shape index: {}]
  %s13 = inlined_call_operand.vmem [shape: f32[1,64], index: 13, kind: input, shape index: {}]
  %s14 = inlined_call_operand.vmem [shape: bf16[64,16], index: 14, kind: input, shape index: {}]
  %s15 = inlined_call_operand.vmem [shape: f32[1,16], index: 15, kind: input, shape index: {}]
  %s16 = inlined_call_operand.vmem [shape: f32[1,16], index: 16, kind: input, shape index: {}]
  %s17 = inlined_call_operand.vmem [shape: f32[1,16], index: 17, kind: input, shape index: {}]
  %s18 = inlined_call_operand.vmem [shape: bf16[16,2], index: 18, kind: input, shape index: {}]
  %s19 = inlined_call_operand.vmem [shape: f32[1,2], index: 19, kind: input, shape index: {}]
  %s20 = inlined_call_operand.hbm [shape: f32[1,2,2], index: 20, kind: output, shape index: {}]
  %s21 = sld [smem:[#allocation0]]
  $region90: #{tltr_forward.3} parent=0
    _
  %s23 = ssub.s32 1, %s21
  %s24 = scalar_select 0, %s23, %s21
  $region1: #{tltr_forward.3} parent=0
    #allocation2 [shape = 'u8[1024]{0}', space=vmem, size = 0x400, scoped, tag = 'output window, operand 0, single buffered']
    #allocation3 [shape = 's32[1]{0}', space=sflag, size = 0x4, scoped, tag = 'scoped memory for tltr_forward.3']
    %25 = vsyncpa [#allocation3], 0
    // Predicated region
    $region2: #{tltr_forward.3} parent=1 // pred_check
      _
    $region3: #{tltr_forward.3} parent=1 // pred_check_branch
      %27 = sbr.rel (0) target = $region5
    $region4: #{tltr_forward.3} parent=1 // pred_region
      _
    $region5: #{tltr_forward.3} parent=1 // pred_fallthru
      _
    // Predicated region
    $region6: #{tltr_forward.3} parent=1 // pred_check
      _
    $region7: #{tltr_forward.3} parent=1 // pred_check_branch
      %29 = sbr.rel (0) target = $region9
    $region8: #{tltr_forward.3} parent=1 // pred_region
      _
    $region9: #{tltr_forward.3} parent=1 // pred_fallthru
      _
    // Predicated region
    $region10: #{tltr_forward.3} parent=1 // pred_check
      _
    $region11: #{tltr_forward.3} parent=1 // pred_check_branch
      %31 = sbr.rel (0) target = $region13
    $region12: #{tltr_forward.3} parent=1 // pred_region
      _
    $region13: #{tltr_forward.3} parent=1 // pred_fallthru
      _
    // Predicated region
    $region14: #{tltr_forward.3} parent=1 // pred_check
      _
    $region15: #{tltr_forward.3} parent=1 // pred_check_branch
      %33 = sbr.rel (0) target = $region17
    $region16: #{tltr_forward.3} parent=1 // pred_region
      _
    $region17: #{tltr_forward.3} parent=1 // pred_fallthru
      _
    // Predicated region
    $region18: #{tltr_forward.3} parent=1 // pred_check
      _
    $region19: #{tltr_forward.3} parent=1 // pred_check_branch
      %35 = sbr.rel (0) target = $region21
    $region20: #{tltr_forward.3} parent=1 // pred_region
      _
    $region21: #{tltr_forward.3} parent=1 // pred_fallthru
      _
    // Predicated region
    $region22: #{tltr_forward.3} parent=1 // pred_check
      _
    $region23: #{tltr_forward.3} parent=1 // pred_check_branch
      %37 = sbr.rel (0) target = $region25
    $region24: #{tltr_forward.3} parent=1 // pred_region
      _
    $region25: #{tltr_forward.3} parent=1 // pred_fallthru
      _
    // Predicated region
    $region26: #{tltr_forward.3} parent=1 // pred_check
      _
    $region27: #{tltr_forward.3} parent=1 // pred_check_branch
      %39 = sbr.rel (0) target = $region29
    $region28: #{tltr_forward.3} parent=1 // pred_region
      _
    $region29: #{tltr_forward.3} parent=1 // pred_fallthru
      _
    // Predicated region
    $region30: #{tltr_forward.3} parent=1 // pred_check
      _
    $region31: #{tltr_forward.3} parent=1 // pred_check_branch
      %41 = sbr.rel (0) target = $region33
    $region32: #{tltr_forward.3} parent=1 // pred_region
      _
    $region33: #{tltr_forward.3} parent=1 // pred_fallthru
      _
    // Predicated region
    $region34: #{tltr_forward.3} parent=1 // pred_check
      _
    $region35: #{tltr_forward.3} parent=1 // pred_check_branch
      %43 = sbr.rel (0) target = $region37
    $region36: #{tltr_forward.3} parent=1 // pred_region
      _
    $region37: #{tltr_forward.3} parent=1 // pred_fallthru
      _
    // Predicated region
    $region38: #{tltr_forward.3} parent=1 // pred_check
      _
    $region39: #{tltr_forward.3} parent=1 // pred_check_branch
      %45 = sbr.rel (0) target = $region41
    $region40: #{tltr_forward.3} parent=1 // pred_region
      _
    $region41: #{tltr_forward.3} parent=1 // pred_fallthru
      _
    // Predicated region
    $region42: #{tltr_forward.3} parent=1 // pred_check
      _
    $region43: #{tltr_forward.3} parent=1 // pred_check_branch
      %47 = sbr.rel (0) target = $region45
    $region44: #{tltr_forward.3} parent=1 // pred_region
      _
    $region45: #{tltr_forward.3} parent=1 // pred_fallthru
      _
    // Predicated region
    $region46: #{tltr_forward.3} parent=1 // pred_check
      _
    $region47: #{tltr_forward.3} parent=1 // pred_check_branch
      %49 = sbr.rel (0) target = $region49
    $region48: #{tltr_forward.3} parent=1 // pred_region
      _
    $region49: #{tltr_forward.3} parent=1 // pred_fallthru
      _
    // Predicated region
    $region50: #{tltr_forward.3} parent=1 // pred_check
      _
    $region51: #{tltr_forward.3} parent=1 // pred_check_branch
      %51 = sbr.rel (0) target = $region53
    $region52: #{tltr_forward.3} parent=1 // pred_region
      _
    $region53: #{tltr_forward.3} parent=1 // pred_fallthru
      _
    // Predicated region
    $region54: #{tltr_forward.3} parent=1 // pred_check
      _
    $region55: #{tltr_forward.3} parent=1 // pred_check_branch
      %53 = sbr.rel (0) target = $region57
    $region56: #{tltr_forward.3} parent=1 // pred_region
      _
    $region57: #{tltr_forward.3} parent=1 // pred_fallthru
      _
    // Predicated region
    $region58: #{tltr_forward.3} parent=1 // pred_check
      _
    $region59: #{tltr_forward.3} parent=1 // pred_check_branch
      %55 = sbr.rel (0) target = $region61
    $region60: #{tltr_forward.3} parent=1 // pred_region
      _
    $region61: #{tltr_forward.3} parent=1 // pred_fallthru
      _
    // Predicated region
    $region62: #{tltr_forward.3} parent=1 // pred_check
      _
    $region63: #{tltr_forward.3} parent=1 // pred_check_branch
      %57 = sbr.rel (0) target = $region65
    $region64: #{tltr_forward.3} parent=1 // pred_region
      _
    $region65: #{tltr_forward.3} parent=1 // pred_fallthru
      _
    // Predicated region
    $region66: #{tltr_forward.3} parent=1 // pred_check
      _
    $region67: #{tltr_forward.3} parent=1 // pred_check_branch
      %59 = sbr.rel (0) target = $region69
    $region68: #{tltr_forward.3} parent=1 // pred_region
      _
    $region69: #{tltr_forward.3} parent=1 // pred_fallthru
      _
    // Predicated region
    $region70: #{tltr_forward.3} parent=1 // pred_check
      _
    $region71: #{tltr_forward.3} parent=1 // pred_check_branch
      %61 = sbr.rel (0) target = $region73
    $region72: #{tltr_forward.3} parent=1 // pred_region
      _
    $region73: #{tltr_forward.3} parent=1 // pred_fallthru
      _
    // Predicated region
    $region74: #{tltr_forward.3} parent=1 // pred_check
      _
    $region75: #{tltr_forward.3} parent=1 // pred_check_branch
      %63 = sbr.rel (0) target = $region77
    $region76: #{tltr_forward.3} parent=1 // pred_region
      _
    $region77: #{tltr_forward.3} parent=1 // pred_fallthru
      _
    // Predicated region
    $region78: #{tltr_forward.3} parent=1 // pred_check
      _
    $region79: #{tltr_forward.3} parent=1 // pred_check_branch
      %65 = sbr.rel (0) target = $region81
    $region80: #{tltr_forward.3} parent=1 // pred_region
      _
    $region81: #{tltr_forward.3} parent=1 // pred_fallthru
      _
    %v67 = vld [vmem:[%s0] sm:$0xf]
    %v68 = vld [vmem:[%s0 + $0x4] sm:$0xf]
    %v69 = vld [vmem:[%s1] sm:$0x1]
    %v70 = vld [vmem:[%s2] sm:$0x1]
    %v71 = vld [vmem:[%s3] sm:$0xf]
    %v72 = vld [vmem:[%s3 + $0x4] sm:$0xf]
    %v73 = vld [vmem:[%s4] sm:$0x1]
    %v74 = vld [vmem:[%s5] sm:$0xf]
    %v75 = vld [vmem:[%s5 + $0x4] sm:$0xf]
    %v76 = vld [vmem:[%s6] sm:$0xf]
    %v77 = vld [vmem:[%s6 + $0x4] sm:$0xf]
    %v78 = vld [vmem:[%s7] sm:$0x1]
    %v79 = vld [vmem:[%s8] sm:$0xf]
    %v80 = vld [vmem:[%s8 + $0x4] sm:$0xf]
    %v81 = vld [vmem:[%s9] sm:$0x1]
    %v82 = vld [vmem:[%s10] sm:$0x1]
    %v83 = vld [vmem:[%s11] sm:$0x1]
    %v84 = vld [vmem:[%s12] sm:$0xf]
    %v85 = vld [vmem:[%s12 + $0x4] sm:$0xf]
    %v86 = vld [vmem:[%s13] sm:$0x1]
    %v87 = vld [vmem:[%s14] sm:$0xf]
    %v88 = vld [vmem:[%s14 + $0x4] sm:$0xf]
    %v89 = vld [vmem:[%s14 + $0x8] sm:$0xf]
    %v90 = vld [vmem:[%s14 + $0xc] sm:$0xf]
    %v91 = vld [vmem:[%s14 + $0x10] sm:$0xf]
    %v92 = vld [vmem:[%s14 + $0x14] sm:$0xf]
    %v93 = vld [vmem:[%s14 + $0x18] sm:$0xf]
    %v94 = vld [vmem:[%s14 + $0x1c] sm:$0xf]
    %v95 = vld [vmem:[%s15] sm:$0x1]
    %v98 = vcombine.low %v67, %v68
    %vm100 = vcmask 130048
    %v101 = vsel %vm100, %v98, 0.0
    %102 = vadd.xlane.f32.xlu0 %v101
    %v103 = vpop.xlane.xlu0 %102
    %v104 = vrcp.pop 16.0
    %v105 = vmul.f32 %v103, %v104
    %v108 = vunpack.c.l.s4 839922192
    %v109 = vunpack.c.0.s8 %v108
    %v110 = vlaneseq
    %v111 = vshrl.u32 %v110, 7
    %v112 = vsub.s32 %v109, %v111
    %v113 = vrot.slane %v105, %v112
    %v115 = vunpack.c.l.s4 1985246804
    %v116 = vunpack.c.0.s8 %v115
    %v117 = vlaneseq
    %v118 = vshrl.u32 %v117, 7
    %v119 = vsub.s32 %v116, %v118
    %v120 = vrot.slane %v105, %v119
    %v123 = vsub.f32 %v67, %v113
    %v124 = vsub.f32 %v68, %v120
    %v125 = vmul.f32 %v123, %v123
    %v126 = vmul.f32 %v124, %v124
    %v129 = vcombine.low %v125, %v126
    %v131 = vsel %vm100, %v129, 0.0
    %132 = vadd.xlane.f32.xlu0 %v131
    %v133 = vpop.xlane.xlu0 %132
    %v134 = vmul.f32 %v133, %v104
    %v135 = vadd.f32 %v134, 1e-05
    %v136 = vrsqrt.pop %v135
    %v139 = vunpack.c.l.s4 839922192
    %v140 = vunpack.c.0.s8 %v139
    %v141 = vlaneseq
    %v142 = vshrl.u32 %v141, 7
    %v143 = vsub.s32 %v140, %v142
    %v144 = vrot.slane %v136, %v143
    %v146 = vunpack.c.l.s4 1985246804
    %v147 = vunpack.c.0.s8 %v146
    %v148 = vlaneseq
    %v149 = vshrl.u32 %v148, 7
    %v150 = vsub.s32 %v147, %v149
    %v151 = vrot.slane %v136, %v150
    %v154 = vmul.f32 %v123, %v144
    %v155 = vmul.f32 %v124, %v151
    %v157 = vlaneseq
    %v158 = vshrl.u32 %v157, 7
    %v159 = vsub.s32 0, %v158
    %v160 = vrot.slane %v69, %v159
    %v162 = vcombine.high %v160, %v160
    %v164 = vmul.f32 %v154, %v160
    %v165 = vmul.f32 %v155, %v162
    %v167 = vlaneseq
    %v168 = vshrl.u32 %v167, 7
    %v169 = vsub.s32 0, %v168
    %v170 = vrot.slane %v70, %v169
    %v172 = vcombine.high %v170, %v170
    %v174 = vadd.f32 %v164, %v170
    %v175 = vadd.f32 %v165, %v172
    %v178 = vcombine.low %v174, %v175
    %v180 = vpack.c.bf16 %v178, %v178
    %v182 = vlaneseq
    %v183 = vshrl.u32 %v182, 7
    %v184 = vsub.s32 0, %v183
    %v185 = vrot.slane %v73, %v184
    %v189 = vunpack.c.l.b16 %v71
    %v190 = vunpack.c.l.b16 %v72
    %v191 = vpack.c.b16 %v190, %v189
    %v194 = vsel %vm100, %v180, 0
    %196 = vmatprep.subr.bf16.mxu0 0
    %197 = vmatpush1.bf16.msra.mxu0 0
    %198 = vmatprep.subr.bf16.mxu0 0
    %199 = vmatpush1.bf16.msra.mxu0 0
    %200 = vmatprep.subr.bf16.mxu0 0
    %201 = vmatpush1.bf16.msra.mxu0 0
    %202 = vmatprep.subr.bf16.mxu0 0
    %203 = vmatpush1.bf16.msra.mxu0 0
    %204 = vmatprep.subr.bf16.mxu0 0
    %205 = vmatpush1.bf16.msra.mxu0 0
    %206 = vmatprep.subr.bf16.mxu0 0
    %207 = vmatpush1.bf16.msra.mxu0 0
    %208 = vmatprep.subr.bf16.mxu0 0
    %209 = vmatpush1.bf16.msra.mxu0 0
    %210 = vmatprep.subr.bf16.mxu0 0
    %211 = vmatpush1.bf16.msra.mxu0 %v191
    %212 = vmatprep.subr.bf16.mxu0 0
    %213 = vmatpush2.bf16.msra.mxu0 0
    %214 = vmatprep.subr.bf16.mxu0 0
    %215 = vmatpush2.bf16.msra.mxu0 0
    %216 = vmatprep.subr.bf16.mxu0 0
    %217 = vmatpush2.bf16.msra.mxu0 0
    %218 = vmatprep.subr.bf16.mxu0 0
    %219 = vmatpush2.bf16.msra.mxu0 0
    %220 = vmatprep.subr.bf16.mxu0 0
    %221 = vmatpush2.bf16.msra.mxu0 0
    %222 = vmatprep.subr.bf16.mxu0 0
    %223 = vmatpush2.bf16.msra.mxu0 0
    %224 = vmatprep.subr.bf16.mxu0 0
    %225 = vmatpush2.bf16.msra.mxu0 0
    %226 = vmatprep.subr.bf16.mxu0 0
    %227 = vmatpush2.bf16.msra.mxu0 0
    %228 = vmatprep.mubr.bf16.mxu0 0
    %229 = vmatmul.mubr.bf16.gmra.mxu0 %v194
    %v230 = vpop.f32.mrf.mxu0
    %v231 = vadd.f32 %v185, %v230
    %v232 = vpop.f32.mrf.mxu0
    %v233 = vpop.f32.mrf.mxu0
    %v234 = vpop.f32.mrf.mxu0
    %235 = vdwg.mxu0
    %v238 = vunpack.c.l.b16 %v74
    %v239 = vunpack.c.l.b16 %v75
    %v240 = vpack.c.b16 %v239, %v238
    %242 = vmatprep.subr.bf16.mxu0 0
    %243 = vmatpush1.bf16.msra.mxu0 0
    %244 = vmatprep.subr.bf16.mxu0 0
    %245 = vmatpush1.bf16.msra.mxu0 0
    %246 = vmatprep.subr.bf16.mxu0 0
    %247 = vmatpush1.bf16.msra.mxu0 0
    %248 = vmatprep.subr.bf16.mxu0 0
    %249 = vmatpush1.bf16.msra.mxu0 0
    %250 = vmatprep.subr.bf16.mxu0 0
    %251 = vmatpush1.bf16.msra.mxu0 0
    %252 = vmatprep.subr.bf16.mxu0 0
    %253 = vmatpush1.bf16.msra.mxu0 0
    %254 = vmatprep.subr.bf16.mxu0 0
    %255 = vmatpush1.bf16.msra.mxu0 0
    %256 = vmatprep.subr.bf16.mxu0 0
    %257 = vmatpush1.bf16.msra.mxu0 %v240
    %258 = vmatprep.subr.bf16.mxu0 0
    %259 = vmatpush2.bf16.msra.mxu0 0
    %260 = vmatprep.subr.bf16.mxu0 0
    %261 = vmatpush2.bf16.msra.mxu0 0
    %262 = vmatprep.subr.bf16.mxu0 0
    %263 = vmatpush2.bf16.msra.mxu0 0
    %264 = vmatprep.subr.bf16.mxu0 0
    %265 = vmatpush2.bf16.msra.mxu0 0
    %266 = vmatprep.subr.bf16.mxu0 0
    %267 = vmatpush2.bf16.msra.mxu0 0
    %268 = vmatprep.subr.bf16.mxu0 0
    %269 = vmatpush2.bf16.msra.mxu0 0
    %270 = vmatprep.subr.bf16.mxu0 0
    %271 = vmatpush2.bf16.msra.mxu0 0
    %272 = vmatprep.subr.bf16.mxu0 0
    %273 = vmatpush2.bf16.msra.mxu0 0
    %274 = vmatprep.mubr.bf16.mxu0 0
    %275 = vmatmul.mubr.bf16.gmra.mxu0 %v194
    %v276 = vpop.f32.mrf.mxu0
    %v277 = vadd.f32 0.0, %v276
    %v278 = vpop.f32.mrf.mxu0
    %v279 = vpop.f32.mrf.mxu0
    %v280 = vpop.f32.mrf.mxu0
    %281 = vdwg.mxu0
    %v283 = vlaneseq
    %v284 = vshrl.u32 %v283, 7
    %v285 = vsub.s32 0, %v284
    %v286 = vrot.slane %v78, %v285
    %v290 = vunpack.c.l.b16 %v76
    %v291 = vunpack.c.l.b16 %v77
    %v292 = vpack.c.b16 %v291, %v290
    %294 = vmatprep.subr.bf16.mxu0 0
    %295 = vmatpush1.bf16.msra.mxu0 0
    %296 = vmatprep.subr.bf16.mxu0 0
    %297 = vmatpush1.bf16.msra.mxu0 0
    %298 = vmatprep.subr.bf16.mxu0 0
    %299 = vmatpush1.bf16.msra.mxu0 0
    %300 = vmatprep.subr.bf16.mxu0 0
    %301 = vmatpush1.bf16.msra.mxu0 0
    %302 = vmatprep.subr.bf16.mxu0 0
    %303 = vmatpush1.bf16.msra.mxu0 0
    %304 = vmatprep.subr.bf16.mxu0 0
    %305 = vmatpush1.bf16.msra.mxu0 0
    %306 = vmatprep.subr.bf16.mxu0 0
    %307 = vmatpush1.bf16.msra.mxu0 0
    %308 = vmatprep.subr.bf16.mxu0 0
    %309 = vmatpush1.bf16.msra.mxu0 %v292
    %310 = vmatprep.subr.bf16.mxu0 0
    %311 = vmatpush2.bf16.msra.mxu0 0
    %312 = vmatprep.subr.bf16.mxu0 0
    %313 = vmatpush2.bf16.msra.mxu0 0
    %314 = vmatprep.subr.bf16.mxu0 0
    %315 = vmatpush2.bf16.msra.mxu0 0
    %316 = vmatprep.subr.bf16.mxu0 0
    %317 = vmatpush2.bf16.msra.mxu0 0
    %318 = vmatprep.subr.bf16.mxu0 0
    %319 = vmatpush2.bf16.msra.mxu0 0
    %320 = vmatprep.subr.bf16.mxu0 0
    %321 = vmatpush2.bf16.msra.mxu0 0
    %322 = vmatprep.subr.bf16.mxu0 0
    %323 = vmatpush2.bf16.msra.mxu0 0
    %324 = vmatprep.subr.bf16.mxu0 0
    %325 = vmatpush2.bf16.msra.mxu0 0
    %326 = vmatprep.mubr.bf16.mxu0 0
    %327 = vmatmul.mubr.bf16.gmra.mxu0 %v194
    %v328 = vpop.f32.mrf.mxu0
    %v329 = vadd.f32 %v286, %v328
    %v330 = vpop.f32.mrf.mxu0
    %v331 = vpop.f32.mrf.mxu0
    %v332 = vpop.f32.mrf.mxu0
    %333 = vdwg.mxu0
    %v335 = vcombine.high %v231, %v231
    %v338 = vcombine.high %v277, %v277
    %v341 = vcombine.high %v329, %v329
    %v343 = vpack.c.bf16 %v231, %v231
    %v344 = vpack.c.bf16 %v335, %v335
    %v345 = vpack.c.bf16 %v277, %v277
    %v346 = vpack.c.bf16 %v338, %v338
    %v347 = vpack.c.bf16 %v329, %v329
    %v348 = vpack.c.bf16 %v341, %v341
    %vm349 = vcmask 15360
    %v351 = vsel %vm349, %v343, 0
    %v354 = vsel %vm349, %v345, 0
    %356 = vmatprep.subr.bf16.mxu0 0
    %357 = vmatpush1.bf16.xpose.msra.mxu0 0
    %358 = vmatprep.subr.bf16.mxu0 0
    %359 = vmatpush1.bf16.xpose.msra.mxu0 0
    %360 = vmatprep.subr.bf16.mxu0 0
    %361 = vmatpush1.bf16.xpose.msra.mxu0 0
    %362 = vmatprep.subr.bf16.mxu0 0
    %363 = vmatpush1.bf16.xpose.msra.mxu0 0
    %364 = vmatprep.subr.bf16.mxu0 0
    %365 = vmatpush1.bf16.xpose.msra.mxu0 0
    %366 = vmatprep.subr.bf16.mxu0 0
    %367 = vmatpush1.bf16.xpose.msra.mxu0 0
    %368 = vmatprep.subr.bf16.mxu0 0
    %369 = vmatpush1.bf16.xpose.msra.mxu0 0
    %370 = vmatprep.subr.bf16.mxu0 0
    %371 = vmatpush1.bf16.xpose.msra.mxu0 %v354
    %372 = vmatprep.subr.bf16.mxu0 0
    %373 = vmatpush2.bf16.xpose.msra.mxu0 0
    %374 = vmatprep.subr.bf16.mxu0 0
    %375 = vmatpush2.bf16.xpose.msra.mxu0 0
    %376 = vmatprep.subr.bf16.mxu0 0
    %377 = vmatpush2.bf16.xpose.msra.mxu0 0
    %378 = vmatprep.subr.bf16.mxu0 0
    %379 = vmatpush2.bf16.xpose.msra.mxu0 0
    %380 = vmatprep.subr.bf16.mxu0 0
    %381 = vmatpush2.bf16.xpose.msra.mxu0 0
    %382 = vmatprep.subr.bf16.mxu0 0
    %383 = vmatpush2.bf16.xpose.msra.mxu0 0
    %384 = vmatprep.subr.bf16.mxu0 0
    %385 = vmatpush2.bf16.xpose.msra.mxu0 0
    %386 = vmatprep.subr.bf16.mxu0 0
    %387 = vmatpush2.bf16.xpose.msra.mxu0 0
    %388 = vmatprep.mubr.bf16.mxu0 0
    %389 = vmatmul.mubr.bf16.gmra.mxu0 %v351
    %v390 = vpop.f32.mrf.mxu0
    %v391 = vadd.f32 0.0, %v390
    %v392 = vpop.f32.mrf.mxu0
    %v393 = vpop.f32.mrf.mxu0
    %v394 = vpop.f32.mrf.mxu0
    %395 = vdwg.mxu0
    %v397 = vsel %vm349, %v344, 0
    %v400 = vsel %vm349, %v346, 0
    %402 = vmatprep.subr.bf16.mxu0 0
    %403 = vmatpush1.bf16.xpose.msra.mxu0 0
    %404 = vmatprep.subr.bf16.mxu0 0
    %405 = vmatpush1.bf16.xpose.msra.mxu0 0
    %406 = vmatprep.subr.bf16.mxu0 0
    %407 = vmatpush1.bf16.xpose.msra.mxu0 0
    %408 = vmatprep.subr.bf16.mxu0 0
    %409 = vmatpush1.bf16.xpose.msra.mxu0 0
    %410 = vmatprep.subr.bf16.mxu0 0
    %411 = vmatpush1.bf16.xpose.msra.mxu0 0
    %412 = vmatprep.subr.bf16.mxu0 0
    %413 = vmatpush1.bf16.xpose.msra.mxu0 0
    %414 = vmatprep.subr.bf16.mxu0 0
    %415 = vmatpush1.bf16.xpose.msra.mxu0 0
    %416 = vmatprep.subr.bf16.mxu0 0
    %417 = vmatpush1.bf16.xpose.msra.mxu0 %v400
    %418 = vmatprep.subr.bf16.mxu0 0
    %419 = vmatpush2.bf16.xpose.msra.mxu0 0
    %420 = vmatprep.subr.bf16.mxu0 0
    %421 = vmatpush2.bf16.xpose.msra.mxu0 0
    %422 = vmatprep.subr.bf16.mxu0 0
    %423 = vmatpush2.bf16.xpose.msra.mxu0 0
    %424 = vmatprep.subr.bf16.mxu0 0
    %425 = vmatpush2.bf16.xpose.msra.mxu0 0
    %426 = vmatprep.subr.bf16.mxu0 0
    %427 = vmatpush2.bf16.xpose.msra.mxu0 0
    %428 = vmatprep.subr.bf16.mxu0 0
    %429 = vmatpush2.bf16.xpose.msra.mxu0 0
    %430 = vmatprep.subr.bf16.mxu0 0
    %431 = vmatpush2.bf16.xpose.msra.mxu0 0
    %432 = vmatprep.subr.bf16.mxu0 0
    %433 = vmatpush2.bf16.xpose.msra.mxu0 0
    %434 = vmatprep.mubr.bf16.mxu0 0
    %435 = vmatmul.mubr.bf16.gmra.mxu0 %v397
    %v436 = vpop.f32.mrf.mxu0
    %v437 = vadd.f32 0.0, %v436
    %v438 = vpop.f32.mrf.mxu0
    %v439 = vpop.f32.mrf.mxu0
    %v440 = vpop.f32.mrf.mxu0
    %441 = vdwg.mxu0
    %vm442 = vcmask 27648
    %v443 = vsel %vm442, %v391, -inf
    %444 = vmax.xlane.f32.xlu0 %v443
    %v445 = vpop.xlane.xlu0 %444
    %v446 = vsel %vm442, %v437, -inf
    %447 = vmax.xlane.f32.xlu0 %v446
    %v448 = vpop.xlane.xlu0 %447
    %v449 = vsub.f32 %v391, %v445
    %v450 = vsub.f32 %v437, %v448
    %v451 = vmul.f32 %v449, 1.442695
    %v452 = vpow.pop %v451
    %v453 = vmul.f32 %v450, 1.442695
    %v454 = vpow.pop %v453
    %v455 = vsel %vm442, %v452, 0.0
    %456 = vadd.xlane.f32.xlu0 %v455
    %v457 = vpop.xlane.xlu0 %456
    %v458 = vsel %vm442, %v454, 0.0
    %459 = vadd.xlane.f32.xlu0 %v458
    %v460 = vpop.xlane.xlu0 %459
    %v461 = vrcp.pop %v457
    %v462 = vrcp.pop %v460
    %v463 = vmul.f32 %v452, %v461
    %v464 = vmul.f32 %v454, %v462
    %v465 = vpack.c.bf16 %v463, %v463
    %v466 = vpack.c.bf16 %v464, %v464
    %vm467 = vcmask 31744
    %v469 = vsel %vm467, %v465, 0
    %vm471 = vcmask 1041408
    %v473 = vsel %vm471, %v347, 0
    %475 = vmatprep.subr.bf16.mxu0 0
    %476 = vmatpush1.bf16.msra.mxu0 0
    %477 = vmatprep.subr.bf16.mxu0 0
    %478 = vmatpush1.bf16.msra.mxu0 0
    %479 = vmatprep.subr.bf16.mxu0 0
    %480 = vmatpush1.bf16.msra.mxu0 0
    %481 = vmatprep.subr.bf16.mxu0 0
    %482 = vmatpush1.bf16.msra.mxu0 0
    %483 = vmatprep.subr.bf16.mxu0 0
    %484 = vmatpush1.bf16.msra.mxu0 0
    %485 = vmatprep.subr.bf16.mxu0 0
    %486 = vmatpush1.bf16.msra.mxu0 0
    %487 = vmatprep.subr.bf16.mxu0 0
    %488 = vmatpush1.bf16.msra.mxu0 0
    %489 = vmatprep.subr.bf16.mxu0 0
    %490 = vmatpush1.bf16.msra.mxu0 %v473
    %491 = vmatprep.subr.bf16.mxu0 0
    %492 = vmatpush2.bf16.msra.mxu0 0
    %493 = vmatprep.subr.bf16.mxu0 0
    %494 = vmatpush2.bf16.msra.mxu0 0
    %495 = vmatprep.subr.bf16.mxu0 0
    %496 = vmatpush2.bf16.msra.mxu0 0
    %497 = vmatprep.subr.bf16.mxu0 0
    %498 = vmatpush2.bf16.msra.mxu0 0
    %499 = vmatprep.subr.bf16.mxu0 0
    %500 = vmatpush2.bf16.msra.mxu0 0
    %501 = vmatprep.subr.bf16.mxu0 0
    %502 = vmatpush2.bf16.msra.mxu0 0
    %503 = vmatprep.subr.bf16.mxu0 0
    %504 = vmatpush2.bf16.msra.mxu0 0
    %505 = vmatprep.subr.bf16.mxu0 0
    %506 = vmatpush2.bf16.msra.mxu0 0
    %507 = vmatprep.mubr.bf16.mxu0 0
    %508 = vmatmul.mubr.bf16.gmra.mxu0 %v469
    %v509 = vpop.f32.mrf.mxu0
    %v510 = vadd.f32 0.0, %v509
    %v511 = vpop.f32.mrf.mxu0
    %v512 = vpop.f32.mrf.mxu0
    %v513 = vpop.f32.mrf.mxu0
    %514 = vdwg.mxu0
    %v516 = vsel %vm467, %v466, 0
    %v519 = vsel %vm471, %v348, 0
    %521 = vmatprep.subr.bf16.mxu0 0
    %522 = vmatpush1.bf16.msra.mxu0 0
    %523 = vmatprep.subr.bf16.mxu0 0
    %524 = vmatpush1.bf16.msra.mxu0 0
    %525 = vmatprep.subr.bf16.mxu0 0
    %526 = vmatpush1.bf16.msra.mxu0 0
    %527 = vmatprep.subr.bf16.mxu0 0
    %528 = vmatpush1.bf16.msra.mxu0 0
    %529 = vmatprep.subr.bf16.mxu0 0
    %530 = vmatpush1.bf16.msra.mxu0 0
    %531 = vmatprep.subr.bf16.mxu0 0
    %532 = vmatpush1.bf16.msra.mxu0 0
    %533 = vmatprep.subr.bf16.mxu0 0
    %534 = vmatpush1.bf16.msra.mxu0 0
    %535 = vmatprep.subr.bf16.mxu0 0
    %536 = vmatpush1.bf16.msra.mxu0 %v519
    %537 = vmatprep.subr.bf16.mxu0 0
    %538 = vmatpush2.bf16.msra.mxu0 0
    %539 = vmatprep.subr.bf16.mxu0 0
    %540 = vmatpush2.bf16.msra.mxu0 0
    %541 = vmatprep.subr.bf16.mxu0 0
    %542 = vmatpush2.bf16.msra.mxu0 0
    %543 = vmatprep.subr.bf16.mxu0 0
    %544 = vmatpush2.bf16.msra.mxu0 0
    %545 = vmatprep.subr.bf16.mxu0 0
    %546 = vmatpush2.bf16.msra.mxu0 0
    %547 = vmatprep.subr.bf16.mxu0 0
    %548 = vmatpush2.bf16.msra.mxu0 0
    %549 = vmatprep.subr.bf16.mxu0 0
    %550 = vmatpush2.bf16.msra.mxu0 0
    %551 = vmatprep.subr.bf16.mxu0 0
    %552 = vmatpush2.bf16.msra.mxu0 0
    %553 = vmatprep.mubr.bf16.mxu0 0
    %554 = vmatmul.mubr.bf16.gmra.mxu0 %v516
    %v555 = vpop.f32.mrf.mxu0
    %v556 = vadd.f32 0.0, %v555
    %v557 = vpop.f32.mrf.mxu0
    %v558 = vpop.f32.mrf.mxu0
    %v559 = vpop.f32.mrf.mxu0
    %560 = vdwg.mxu0
    %v563 = vcombine.low %v510, %v556
    %v565 = vpack.c.bf16 %v563, %v563
    %567 = vrot.lane.b32.xlu0 %v343, 126
    %v568 = vpop.permute.xlu0 %567
    %570 = vrot.lane.b32.xlu0 %v345, 126
    %v571 = vpop.permute.xlu0 %570
    %v573 = vsel %vm349, %v568, 0
    %v576 = vsel %vm349, %v571, 0
    %578 = vmatprep.subr.bf16.mxu0 0
    %579 = vmatpush1.bf16.xpose.msra.mxu0 0
    %580 = vmatprep.subr.bf16.mxu0 0
    %581 = vmatpush1.bf16.xpose.msra.mxu0 0
    %582 = vmatprep.subr.bf16.mxu0 0
    %583 = vmatpush1.bf16.xpose.msra.mxu0 0
    %584 = vmatprep.subr.bf16.mxu0 0
    %585 = vmatpush1.bf16.xpose.msra.mxu0 0
    %586 = vmatprep.subr.bf16.mxu0 0
    %587 = vmatpush1.bf16.xpose.msra.mxu0 0
    %588 = vmatprep.subr.bf16.mxu0 0
    %589 = vmatpush1.bf16.xpose.msra.mxu0 0
    %590 = vmatprep.subr.bf16.mxu0 0
    %591 = vmatpush1.bf16.xpose.msra.mxu0 0
    %592 = vmatprep.subr.bf16.mxu0 0
    %593 = vmatpush1.bf16.xpose.msra.mxu0 %v576
    %594 = vmatprep.subr.bf16.mxu0 0
    %595 = vmatpush2.bf16.xpose.msra.mxu0 0
    %596 = vmatprep.subr.bf16.mxu0 0
    %597 = vmatpush2.bf16.xpose.msra.mxu0 0
    %598 = vmatprep.subr.bf16.mxu0 0
    %599 = vmatpush2.bf16.xpose.msra.mxu0 0
    %600 = vmatprep.subr.bf16.mxu0 0
    %601 = vmatpush2.bf16.xpose.msra.mxu0 0
    %602 = vmatprep.subr.bf16.mxu0 0
    %603 = vmatpush2.bf16.xpose.msra.mxu0 0
    %604 = vmatprep.subr.bf16.mxu0 0
    %605 = vmatpush2.bf16.xpose.msra.mxu0 0
    %606 = vmatprep.subr.bf16.mxu0 0
    %607 = vmatpush2.bf16.xpose.msra.mxu0 0
    %608 = vmatprep.subr.bf16.mxu0 0
    %609 = vmatpush2.bf16.xpose.msra.mxu0 0
    %610 = vmatprep.mubr.bf16.mxu0 0
    %611 = vmatmul.mubr.bf16.gmra.mxu0 %v573
    %v612 = vpop.f32.mrf.mxu0
    %v613 = vadd.f32 0.0, %v612
    %v614 = vpop.f32.mrf.mxu0
    %v615 = vpop.f32.mrf.mxu0
    %v616 = vpop.f32.mrf.mxu0
    %617 = vdwg.mxu0
    %619 = vrot.lane.b32.xlu0 %v344, 126
    %v620 = vpop.permute.xlu0 %619
    %622 = vrot.lane.b32.xlu0 %v346, 126
    %v623 = vpop.permute.xlu0 %622
    %v625 = vsel %vm349, %v620, 0
    %v628 = vsel %vm349, %v623, 0
    %630 = vmatprep.subr.bf16.mxu0 0
    %631 = vmatpush1.bf16.xpose.msra.mxu0 0
    %632 = vmatprep.subr.bf16.mxu0 0
    %633 = vmatpush1.bf16.xpose.msra.mxu0 0
    %634 = vmatprep.subr.bf16.mxu0 0
    %635 = vmatpush1.bf16.xpose.msra.mxu0 0
    %636 = vmatprep.subr.bf16.mxu0 0
    %637 = vmatpush1.bf16.xpose.msra.mxu0 0
    %638 = vmatprep.subr.bf16.mxu0 0
    %639 = vmatpush1.bf16.xpose.msra.mxu0 0
    %640 = vmatprep.subr.bf16.mxu0 0
    %641 = vmatpush1.bf16.xpose.msra.mxu0 0
    %642 = vmatprep.subr.bf16.mxu0 0
    %643 = vmatpush1.bf16.xpose.msra.mxu0 0
    %644 = vmatprep.subr.bf16.mxu0 0
    %645 = vmatpush1.bf16.xpose.msra.mxu0 %v628
    %646 = vmatprep.subr.bf16.mxu0 0
    %647 = vmatpush2.bf16.xpose.msra.mxu0 0
    %648 = vmatprep.subr.bf16.mxu0 0
    %649 = vmatpush2.bf16.xpose.msra.mxu0 0
    %650 = vmatprep.subr.bf16.mxu0 0
    %651 = vmatpush2.bf16.xpose.msra.mxu0 0
    %652 = vmatprep.subr.bf16.mxu0 0
    %653 = vmatpush2.bf16.xpose.msra.mxu0 0
    %654 = vmatprep.subr.bf16.mxu0 0
    %655 = vmatpush2.bf16.xpose.msra.mxu0 0
    %656 = vmatprep.subr.bf16.mxu0 0
    %657 = vmatpush2.bf16.xpose.msra.mxu0 0
    %658 = vmatprep.subr.bf16.mxu0 0
    %659 = vmatpush2.bf16.xpose.msra.mxu0 0
    %660 = vmatprep.subr.bf16.mxu0 0
    %661 = vmatpush2.bf16.xpose.msra.mxu0 0
    %662 = vmatprep.mubr.bf16.mxu0 0
    %663 = vmatmul.mubr.bf16.gmra.mxu0 %v625
    %v664 = vpop.f32.mrf.mxu0
    %v665 = vadd.f32 0.0, %v664
    %v666 = vpop.f32.mrf.mxu0
    %v667 = vpop.f32.mrf.mxu0
    %v668 = vpop.f32.mrf.mxu0
    %669 = vdwg.mxu0
    %v670 = vsel %vm442, %v613, -inf
    %671 = vmax.xlane.f32.xlu0 %v670
    %v672 = vpop.xlane.xlu0 %671
    %v673 = vsel %vm442, %v665, -inf
    %674 = vmax.xlane.f32.xlu0 %v673
    %v675 = vpop.xlane.xlu0 %674
    %v676 = vsub.f32 %v613, %v672
    %v677 = vsub.f32 %v665, %v675
    %v678 = vmul.f32 %v676, 1.442695
    %v679 = vpow.pop %v678
    %v680 = vmul.f32 %v677, 1.442695
    %v681 = vpow.pop %v680
    %v682 = vsel %vm442, %v679, 0.0
    %683 = vadd.xlane.f32.xlu0 %v682
    %v684 = vpop.xlane.xlu0 %683
    %v685 = vsel %vm442, %v681, 0.0
    %686 = vadd.xlane.f32.xlu0 %v685
    %v687 = vpop.xlane.xlu0 %686
    %v688 = vrcp.pop %v684
    %v689 = vrcp.pop %v687
    %v690 = vmul.f32 %v679, %v688
    %v691 = vmul.f32 %v681, %v689
    %v692 = vpack.c.bf16 %v690, %v690
    %v693 = vpack.c.bf16 %v691, %v691
    %695 = vrot.lane.b32.xlu0 %v347, 126
    %v696 = vpop.permute.xlu0 %695
    %v698 = vsel %vm467, %v692, 0
    %v701 = vsel %vm471, %v696, 0
    %703 = vmatprep.subr.bf16.mxu0 0
    %704 = vmatpush1.bf16.msra.mxu0 0
    %705 = vmatprep.subr.bf16.mxu0 0
    %706 = vmatpush1.bf16.msra.mxu0 0
    %707 = vmatprep.subr.bf16.mxu0 0
    %708 = vmatpush1.bf16.msra.mxu0 0
    %709 = vmatprep.subr.bf16.mxu0 0
    %710 = vmatpush1.bf16.msra.mxu0 0
    %711 = vmatprep.subr.bf16.mxu0 0
    %712 = vmatpush1.bf16.msra.mxu0 0
    %713 = vmatprep.subr.bf16.mxu0 0
    %714 = vmatpush1.bf16.msra.mxu0 0
    %715 = vmatprep.subr.bf16.mxu0 0
    %716 = vmatpush1.bf16.msra.mxu0 0
    %717 = vmatprep.subr.bf16.mxu0 0
    %718 = vmatpush1.bf16.msra.mxu0 %v701
    %719 = vmatprep.subr.bf16.mxu0 0
    %720 = vmatpush2.bf16.msra.mxu0 0
    %721 = vmatprep.subr.bf16.mxu0 0
    %722 = vmatpush2.bf16.msra.mxu0 0
    %723 = vmatprep.subr.bf16.mxu0 0
    %724 = vmatpush2.bf16.msra.mxu0 0
    %725 = vmatprep.subr.bf16.mxu0 0
    %726 = vmatpush2.bf16.msra.mxu0 0
    %727 = vmatprep.subr.bf16.mxu0 0
    %728 = vmatpush2.bf16.msra.mxu0 0
    %729 = vmatprep.subr.bf16.mxu0 0
    %730 = vmatpush2.bf16.msra.mxu0 0
    %731 = vmatprep.subr.bf16.mxu0 0
    %732 = vmatpush2.bf16.msra.mxu0 0
    %733 = vmatprep.subr.bf16.mxu0 0
    %734 = vmatpush2.bf16.msra.mxu0 0
    %735 = vmatprep.mubr.bf16.mxu0 0
    %736 = vmatmul.mubr.bf16.gmra.mxu0 %v698
    %v737 = vpop.f32.mrf.mxu0
    %v738 = vadd.f32 0.0, %v737
    %v739 = vpop.f32.mrf.mxu0
    %v740 = vpop.f32.mrf.mxu0
    %v741 = vpop.f32.mrf.mxu0
    %742 = vdwg.mxu0
    %744 = vrot.lane.b32.xlu0 %v348, 126
    %v745 = vpop.permute.xlu0 %744
    %v747 = vsel %vm467, %v693, 0
    %v750 = vsel %vm471, %v745, 0
    %752 = vmatprep.subr.bf16.mxu0 0
    %753 = vmatpush1.bf16.msra.mxu0 0
    %754 = vmatprep.subr.bf16.mxu0 0
    %755 = vmatpush1.bf16.msra.mxu0 0
    %756 = vmatprep.subr.bf16.mxu0 0
    %757 = vmatpush1.bf16.msra.mxu0 0
    %758 = vmatprep.subr.bf16.mxu0 0
    %759 = vmatpush1.bf16.msra.mxu0 0
    %760 = vmatprep.subr.bf16.mxu0 0
    %761 = vmatpush1.bf16.msra.mxu0 0
    %762 = vmatprep.subr.bf16.mxu0 0
    %763 = vmatpush1.bf16.msra.mxu0 0
    %764 = vmatprep.subr.bf16.mxu0 0
    %765 = vmatpush1.bf16.msra.mxu0 0
    %766 = vmatprep.subr.bf16.mxu0 0
    %767 = vmatpush1.bf16.msra.mxu0 %v750
    %768 = vmatprep.subr.bf16.mxu0 0
    %769 = vmatpush2.bf16.msra.mxu0 0
    %770 = vmatprep.subr.bf16.mxu0 0
    %771 = vmatpush2.bf16.msra.mxu0 0
    %772 = vmatprep.subr.bf16.mxu0 0
    %773 = vmatpush2.bf16.msra.mxu0 0
    %774 = vmatprep.subr.bf16.mxu0 0
    %775 = vmatpush2.bf16.msra.mxu0 0
    %776 = vmatprep.subr.bf16.mxu0 0
    %777 = vmatpush2.bf16.msra.mxu0 0
    %778 = vmatprep.subr.bf16.mxu0 0
    %779 = vmatpush2.bf16.msra.mxu0 0
    %780 = vmatprep.subr.bf16.mxu0 0
    %781 = vmatpush2.bf16.msra.mxu0 0
    %782 = vmatprep.subr.bf16.mxu0 0
    %783 = vmatpush2.bf16.msra.mxu0 0
    %784 = vmatprep.mubr.bf16.mxu0 0
    %785 = vmatmul.mubr.bf16.gmra.mxu0 %v747
    %v786 = vpop.f32.mrf.mxu0
    %v787 = vadd.f32 0.0, %v786
    %v788 = vpop.f32.mrf.mxu0
    %v789 = vpop.f32.mrf.mxu0
    %v790 = vpop.f32.mrf.mxu0
    %791 = vdwg.mxu0
    %v794 = vcombine.low %v738, %v787
    %v796 = vpack.c.bf16 %v794, %v794
    %v798 = vunpack.c.l.b16 %v79
    %v799 = vpack.c.b16 %v798, %v798
    %v800 = vrot.slane %v799, 1
    %v802 = vsel %vm349, %v796, 0
    %vm804 = vcmask 1040384
    %v806 = vsel %vm804, %v800, 0
    %808 = vmatprep.subr.bf16.mxu0 0
    %809 = vmatpush1.bf16.msra.mxu0 0
    %810 = vmatprep.subr.bf16.mxu0 0
    %811 = vmatpush1.bf16.msra.mxu0 0
    %812 = vmatprep.subr.bf16.mxu0 0
    %813 = vmatpush1.bf16.msra.mxu0 0
    %814 = vmatprep.subr.bf16.mxu0 0
    %815 = vmatpush1.bf16.msra.mxu0 0
    %816 = vmatprep.subr.bf16.mxu0 0
    %817 = vmatpush1.bf16.msra.mxu0 0
    %818 = vmatprep.subr.bf16.mxu0 0
    %819 = vmatpush1.bf16.msra.mxu0 0
    %820 = vmatprep.subr.bf16.mxu0 0
    %821 = vmatpush1.bf16.msra.mxu0 0
    %822 = vmatprep.subr.bf16.mxu0 0
    %823 = vmatpush1.bf16.msra.mxu0 %v806
    %824 = vmatprep.subr.bf16.mxu0 0
    %825 = vmatpush2.bf16.msra.mxu0 0
    %826 = vmatprep.subr.bf16.mxu0 0
    %827 = vmatpush2.bf16.msra.mxu0 0
    %828 = vmatprep.subr.bf16.mxu0 0
    %829 = vmatpush2.bf16.msra.mxu0 0
    %830 = vmatprep.subr.bf16.mxu0 0
    %831 = vmatpush2.bf16.msra.mxu0 0
    %832 = vmatprep.subr.bf16.mxu0 0
    %833 = vmatpush2.bf16.msra.mxu0 0
    %834 = vmatprep.subr.bf16.mxu0 0
    %835 = vmatpush2.bf16.msra.mxu0 0
    %836 = vmatprep.subr.bf16.mxu0 0
    %837 = vmatpush2.bf16.msra.mxu0 0
    %838 = vmatprep.subr.bf16.mxu0 0
    %839 = vmatpush2.bf16.msra.mxu0 0
    %840 = vmatprep.mubr.bf16.mxu0 0
    %841 = vmatmul.mubr.bf16.gmra.mxu0 %v802
    %v842 = vpop.f32.mrf.mxu0
    %v843 = vadd.f32 0.0, %v842
    %v844 = vpop.f32.mrf.mxu0
    %v845 = vpop.f32.mrf.mxu0
    %v846 = vpop.f32.mrf.mxu0
    %847 = vdwg.mxu0
    %v849 = vsel %vm349, %v565, 0
    %v852 = vsel %vm804, %v79, 0
    %854 = vmatprep.subr.bf16.mxu0 0
    %855 = vmatpush1.bf16.msra.mxu0 0
    %856 = vmatprep.subr.bf16.mxu0 0
    %857 = vmatpush1.bf16.msra.mxu0 0
    %858 = vmatprep.subr.bf16.mxu0 0
    %859 = vmatpush1.bf16.msra.mxu0 0
    %860 = vmatprep.subr.bf16.mxu0 0
    %861 = vmatpush1.bf16.msra.mxu0 0
    %862 = vmatprep.subr.bf16.mxu0 0
    %863 = vmatpush1.bf16.msra.mxu0 0
    %864 = vmatprep.subr.bf16.mxu0 0
    %865 = vmatpush1.bf16.msra.mxu0 0
    %866 = vmatprep.subr.bf16.mxu0 0
    %867 = vmatpush1.bf16.msra.mxu0 0
    %868 = vmatprep.subr.bf16.mxu0 0
    %869 = vmatpush1.bf16.msra.mxu0 %v852
    %870 = vmatprep.subr.bf16.mxu0 0
    %871 = vmatpush2.bf16.msra.mxu0 0
    %872 = vmatprep.subr.bf16.mxu0 0
    %873 = vmatpush2.bf16.msra.mxu0 0
    %874 = vmatprep.subr.bf16.mxu0 0
    %875 = vmatpush2.bf16.msra.mxu0 0
    %876 = vmatprep.subr.bf16.mxu0 0
    %877 = vmatpush2.bf16.msra.mxu0 0
    %878 = vmatprep.subr.bf16.mxu0 0
    %879 = vmatpush2.bf16.msra.mxu0 0
    %880 = vmatprep.subr.bf16.mxu0 0
    %881 = vmatpush2.bf16.msra.mxu0 0
    %882 = vmatprep.subr.bf16.mxu0 0
    %883 = vmatpush2.bf16.msra.mxu0 0
    %884 = vmatprep.subr.bf16.mxu0 0
    %885 = vmatpush2.bf16.msra.mxu0 0
    %886 = vmatprep.mubr.bf16.mxu0 0
    %887 = vmatmul.mubr.bf16.gmra.mxu0 %v849
    %v888 = vpop.f32.mrf.mxu0
    %v889 = vadd.f32 %v843, %v888
    %v890 = vpop.f32.mrf.mxu0
    %v891 = vpop.f32.mrf.mxu0
    %v892 = vpop.f32.mrf.mxu0
    %893 = vdwg.mxu0
    %894 = vrot.lane.b32.xlu0 %v343, 124
    %v895 = vpop.permute.xlu0 %894
    %896 = vrot.lane.b32.xlu0 %v345, 124
    %v897 = vpop.permute.xlu0 %896
    %v899 = vsel %vm349, %v895, 0
    %v902 = vsel %vm349, %v897, 0
    %904 = vmatprep.subr.bf16.mxu0 0
    %905 = vmatpush1.bf16.xpose.msra.mxu0 0
    %906 = vmatprep.subr.bf16.mxu0 0
    %907 = vmatpush1.bf16.xpose.msra.mxu0 0
    %908 = vmatprep.subr.bf16.mxu0 0
    %909 = vmatpush1.bf16.xpose.msra.mxu0 0
    %910 = vmatprep.subr.bf16.mxu0 0
    %911 = vmatpush1.bf16.xpose.msra.mxu0 0
    %912 = vmatprep.subr.bf16.mxu0 0
    %913 = vmatpush1.bf16.xpose.msra.mxu0 0
    %914 = vmatprep.subr.bf16.mxu0 0
    %915 = vmatpush1.bf16.xpose.msra.mxu0 0
    %916 = vmatprep.subr.bf16.mxu0 0
    %917 = vmatpush1.bf16.xpose.msra.mxu0 0
    %918 = vmatprep.subr.bf16.mxu0 0
    %919 = vmatpush1.bf16.xpose.msra.mxu0 %v902
    %920 = vmatprep.subr.bf16.mxu0 0
    %921 = vmatpush2.bf16.xpose.msra.mxu0 0
    %922 = vmatprep.subr.bf16.mxu0 0
    %923 = vmatpush2.bf16.xpose.msra.mxu0 0
    %924 = vmatprep.subr.bf16.mxu0 0
    %925 = vmatpush2.bf16.xpose.msra.mxu0 0
    %926 = vmatprep.subr.bf16.mxu0 0
    %927 = vmatpush2.bf16.xpose.msra.mxu0 0
    %928 = vmatprep.subr.bf16.mxu0 0
    %929 = vmatpush2.bf16.xpose.msra.mxu0 0
    %930 = vmatprep.subr.bf16.mxu0 0
    %931 = vmatpush2.bf16.xpose.msra.mxu0 0
    %932 = vmatprep.subr.bf16.mxu0 0
    %933 = vmatpush2.bf16.xpose.msra.mxu0 0
    %934 = vmatprep.subr.bf16.mxu0 0
    %935 = vmatpush2.bf16.xpose.msra.mxu0 0
    %936 = vmatprep.mubr.bf16.mxu0 0
    %937 = vmatmul.mubr.bf16.gmra.mxu0 %v899
    %v938 = vpop.f32.mrf.mxu0
    %v939 = vadd.f32 0.0, %v938
    %v940 = vpop.f32.mrf.mxu0
    %v941 = vpop.f32.mrf.mxu0
    %v942 = vpop.f32.mrf.mxu0
    %943 = vdwg.mxu0
    %944 = vrot.lane.b32.xlu0 %v344, 124
    %v945 = vpop.permute.xlu0 %944
    %946 = vrot.lane.b32.xlu0 %v346, 124
    %v947 = vpop.permute.xlu0 %946
    %v949 = vsel %vm349, %v945, 0
    %v952 = vsel %vm349, %v947, 0
    %954 = vmatprep.subr.bf16.mxu0 0
    %955 = vmatpush1.bf16.xpose.msra.mxu0 0
    %956 = vmatprep.subr.bf16.mxu0 0
    %957 = vmatpush1.bf16.xpose.msra.mxu0 0
    %958 = vmatprep.subr.bf16.mxu0 0
    %959 = vmatpush1.bf16.xpose.msra.mxu0 0
    %960 = vmatprep.subr.bf16.mxu0 0
    %961 = vmatpush1.bf16.xpose.msra.mxu0 0
    %962 = vmatprep.subr.bf16.mxu0 0
    %963 = vmatpush1.bf16.xpose.msra.mxu0 0
    %964 = vmatprep.subr.bf16.mxu0 0
    %965 = vmatpush1.bf16.xpose.msra.mxu0 0
    %966 = vmatprep.subr.bf16.mxu0 0
    %967 = vmatpush1.bf16.xpose.msra.mxu0 0
    %968 = vmatprep.subr.bf16.mxu0 0
    %969 = vmatpush1.bf16.xpose.msra.mxu0 %v952
    %970 = vmatprep.subr.bf16.mxu0 0
    %971 = vmatpush2.bf16.xpose.msra.mxu0 0
    %972 = vmatprep.subr.bf16.mxu0 0
    %973 = vmatpush2.bf16.xpose.msra.mxu0 0
    %974 = vmatprep.subr.bf16.mxu0 0
    %975 = vmatpush2.bf16.xpose.msra.mxu0 0
    %976 = vmatprep.subr.bf16.mxu0 0
    %977 = vmatpush2.bf16.xpose.msra.mxu0 0
    %978 = vmatprep.subr.bf16.mxu0 0
    %979 = vmatpush2.bf16.xpose.msra.mxu0 0
    %980 = vmatprep.subr.bf16.mxu0 0
    %981 = vmatpush2.bf16.xpose.msra.mxu0 0
    %982 = vmatprep.subr.bf16.mxu0 0
    %983 = vmatpush2.bf16.xpose.msra.mxu0 0
    %984 = vmatprep.subr.bf16.mxu0 0
    %985 = vmatpush2.bf16.xpose.msra.mxu0 0
    %986 = vmatprep.mubr.bf16.mxu0 0
    %987 = vmatmul.mubr.bf16.gmra.mxu0 %v949
    %v988 = vpop.f32.mrf.mxu0
    %v989 = vadd.f32 0.0, %v988
    %v990 = vpop.f32.mrf.mxu0
    %v991 = vpop.f32.mrf.mxu0
    %v992 = vpop.f32.mrf.mxu0
    %993 = vdwg.mxu0
    %v994 = vsel %vm442, %v939, -inf
    %995 = vmax.xlane.f32.xlu0 %v994
    %v996 = vpop.xlane.xlu0 %995
    %v997 = vsel %vm442, %v989, -inf
    %998 = vmax.xlane.f32.xlu0 %v997
    %v999 = vpop.xlane.xlu0 %998
    %v1000 = vsub.f32 %v939, %v996
    %v1001 = vsub.f32 %v989, %v999
    %v1002 = vmul.f32 %v1000, 1.442695
    %v1003 = vpow.pop %v1002
    %v1004 = vmul.f32 %v1001, 1.442695
    %v1005 = vpow.pop %v1004
    %v1006 = vsel %vm442, %v1003, 0.0
    %1007 = vadd.xlane.f32.xlu0 %v1006
    %v1008 = vpop.xlane.xlu0 %1007
    %v1009 = vsel %vm442, %v1005, 0.0
    %1010 = vadd.xlane.f32.xlu0 %v1009
    %v1011 = vpop.xlane.xlu0 %1010
    %v1012 = vrcp.pop %v1008
    %v1013 = vrcp.pop %v1011
    %v1014 = vmul.f32 %v1003, %v1012
    %v1015 = vmul.f32 %v1005, %v1013
    %v1016 = vpack.c.bf16 %v1014, %v1014
    %v1017 = vpack.c.bf16 %v1015, %v1015
    %1018 = vrot.lane.b32.xlu0 %v347, 124
    %v1019 = vpop.permute.xlu0 %1018
    %v1021 = vsel %vm467, %v1016, 0
    %v1024 = vsel %vm471, %v1019, 0
    %1026 = vmatprep.subr.bf16.mxu0 0
    %1027 = vmatpush1.bf16.msra.mxu0 0
    %1028 = vmatprep.subr.bf16.mxu0 0
    %1029 = vmatpush1.bf16.msra.mxu0 0
    %1030 = vmatprep.subr.bf16.mxu0 0
    %1031 = vmatpush1.bf16.msra.mxu0 0
    %1032 = vmatprep.subr.bf16.mxu0 0
    %1033 = vmatpush1.bf16.msra.mxu0 0
    %1034 = vmatprep.subr.bf16.mxu0 0
    %1035 = vmatpush1.bf16.msra.mxu0 0
    %1036 = vmatprep.subr.bf16.mxu0 0
    %1037 = vmatpush1.bf16.msra.mxu0 0
    %1038 = vmatprep.subr.bf16.mxu0 0
    %1039 = vmatpush1.bf16.msra.mxu0 0
    %1040 = vmatprep.subr.bf16.mxu0 0
    %1041 = vmatpush1.bf16.msra.mxu0 %v1024
    %1042 = vmatprep.subr.bf16.mxu0 0
    %1043 = vmatpush2.bf16.msra.mxu0 0
    %1044 = vmatprep.subr.bf16.mxu0 0
    %1045 = vmatpush2.bf16.msra.mxu0 0
    %1046 = vmatprep.subr.bf16.mxu0 0
    %1047 = vmatpush2.bf16.msra.mxu0 0
    %1048 = vmatprep.subr.bf16.mxu0 0
    %1049 = vmatpush2.bf16.msra.mxu0 0
    %1050 = vmatprep.subr.bf16.mxu0 0
    %1051 = vmatpush2.bf16.msra.mxu0 0
    %1052 = vmatprep.subr.bf16.mxu0 0
    %1053 = vmatpush2.bf16.msra.mxu0 0
    %1054 = vmatprep.subr.bf16.mxu0 0
    %1055 = vmatpush2.bf16.msra.mxu0 0
    %1056 = vmatprep.subr.bf16.mxu0 0
    %1057 = vmatpush2.bf16.msra.mxu0 0
    %1058 = vmatprep.mubr.bf16.mxu0 0
    %1059 = vmatmul.mubr.bf16.gmra.mxu0 %v1021
    %v1060 = vpop.f32.mrf.mxu0
    %v1061 = vadd.f32 0.0, %v1060
    %v1062 = vpop.f32.mrf.mxu0
    %v1063 = vpop.f32.mrf.mxu0
    %v1064 = vpop.f32.mrf.mxu0
    %1065 = vdwg.mxu0
    %1066 = vrot.lane.b32.xlu0 %v348, 124
    %v1067 = vpop.permute.xlu0 %1066
    %v1069 = vsel %vm467, %v1017, 0
    %v1072 = vsel %vm471, %v1067, 0
    %1074 = vmatprep.subr.bf16.mxu0 0
    %1075 = vmatpush1.bf16.msra.mxu0 0
    %1076 = vmatprep.subr.bf16.mxu0 0
    %1077 = vmatpush1.bf16.msra.mxu0 0
    %1078 = vmatprep.subr.bf16.mxu0 0
    %1079 = vmatpush1.bf16.msra.mxu0 0
    %1080 = vmatprep.subr.bf16.mxu0 0
    %1081 = vmatpush1.bf16.msra.mxu0 0
    %1082 = vmatprep.subr.bf16.mxu0 0
    %1083 = vmatpush1.bf16.msra.mxu0 0
    %1084 = vmatprep.subr.bf16.mxu0 0
    %1085 = vmatpush1.bf16.msra.mxu0 0
    %1086 = vmatprep.subr.bf16.mxu0 0
    %1087 = vmatpush1.bf16.msra.mxu0 0
    %1088 = vmatprep.subr.bf16.mxu0 0
    %1089 = vmatpush1.bf16.msra.mxu0 %v1072
    %1090 = vmatprep.subr.bf16.mxu0 0
    %1091 = vmatpush2.bf16.msra.mxu0 0
    %1092 = vmatprep.subr.bf16.mxu0 0
    %1093 = vmatpush2.bf16.msra.mxu0 0
    %1094 = vmatprep.subr.bf16.mxu0 0
    %1095 = vmatpush2.bf16.msra.mxu0 0
    %1096 = vmatprep.subr.bf16.mxu0 0
    %1097 = vmatpush2.bf16.msra.mxu0 0
    %1098 = vmatprep.subr.bf16.mxu0 0
    %1099 = vmatpush2.bf16.msra.mxu0 0
    %1100 = vmatprep.subr.bf16.mxu0 0
    %1101 = vmatpush2.bf16.msra.mxu0 0
    %1102 = vmatprep.subr.bf16.mxu0 0
    %1103 = vmatpush2.bf16.msra.mxu0 0
    %1104 = vmatprep.subr.bf16.mxu0 0
    %1105 = vmatpush2.bf16.msra.mxu0 0
    %1106 = vmatprep.mubr.bf16.mxu0 0
    %1107 = vmatmul.mubr.bf16.gmra.mxu0 %v1069
    %v1108 = vpop.f32.mrf.mxu0
    %v1109 = vadd.f32 0.0, %v1108
    %v1110 = vpop.f32.mrf.mxu0
    %v1111 = vpop.f32.mrf.mxu0
    %v1112 = vpop.f32.mrf.mxu0
    %1113 = vdwg.mxu0
    %v1116 = vcombine.low %v1061, %v1109
    %v1118 = vpack.c.bf16 %v1116, %v1116
    %v1119 = vrot.slane %v799, 2
    %v1121 = vsel %vm349, %v1118, 0
    %v1124 = vsel %vm804, %v1119, 0
    %1126 = vmatprep.subr.bf16.mxu0 0
    %1127 = vmatpush1.bf16.msra.mxu0 0
    %1128 = vmatprep.subr.bf16.mxu0 0
    %1129 = vmatpush1.bf16.msra.mxu0 0
    %1130 = vmatprep.subr.bf16.mxu0 0
    %1131 = vmatpush1.bf16.msra.mxu0 0
    %1132 = vmatprep.subr.bf16.mxu0 0
    %1133 = vmatpush1.bf16.msra.mxu0 0
    %1134 = vmatprep.subr.bf16.mxu0 0
    %1135 = vmatpush1.bf16.msra.mxu0 0
    %1136 = vmatprep.subr.bf16.mxu0 0
    %1137 = vmatpush1.bf16.msra.mxu0 0
    %1138 = vmatprep.subr.bf16.mxu0 0
    %1139 = vmatpush1.bf16.msra.mxu0 0
    %1140 = vmatprep.subr.bf16.mxu0 0
    %1141 = vmatpush1.bf16.msra.mxu0 %v1124
    %1142 = vmatprep.subr.bf16.mxu0 0
    %1143 = vmatpush2.bf16.msra.mxu0 0
    %1144 = vmatprep.subr.bf16.mxu0 0
    %1145 = vmatpush2.bf16.msra.mxu0 0
    %1146 = vmatprep.subr.bf16.mxu0 0
    %1147 = vmatpush2.bf16.msra.mxu0 0
    %1148 = vmatprep.subr.bf16.mxu0 0
    %1149 = vmatpush2.bf16.msra.mxu0 0
    %1150 = vmatprep.subr.bf16.mxu0 0
    %1151 = vmatpush2.bf16.msra.mxu0 0
    %1152 = vmatprep.subr.bf16.mxu0 0
    %1153 = vmatpush2.bf16.msra.mxu0 0
    %1154 = vmatprep.subr.bf16.mxu0 0
    %1155 = vmatpush2.bf16.msra.mxu0 0
    %1156 = vmatprep.subr.bf16.mxu0 0
    %1157 = vmatpush2.bf16.msra.mxu0 0
    %1158 = vmatprep.mubr.bf16.mxu0 0
    %1159 = vmatmul.mubr.bf16.gmra.mxu0 %v1121
    %v1160 = vpop.f32.mrf.mxu0
    %v1161 = vadd.f32 0.0, %v1160
    %v1162 = vpop.f32.mrf.mxu0
    %v1163 = vpop.f32.mrf.mxu0
    %v1164 = vpop.f32.mrf.mxu0
    %1165 = vdwg.mxu0
    %v1166 = vadd.f32 %v889, %v1161
    %1167 = vrot.lane.b32.xlu0 %v343, 122
    %v1168 = vpop.permute.xlu0 %1167
    %1169 = vrot.lane.b32.xlu0 %v345, 122
    %v1170 = vpop.permute.xlu0 %1169
    %v1172 = vsel %vm349, %v1168, 0
    %v1175 = vsel %vm349, %v1170, 0
    %1177 = vmatprep.subr.bf16.mxu0 0
    %1178 = vmatpush1.bf16.xpose.msra.mxu0 0
    %1179 = vmatprep.subr.bf16.mxu0 0
    %1180 = vmatpush1.bf16.xpose.msra.mxu0 0
    %1181 = vmatprep.subr.bf16.mxu0 0
    %1182 = vmatpush1.bf16.xpose.msra.mxu0 0
    %1183 = vmatprep.subr.bf16.mxu0 0
    %1184 = vmatpush1.bf16.xpose.msra.mxu0 0
    %1185 = vmatprep.subr.bf16.mxu0 0
    %1186 = vmatpush1.bf16.xpose.msra.mxu0 0
    %1187 = vmatprep.subr.bf16.mxu0 0
    %1188 = vmatpush1.bf16.xpose.msra.mxu0 0
    %1189 = vmatprep.subr.bf16.mxu0 0
    %1190 = vmatpush1.bf16.xpose.msra.mxu0 0
    %1191 = vmatprep.subr.bf16.mxu0 0
    %1192 = vmatpush1.bf16.xpose.msra.mxu0 %v1175
    %1193 = vmatprep.subr.bf16.mxu0 0
    %1194 = vmatpush2.bf16.xpose.msra.mxu0 0
    %1195 = vmatprep.subr.bf16.mxu0 0
    %1196 = vmatpush2.bf16.xpose.msra.mxu0 0
    %1197 = vmatprep.subr.bf16.mxu0 0
    %1198 = vmatpush2.bf16.xpose.msra.mxu0 0
    %1199 = vmatprep.subr.bf16.mxu0 0
    %1200 = vmatpush2.bf16.xpose.msra.mxu0 0
    %1201 = vmatprep.subr.bf16.mxu0 0
    %1202 = vmatpush2.bf16.xpose.msra.mxu0 0
    %1203 = vmatprep.subr.bf16.mxu0 0
    %1204 = vmatpush2.bf16.xpose.msra.mxu0 0
    %1205 = vmatprep.subr.bf16.mxu0 0
    %1206 = vmatpush2.bf16.xpose.msra.mxu0 0
    %1207 = vmatprep.subr.bf16.mxu0 0
    %1208 = vmatpush2.bf16.xpose.msra.mxu0 0
    %1209 = vmatprep.mubr.bf16.mxu0 0
    %1210 = vmatmul.mubr.bf16.gmra.mxu0 %v1172
    %v1211 = vpop.f32.mrf.mxu0
    %v1212 = vadd.f32 0.0, %v1211
    %v1213 = vpop.f32.mrf.mxu0
    %v1214 = vpop.f32.mrf.mxu0
    %v1215 = vpop.f32.mrf.mxu0
    %1216 = vdwg.mxu0
    %1217 = vrot.lane.b32.xlu0 %v344, 122
    %v1218 = vpop.permute.xlu0 %1217
    %1219 = vrot.lane.b32.xlu0 %v346, 122
    %v1220 = vpop.permute.xlu0 %1219
    %v1222 = vsel %vm349, %v1218, 0
    %v1225 = vsel %vm349, %v1220, 0
    %1227 = vmatprep.subr.bf16.mxu0 0
    %1228 = vmatpush1.bf16.xpose.msra.mxu0 0
    %1229 = vmatprep.subr.bf16.mxu0 0
    %1230 = vmatpush1.bf16.xpose.msra.mxu0 0
    %1231 = vmatprep.subr.bf16.mxu0 0
    %1232 = vmatpush1.bf16.xpose.msra.mxu0 0
    %1233 = vmatprep.subr.bf16.mxu0 0
    %1234 = vmatpush1.bf16.xpose.msra.mxu0 0
    %1235 = vmatprep.subr.bf16.mxu0 0
    %1236 = vmatpush1.bf16.xpose.msra.mxu0 0
    %1237 = vmatprep.subr.bf16.mxu0 0
    %1238 = vmatpush1.bf16.xpose.msra.mxu0 0
    %1239 = vmatprep.subr.bf16.mxu0 0
    %1240 = vmatpush1.bf16.xpose.msra.mxu0 0
    %1241 = vmatprep.subr.bf16.mxu0 0
    %1242 = vmatpush1.bf16.xpose.msra.mxu0 %v1225
    %1243 = vmatprep.subr.bf16.mxu0 0
    %1244 = vmatpush2.bf16.xpose.msra.mxu0 0
    %1245 = vmatprep.subr.bf16.mxu0 0
    %1246 = vmatpush2.bf16.xpose.msra.mxu0 0
    %1247 = vmatprep.subr.bf16.mxu0 0
    %1248 = vmatpush2.bf16.xpose.msra.mxu0 0
    %1249 = vmatprep.subr.bf16.mxu0 0
    %1250 = vmatpush2.bf16.xpose.msra.mxu0 0
    %1251 = vmatprep.subr.bf16.mxu0 0
    %1252 = vmatpush2.bf16.xpose.msra.mxu0 0
    %1253 = vmatprep.subr.bf16.mxu0 0
    %1254 = vmatpush2.bf16.xpose.msra.mxu0 0
    %1255 = vmatprep.subr.bf16.mxu0 0
    %1256 = vmatpush2.bf16.xpose.msra.mxu0 0
    %1257 = vmatprep.subr.bf16.mxu0 0
    %1258 = vmatpush2.bf16.xpose.msra.mxu0 0
    %1259 = vmatprep.mubr.bf16.mxu0 0
    %1260 = vmatmul.mubr.bf16.gmra.mxu0 %v1222
    %v1261 = vpop.f32.mrf.mxu0
    %v1262 = vadd.f32 0.0, %v1261
    %v1263 = vpop.f32.mrf.mxu0
    %v1264 = vpop.f32.mrf.mxu0
    %v1265 = vpop.f32.mrf.mxu0
    %1266 = vdwg.mxu0
    %v1267 = vsel %vm442, %v1212, -inf
    %1268 = vmax.xlane.f32.xlu0 %v1267
    %v1269 = vpop.xlane.xlu0 %1268
    %v1270 = vsel %vm442, %v1262, -inf
    %1271 = vmax.xlane.f32.xlu0 %v1270
    %v1272 = vpop.xlane.xlu0 %1271
    %v1273 = vsub.f32 %v1212, %v1269
    %v1274 = vsub.f32 %v1262, %v1272
    %v1275 = vmul.f32 %v1273, 1.442695
    %v1276 = vpow.pop %v1275
    %v1277 = vmul.f32 %v1274, 1.442695
    %v1278 = vpow.pop %v1277
    %v1279 = vsel %vm442, %v1276, 0.0
    %1280 = vadd.xlane.f32.xlu0 %v1279
    %v1281 = vpop.xlane.xlu0 %1280
    %v1282 = vsel %vm442, %v1278, 0.0
    %1283 = vadd.xlane.f32.xlu0 %v1282
    %v1284 = vpop.xlane.xlu0 %1283
    %v1285 = vrcp.pop %v1281
    %v1286 = vrcp.pop %v1284
    %v1287 = vmul.f32 %v1276, %v1285
    %v1288 = vmul.f32 %v1278, %v1286
    %v1289 = vpack.c.bf16 %v1287, %v1287
    %v1290 = vpack.c.bf16 %v1288, %v1288
    %1291 = vrot.lane.b32.xlu0 %v347, 122
    %v1292 = vpop.permute.xlu0 %1291
    %v1294 = vsel %vm467, %v1289, 0
    %v1297 = vsel %vm471, %v1292, 0
    %1299 = vmatprep.subr.bf16.mxu0 0
    %1300 = vmatpush1.bf16.msra.mxu0 0
    %1301 = vmatprep.subr.bf16.mxu0 0
    %1302 = vmatpush1.bf16.msra.mxu0 0
    %1303 = vmatprep.subr.bf16.mxu0 0
    %1304 = vmatpush1.bf16.msra.mxu0 0
    %1305 = vmatprep.subr.bf16.mxu0 0
    %1306 = vmatpush1.bf16.msra.mxu0 0
    %1307 = vmatprep.subr.bf16.mxu0 0
    %1308 = vmatpush1.bf16.msra.mxu0 0
    %1309 = vmatprep.subr.bf16.mxu0 0
    %1310 = vmatpush1.bf16.msra.mxu0 0
    %1311 = vmatprep.subr.bf16.mxu0 0
    %1312 = vmatpush1.bf16.msra.mxu0 0
    %1313 = vmatprep.subr.bf16.mxu0 0
    %1314 = vmatpush1.bf16.msra.mxu0 %v1297
    %1315 = vmatprep.subr.bf16.mxu0 0
    %1316 = vmatpush2.bf16.msra.mxu0 0
    %1317 = vmatprep.subr.bf16.mxu0 0
    %1318 = vmatpush2.bf16.msra.mxu0 0
    %1319 = vmatprep.subr.bf16.mxu0 0
    %1320 = vmatpush2.bf16.msra.mxu0 0
    %1321 = vmatprep.subr.bf16.mxu0 0
    %1322 = vmatpush2.bf16.msra.mxu0 0
    %1323 = vmatprep.subr.bf16.mxu0 0
    %1324 = vmatpush2.bf16.msra.mxu0 0
    %1325 = vmatprep.subr.bf16.mxu0 0
    %1326 = vmatpush2.bf16.msra.mxu0 0
    %1327 = vmatprep.subr.bf16.mxu0 0
    %1328 = vmatpush2.bf16.msra.mxu0 0
    %1329 = vmatprep.subr.bf16.mxu0 0
    %1330 = vmatpush2.bf16.msra.mxu0 0
    %1331 = vmatprep.mubr.bf16.mxu0 0
    %1332 = vmatmul.mubr.bf16.gmra.mxu0 %v1294
    %v1333 = vpop.f32.mrf.mxu0
    %v1334 = vadd.f32 0.0, %v1333
    %v1335 = vpop.f32.mrf.mxu0
    %v1336 = vpop.f32.mrf.mxu0
    %v1337 = vpop.f32.mrf.mxu0
    %1338 = vdwg.mxu0
    %1339 = vrot.lane.b32.xlu0 %v348, 122
    %v1340 = vpop.permute.xlu0 %1339
    %v1342 = vsel %vm467, %v1290, 0
    %v1345 = vsel %vm471, %v1340, 0
    %1347 = vmatprep.subr.bf16.mxu0 0
    %1348 = vmatpush1.bf16.msra.mxu0 0
    %1349 = vmatprep.subr.bf16.mxu0 0
    %1350 = vmatpush1.bf16.msra.mxu0 0
    %1351 = vmatprep.subr.bf16.mxu0 0
    %1352 = vmatpush1.bf16.msra.mxu0 0
    %1353 = vmatprep.subr.bf16.mxu0 0
    %1354 = vmatpush1.bf16.msra.mxu0 0
    %1355 = vmatprep.subr.bf16.mxu0 0
    %1356 = vmatpush1.bf16.msra.mxu0 0
    %1357 = vmatprep.subr.bf16.mxu0 0
    %1358 = vmatpush1.bf16.msra.mxu0 0
    %1359 = vmatprep.subr.bf16.mxu0 0
    %1360 = vmatpush1.bf16.msra.mxu0 0
    %1361 = vmatprep.subr.bf16.mxu0 0
    %1362 = vmatpush1.bf16.msra.mxu0 %v1345
    %1363 = vmatprep.subr.bf16.mxu0 0
    %1364 = vmatpush2.bf16.msra.mxu0 0
    %1365 = vmatprep.subr.bf16.mxu0 0
    %1366 = vmatpush2.bf16.msra.mxu0 0
    %1367 = vmatprep.subr.bf16.mxu0 0
    %1368 = vmatpush2.bf16.msra.mxu0 0
    %1369 = vmatprep.subr.bf16.mxu0 0
    %1370 = vmatpush2.bf16.msra.mxu0 0
    %1371 = vmatprep.subr.bf16.mxu0 0
    %1372 = vmatpush2.bf16.msra.mxu0 0
    %1373 = vmatprep.subr.bf16.mxu0 0
    %1374 = vmatpush2.bf16.msra.mxu0 0
    %1375 = vmatprep.subr.bf16.mxu0 0
    %1376 = vmatpush2.bf16.msra.mxu0 0
    %1377 = vmatprep.subr.bf16.mxu0 0
    %1378 = vmatpush2.bf16.msra.mxu0 0
    %1379 = vmatprep.mubr.bf16.mxu0 0
    %1380 = vmatmul.mubr.bf16.gmra.mxu0 %v1342
    %v1381 = vpop.f32.mrf.mxu0
    %v1382 = vadd.f32 0.0, %v1381
    %v1383 = vpop.f32.mrf.mxu0
    %v1384 = vpop.f32.mrf.mxu0
    %v1385 = vpop.f32.mrf.mxu0
    %1386 = vdwg.mxu0
    %v1389 = vcombine.low %v1334, %v1382
    %v1391 = vpack.c.bf16 %v1389, %v1389
    %v1392 = vrot.slane %v799, 3
    %v1394 = vsel %vm349, %v1391, 0
    %v1397 = vsel %vm804, %v1392, 0
    %1399 = vmatprep.subr.bf16.mxu0 0
    %1400 = vmatpush1.bf16.msra.mxu0 0
    %1401 = vmatprep.subr.bf16.mxu0 0
    %1402 = vmatpush1.bf16.msra.mxu0 0
    %1403 = vmatprep.subr.bf16.mxu0 0
    %1404 = vmatpush1.bf16.msra.mxu0 0
    %1405 = vmatprep.subr.bf16.mxu0 0
    %1406 = vmatpush1.bf16.msra.mxu0 0
    %1407 = vmatprep.subr.bf16.mxu0 0
    %1408 = vmatpush1.bf16.msra.mxu0 0
    %1409 = vmatprep.subr.bf16.mxu0 0
    %1410 = vmatpush1.bf16.msra.mxu0 0
    %1411 = vmatprep.subr.bf16.mxu0 0
    %1412 = vmatpush1.bf16.msra.mxu0 0
    %1413 = vmatprep.subr.bf16.mxu0 0
    %1414 = vmatpush1.bf16.msra.mxu0 %v1397
    %1415 = vmatprep.subr.bf16.mxu0 0
    %1416 = vmatpush2.bf16.msra.mxu0 0
    %1417 = vmatprep.subr.bf16.mxu0 0
    %1418 = vmatpush2.bf16.msra.mxu0 0
    %1419 = vmatprep.subr.bf16.mxu0 0
    %1420 = vmatpush2.bf16.msra.mxu0 0
    %1421 = vmatprep.subr.bf16.mxu0 0
    %1422 = vmatpush2.bf16.msra.mxu0 0
    %1423 = vmatprep.subr.bf16.mxu0 0
    %1424 = vmatpush2.bf16.msra.mxu0 0
    %1425 = vmatprep.subr.bf16.mxu0 0
    %1426 = vmatpush2.bf16.msra.mxu0 0
    %1427 = vmatprep.subr.bf16.mxu0 0
    %1428 = vmatpush2.bf16.msra.mxu0 0
    %1429 = vmatprep.subr.bf16.mxu0 0
    %1430 = vmatpush2.bf16.msra.mxu0 0
    %1431 = vmatprep.mubr.bf16.mxu0 0
    %1432 = vmatmul.mubr.bf16.gmra.mxu0 %v1394
    %v1433 = vpop.f32.mrf.mxu0
    %v1434 = vadd.f32 0.0, %v1433
    %v1435 = vpop.f32.mrf.mxu0
    %v1436 = vpop.f32.mrf.mxu0
    %v1437 = vpop.f32.mrf.mxu0
    %1438 = vdwg.mxu0
    %v1439 = vadd.f32 %v1166, %v1434
    %1440 = vrot.lane.b32.xlu0 %v343, 120
    %v1441 = vpop.permute.xlu0 %1440
    %1442 = vrot.lane.b32.xlu0 %v345, 120
    %v1443 = vpop.permute.xlu0 %1442
    %v1445 = vsel %vm349, %v1441, 0
    %v1448 = vsel %vm349, %v1443, 0
    %1450 = vmatprep.subr.bf16.mxu0 0
    %1451 = vmatpush1.bf16.xpose.msra.mxu0 0
    %1452 = vmatprep.subr.bf16.mxu0 0
    %1453 = vmatpush1.bf16.xpose.msra.mxu0 0
    %1454 = vmatprep.subr.bf16.mxu0 0
    %1455 = vmatpush1.bf16.xpose.msra.mxu0 0
    %1456 = vmatprep.subr.bf16.mxu0 0
    %1457 = vmatpush1.bf16.xpose.msra.mxu0 0
    %1458 = vmatprep.subr.bf16.mxu0 0
    %1459 = vmatpush1.bf16.xpose.msra.mxu0 0
    %1460 = vmatprep.subr.bf16.mxu0 0
    %1461 = vmatpush1.bf16.xpose.msra.mxu0 0
    %1462 = vmatprep.subr.bf16.mxu0 0
    %1463 = vmatpush1.bf16.xpose.msra.mxu0 0
    %1464 = vmatprep.subr.bf16.mxu0 0
    %1465 = vmatpush1.bf16.xpose.msra.mxu0 %v1448
    %1466 = vmatprep.subr.bf16.mxu0 0
    %1467 = vmatpush2.bf16.xpose.msra.mxu0 0
    %1468 = vmatprep.subr.bf16.mxu0 0
    %1469 = vmatpush2.bf16.xpose.msra.mxu0 0
    %1470 = vmatprep.subr.bf16.mxu0 0
    %1471 = vmatpush2.bf16.xpose.msra.mxu0 0
    %1472 = vmatprep.subr.bf16.mxu0 0
    %1473 = vmatpush2.bf16.xpose.msra.mxu0 0
    %1474 = vmatprep.subr.bf16.mxu0 0
    %1475 = vmatpush2.bf16.xpose.msra.mxu0 0
    %1476 = vmatprep.subr.bf16.mxu0 0
    %1477 = vmatpush2.bf16.xpose.msra.mxu0 0
    %1478 = vmatprep.subr.bf16.mxu0 0
    %1479 = vmatpush2.bf16.xpose.msra.mxu0 0
    %1480 = vmatprep.subr.bf16.mxu0 0
    %1481 = vmatpush2.bf16.xpose.msra.mxu0 0
    %1482 = vmatprep.mubr.bf16.mxu0 0
    %1483 = vmatmul.mubr.bf16.gmra.mxu0 %v1445
    %v1484 = vpop.f32.mrf.mxu0
    %v1485 = vadd.f32 0.0, %v1484
    %v1486 = vpop.f32.mrf.mxu0
    %v1487 = vpop.f32.mrf.mxu0
    %v1488 = vpop.f32.mrf.mxu0
    %1489 = vdwg.mxu0
    %1490 = vrot.lane.b32.xlu0 %v344, 120
    %v1491 = vpop.permute.xlu0 %1490
    %1492 = vrot.lane.b32.xlu0 %v346, 120
    %v1493 = vpop.permute.xlu0 %1492
    %v1495 = vsel %vm349, %v1491, 0
    %v1498 = vsel %vm349, %v1493, 0
    %1500 = vmatprep.subr.bf16.mxu0 0
    %1501 = vmatpush1.bf16.xpose.msra.mxu0 0
    %1502 = vmatprep.subr.bf16.mxu0 0
    %1503 = vmatpush1.bf16.xpose.msra.mxu0 0
    %1504 = vmatprep.subr.bf16.mxu0 0
    %1505 = vmatpush1.bf16.xpose.msra.mxu0 0
    %1506 = vmatprep.subr.bf16.mxu0 0
    %1507 = vmatpush1.bf16.xpose.msra.mxu0 0
    %1508 = vmatprep.subr.bf16.mxu0 0
    %1509 = vmatpush1.bf16.xpose.msra.mxu0 0
    %1510 = vmatprep.subr.bf16.mxu0 0
    %1511 = vmatpush1.bf16.xpose.msra.mxu0 0
    %1512 = vmatprep.subr.bf16.mxu0 0
    %1513 = vmatpush1.bf16.xpose.msra.mxu0 0
    %1514 = vmatprep.subr.bf16.mxu0 0
    %1515 = vmatpush1.bf16.xpose.msra.mxu0 %v1498
    %1516 = vmatprep.subr.bf16.mxu0 0
    %1517 = vmatpush2.bf16.xpose.msra.mxu0 0
    %1518 = vmatprep.subr.bf16.mxu0 0
    %1519 = vmatpush2.bf16.xpose.msra.mxu0 0
    %1520 = vmatprep.subr.bf16.mxu0 0
    %1521 = vmatpush2.bf16.xpose.msra.mxu0 0
    %1522 = vmatprep.subr.bf16.mxu0 0
    %1523 = vmatpush2.bf16.xpose.msra.mxu0 0
    %1524 = vmatprep.subr.bf16.mxu0 0
    %1525 = vmatpush2.bf16.xpose.msra.mxu0 0
    %1526 = vmatprep.subr.bf16.mxu0 0
    %1527 = vmatpush2.bf16.xpose.msra.mxu0 0
    %1528 = vmatprep.subr.bf16.mxu0 0
    %1529 = vmatpush2.bf16.xpose.msra.mxu0 0
    %1530 = vmatprep.subr.bf16.mxu0 0
    %1531 = vmatpush2.bf16.xpose.msra.mxu0 0
    %1532 = vmatprep.mubr.bf16.mxu0 0
    %1533 = vmatmul.mubr.bf16.gmra.mxu0 %v1495
    %v1534 = vpop.f32.mrf.mxu0
    %v1535 = vadd.f32 0.0, %v1534
    %v1536 = vpop.f32.mrf.mxu0
    %v1537 = vpop.f32.mrf.mxu0
    %v1538 = vpop.f32.mrf.mxu0
    %1539 = vdwg.mxu0
    %v1540 = vsel %vm442, %v1485, -inf
    %1541 = vmax.xlane.f32.xlu0 %v1540
    %v1542 = vpop.xlane.xlu0 %1541
    %v1543 = vsel %vm442, %v1535, -inf
    %1544 = vmax.xlane.f32.xlu0 %v1543
    %v1545 = vpop.xlane.xlu0 %1544
    %v1546 = vsub.f32 %v1485, %v1542
    %v1547 = vsub.f32 %v1535, %v1545
    %v1548 = vmul.f32 %v1546, 1.442695
    %v1549 = vpow.pop %v1548
    %v1550 = vmul.f32 %v1547, 1.442695
    %v1551 = vpow.pop %v1550
    %v1552 = vsel %vm442, %v1549, 0.0
    %1553 = vadd.xlane.f32.xlu0 %v1552
    %v1554 = vpop.xlane.xlu0 %1553
    %v1555 = vsel %vm442, %v1551, 0.0
    %1556 = vadd.xlane.f32.xlu0 %v1555
    %v1557 = vpop.xlane.xlu0 %1556
    %v1558 = vrcp.pop %v1554
    %v1559 = vrcp.pop %v1557
    %v1560 = vmul.f32 %v1549, %v1558
    %v1561 = vmul.f32 %v1551, %v1559
    %v1562 = vpack.c.bf16 %v1560, %v1560
    %v1563 = vpack.c.bf16 %v1561, %v1561
    %1564 = vrot.lane.b32.xlu0 %v347, 120
    %v1565 = vpop.permute.xlu0 %1564
    %v1567 = vsel %vm467, %v1562, 0
    %v1570 = vsel %vm471, %v1565, 0
    %1572 = vmatprep.subr.bf16.mxu0 0
    %1573 = vmatpush1.bf16.msra.mxu0 0
    %1574 = vmatprep.subr.bf16.mxu0 0
    %1575 = vmatpush1.bf16.msra.mxu0 0
    %1576 = vmatprep.subr.bf16.mxu0 0
    %1577 = vmatpush1.bf16.msra.mxu0 0
    %1578 = vmatprep.subr.bf16.mxu0 0
    %1579 = vmatpush1.bf16.msra.mxu0 0
    %1580 = vmatprep.subr.bf16.mxu0 0
    %1581 = vmatpush1.bf16.msra.mxu0 0
    %1582 = vmatprep.subr.bf16.mxu0 0
    %1583 = vmatpush1.bf16.msra.mxu0 0
    %1584 = vmatprep.subr.bf16.mxu0 0
    %1585 = vmatpush1.bf16.msra.mxu0 0
    %1586 = vmatprep.subr.bf16.mxu0 0
    %1587 = vmatpush1.bf16.msra.mxu0 %v1570
    %1588 = vmatprep.subr.bf16.mxu0 0
    %1589 = vmatpush2.bf16.msra.mxu0 0
    %1590 = vmatprep.subr.bf16.mxu0 0
    %1591 = vmatpush2.bf16.msra.mxu0 0
    %1592 = vmatprep.subr.bf16.mxu0 0
    %1593 = vmatpush2.bf16.msra.mxu0 0
    %1594 = vmatprep.subr.bf16.mxu0 0
    %1595 = vmatpush2.bf16.msra.mxu0 0
    %1596 = vmatprep.subr.bf16.mxu0 0
    %1597 = vmatpush2.bf16.msra.mxu0 0
    %1598 = vmatprep.subr.bf16.mxu0 0
    %1599 = vmatpush2.bf16.msra.mxu0 0
    %1600 = vmatprep.subr.bf16.mxu0 0
    %1601 = vmatpush2.bf16.msra.mxu0 0
    %1602 = vmatprep.subr.bf16.mxu0 0
    %1603 = vmatpush2.bf16.msra.mxu0 0
    %1604 = vmatprep.mubr.bf16.mxu0 0
    %1605 = vmatmul.mubr.bf16.gmra.mxu0 %v1567
    %v1606 = vpop.f32.mrf.mxu0
    %v1607 = vadd.f32 0.0, %v1606
    %v1608 = vpop.f32.mrf.mxu0
    %v1609 = vpop.f32.mrf.mxu0
    %v1610 = vpop.f32.mrf.mxu0
    %1611 = vdwg.mxu0
    %1612 = vrot.lane.b32.xlu0 %v348, 120
    %v1613 = vpop.permute.xlu0 %1612
    %v1615 = vsel %vm467, %v1563, 0
    %v1618 = vsel %vm471, %v1613, 0
    %1620 = vmatprep.subr.bf16.mxu0 0
    %1621 = vmatpush1.bf16.msra.mxu0 0
    %1622 = vmatprep.subr.bf16.mxu0 0
    %1623 = vmatpush1.bf16.msra.mxu0 0
    %1624 = vmatprep.subr.bf16.mxu0 0
    %1625 = vmatpush1.bf16.msra.mxu0 0
    %1626 = vmatprep.subr.bf16.mxu0 0
    %1627 = vmatpush1.bf16.msra.mxu0 0
    %1628 = vmatprep.subr.bf16.mxu0 0
    %1629 = vmatpush1.bf16.msra.mxu0 0
    %1630 = vmatprep.subr.bf16.mxu0 0
    %1631 = vmatpush1.bf16.msra.mxu0 0
    %1632 = vmatprep.subr.bf16.mxu0 0
    %1633 = vmatpush1.bf16.msra.mxu0 0
    %1634 = vmatprep.subr.bf16.mxu0 0
    %1635 = vmatpush1.bf16.msra.mxu0 %v1618
    %1636 = vmatprep.subr.bf16.mxu0 0
    %1637 = vmatpush2.bf16.msra.mxu0 0
    %1638 = vmatprep.subr.bf16.mxu0 0
    %1639 = vmatpush2.bf16.msra.mxu0 0
    %1640 = vmatprep.subr.bf16.mxu0 0
    %1641 = vmatpush2.bf16.msra.mxu0 0
    %1642 = vmatprep.subr.bf16.mxu0 0
    %1643 = vmatpush2.bf16.msra.mxu0 0
    %1644 = vmatprep.subr.bf16.mxu0 0
    %1645 = vmatpush2.bf16.msra.mxu0 0
    %1646 = vmatprep.subr.bf16.mxu0 0
    %1647 = vmatpush2.bf16.msra.mxu0 0
    %1648 = vmatprep.subr.bf16.mxu0 0
    %1649 = vmatpush2.bf16.msra.mxu0 0
    %1650 = vmatprep.subr.bf16.mxu0 0
    %1651 = vmatpush2.bf16.msra.mxu0 0
    %1652 = vmatprep.mubr.bf16.mxu0 0
    %1653 = vmatmul.mubr.bf16.gmra.mxu0 %v1615
    %v1654 = vpop.f32.mrf.mxu0
    %v1655 = vadd.f32 0.0, %v1654
    %v1656 = vpop.f32.mrf.mxu0
    %v1657 = vpop.f32.mrf.mxu0
    %v1658 = vpop.f32.mrf.mxu0
    %1659 = vdwg.mxu0
    %v1662 = vcombine.low %v1607, %v1655
    %v1664 = vpack.c.bf16 %v1662, %v1662
    %v1666 = vsel %vm349, %v1664, 0
    %v1669 = vsel %vm804, %v80, 0
    %1671 = vmatprep.subr.bf16.mxu0 0
    %1672 = vmatpush1.bf16.msra.mxu0 0
    %1673 = vmatprep.subr.bf16.mxu0 0
    %1674 = vmatpush1.bf16.msra.mxu0 0
    %1675 = vmatprep.subr.bf16.mxu0 0
    %1676 = vmatpush1.bf16.msra.mxu0 0
    %1677 = vmatprep.subr.bf16.mxu0 0
    %1678 = vmatpush1.bf16.msra.mxu0 0
    %1679 = vmatprep.subr.bf16.mxu0 0
    %1680 = vmatpush1.bf16.msra.mxu0 0
    %1681 = vmatprep.subr.bf16.mxu0 0
    %1682 = vmatpush1.bf16.msra.mxu0 0
    %1683 = vmatprep.subr.bf16.mxu0 0
    %1684 = vmatpush1.bf16.msra.mxu0 0
    %1685 = vmatprep.subr.bf16.mxu0 0
    %1686 = vmatpush1.bf16.msra.mxu0 %v1669
    %1687 = vmatprep.subr.bf16.mxu0 0
    %1688 = vmatpush2.bf16.msra.mxu0 0
    %1689 = vmatprep.subr.bf16.mxu0 0
    %1690 = vmatpush2.bf16.msra.mxu0 0
    %1691 = vmatprep.subr.bf16.mxu0 0
    %1692 = vmatpush2.bf16.msra.mxu0 0
    %1693 = vmatprep.subr.bf16.mxu0 0
    %1694 = vmatpush2.bf16.msra.mxu0 0
    %1695 = vmatprep.subr.bf16.mxu0 0
    %1696 = vmatpush2.bf16.msra.mxu0 0
    %1697 = vmatprep.subr.bf16.mxu0 0
    %1698 = vmatpush2.bf16.msra.mxu0 0
    %1699 = vmatprep.subr.bf16.mxu0 0
    %1700 = vmatpush2.bf16.msra.mxu0 0
    %1701 = vmatprep.subr.bf16.mxu0 0
    %1702 = vmatpush2.bf16.msra.mxu0 0
    %1703 = vmatprep.mubr.bf16.mxu0 0
    %1704 = vmatmul.mubr.bf16.gmra.mxu0 %v1666
    %v1705 = vpop.f32.mrf.mxu0
    %v1706 = vadd.f32 0.0, %v1705
    %v1707 = vpop.f32.mrf.mxu0
    %v1708 = vpop.f32.mrf.mxu0
    %v1709 = vpop.f32.mrf.mxu0
    %1710 = vdwg.mxu0
    %v1711 = vadd.f32 %v1439, %v1706
    %1712 = vrot.lane.b32.xlu0 %v343, 118
    %v1713 = vpop.permute.xlu0 %1712
    %1714 = vrot.lane.b32.xlu0 %v345, 118
    %v1715 = vpop.permute.xlu0 %1714
    %v1717 = vsel %vm349, %v1713, 0
    %v1720 = vsel %vm349, %v1715, 0
    %1722 = vmatprep.subr.bf16.mxu0 0
    %1723 = vmatpush1.bf16.xpose.msra.mxu0 0
    %1724 = vmatprep.subr.bf16.mxu0 0
    %1725 = vmatpush1.bf16.xpose.msra.mxu0 0
    %1726 = vmatprep.subr.bf16.mxu0 0
    %1727 = vmatpush1.bf16.xpose.msra.mxu0 0
    %1728 = vmatprep.subr.bf16.mxu0 0
    %1729 = vmatpush1.bf16.xpose.msra.mxu0 0
    %1730 = vmatprep.subr.bf16.mxu0 0
    %1731 = vmatpush1.bf16.xpose.msra.mxu0 0
    %1732 = vmatprep.subr.bf16.mxu0 0
    %1733 = vmatpush1.bf16.xpose.msra.mxu0 0
    %1734 = vmatprep.subr.bf16.mxu0 0
    %1735 = vmatpush1.bf16.xpose.msra.mxu0 0
    %1736 = vmatprep.subr.bf16.mxu0 0
    %1737 = vmatpush1.bf16.xpose.msra.mxu0 %v1720
    %1738 = vmatprep.subr.bf16.mxu0 0
    %1739 = vmatpush2.bf16.xpose.msra.mxu0 0
    %1740 = vmatprep.subr.bf16.mxu0 0
    %1741 = vmatpush2.bf16.xpose.msra.mxu0 0
    %1742 = vmatprep.subr.bf16.mxu0 0
    %1743 = vmatpush2.bf16.xpose.msra.mxu0 0
    %1744 = vmatprep.subr.bf16.mxu0 0
    %1745 = vmatpush2.bf16.xpose.msra.mxu0 0
    %1746 = vmatprep.subr.bf16.mxu0 0
    %1747 = vmatpush2.bf16.xpose.msra.mxu0 0
    %1748 = vmatprep.subr.bf16.mxu0 0
    %1749 = vmatpush2.bf16.xpose.msra.mxu0 0
    %1750 = vmatprep.subr.bf16.mxu0 0
    %1751 = vmatpush2.bf16.xpose.msra.mxu0 0
    %1752 = vmatprep.subr.bf16.mxu0 0
    %1753 = vmatpush2.bf16.xpose.msra.mxu0 0
    %1754 = vmatprep.mubr.bf16.mxu0 0
    %1755 = vmatmul.mubr.bf16.gmra.mxu0 %v1717
    %v1756 = vpop.f32.mrf.mxu0
    %v1757 = vadd.f32 0.0, %v1756
    %v1758 = vpop.f32.mrf.mxu0
    %v1759 = vpop.f32.mrf.mxu0
    %v1760 = vpop.f32.mrf.mxu0
    %1761 = vdwg.mxu0
    %1762 = vrot.lane.b32.xlu0 %v344, 118
    %v1763 = vpop.permute.xlu0 %1762
    %1764 = vrot.lane.b32.xlu0 %v346, 118
    %v1765 = vpop.permute.xlu0 %1764
    %v1767 = vsel %vm349, %v1763, 0
    %v1770 = vsel %vm349, %v1765, 0
    %1772 = vmatprep.subr.bf16.mxu0 0
    %1773 = vmatpush1.bf16.xpose.msra.mxu0 0
    %1774 = vmatprep.subr.bf16.mxu0 0
    %1775 = vmatpush1.bf16.xpose.msra.mxu0 0
    %1776 = vmatprep.subr.bf16.mxu0 0
    %1777 = vmatpush1.bf16.xpose.msra.mxu0 0
    %1778 = vmatprep.subr.bf16.mxu0 0
    %1779 = vmatpush1.bf16.xpose.msra.mxu0 0
    %1780 = vmatprep.subr.bf16.mxu0 0
    %1781 = vmatpush1.bf16.xpose.msra.mxu0 0
    %1782 = vmatprep.subr.bf16.mxu0 0
    %1783 = vmatpush1.bf16.xpose.msra.mxu0 0
    %1784 = vmatprep.subr.bf16.mxu0 0
    %1785 = vmatpush1.bf16.xpose.msra.mxu0 0
    %1786 = vmatprep.subr.bf16.mxu0 0
    %1787 = vmatpush1.bf16.xpose.msra.mxu0 %v1770
    %1788 = vmatprep.subr.bf16.mxu0 0
    %1789 = vmatpush2.bf16.xpose.msra.mxu0 0
    %1790 = vmatprep.subr.bf16.mxu0 0
    %1791 = vmatpush2.bf16.xpose.msra.mxu0 0
    %1792 = vmatprep.subr.bf16.mxu0 0
    %1793 = vmatpush2.bf16.xpose.msra.mxu0 0
    %1794 = vmatprep.subr.bf16.mxu0 0
    %1795 = vmatpush2.bf16.xpose.msra.mxu0 0
    %1796 = vmatprep.subr.bf16.mxu0 0
    %1797 = vmatpush2.bf16.xpose.msra.mxu0 0
    %1798 = vmatprep.subr.bf16.mxu0 0
    %1799 = vmatpush2.bf16.xpose.msra.mxu0 0
    %1800 = vmatprep.subr.bf16.mxu0 0
    %1801 = vmatpush2.bf16.xpose.msra.mxu0 0
    %1802 = vmatprep.subr.bf16.mxu0 0
    %1803 = vmatpush2.bf16.xpose.msra.mxu0 0
    %1804 = vmatprep.mubr.bf16.mxu0 0
    %1805 = vmatmul.mubr.bf16.gmra.mxu0 %v1767
    %v1806 = vpop.f32.mrf.mxu0
    %v1807 = vadd.f32 0.0, %v1806
    %v1808 = vpop.f32.mrf.mxu0
    %v1809 = vpop.f32.mrf.mxu0
    %v1810 = vpop.f32.mrf.mxu0
    %1811 = vdwg.mxu0
    %v1812 = vsel %vm442, %v1757, -inf
    %1813 = vmax.xlane.f32.xlu0 %v1812
    %v1814 = vpop.xlane.xlu0 %1813
    %v1815 = vsel %vm442, %v1807, -inf
    %1816 = vmax.xlane.f32.xlu0 %v1815
    %v1817 = vpop.xlane.xlu0 %1816
    %v1818 = vsub.f32 %v1757, %v1814
    %v1819 = vsub.f32 %v1807, %v1817
    %v1820 = vmul.f32 %v1818, 1.442695
    %v1821 = vpow.pop %v1820
    %v1822 = vmul.f32 %v1819, 1.442695
    %v1823 = vpow.pop %v1822
    %v1824 = vsel %vm442, %v1821, 0.0
    %1825 = vadd.xlane.f32.xlu0 %v1824
    %v1826 = vpop.xlane.xlu0 %1825
    %v1827 = vsel %vm442, %v1823, 0.0
    %1828 = vadd.xlane.f32.xlu0 %v1827
    %v1829 = vpop.xlane.xlu0 %1828
    %v1830 = vrcp.pop %v1826
    %v1831 = vrcp.pop %v1829
    %v1832 = vmul.f32 %v1821, %v1830
    %v1833 = vmul.f32 %v1823, %v1831
    %v1834 = vpack.c.bf16 %v1832, %v1832
    %v1835 = vpack.c.bf16 %v1833, %v1833
    %1836 = vrot.lane.b32.xlu0 %v347, 118
    %v1837 = vpop.permute.xlu0 %1836
    %v1839 = vsel %vm467, %v1834, 0
    %v1842 = vsel %vm471, %v1837, 0
    %1844 = vmatprep.subr.bf16.mxu0 0
    %1845 = vmatpush1.bf16.msra.mxu0 0
    %1846 = vmatprep.subr.bf16.mxu0 0
    %1847 = vmatpush1.bf16.msra.mxu0 0
    %1848 = vmatprep.subr.bf16.mxu0 0
    %1849 = vmatpush1.bf16.msra.mxu0 0
    %1850 = vmatprep.subr.bf16.mxu0 0
    %1851 = vmatpush1.bf16.msra.mxu0 0
    %1852 = vmatprep.subr.bf16.mxu0 0
    %1853 = vmatpush1.bf16.msra.mxu0 0
    %1854 = vmatprep.subr.bf16.mxu0 0
    %1855 = vmatpush1.bf16.msra.mxu0 0
    %1856 = vmatprep.subr.bf16.mxu0 0
    %1857 = vmatpush1.bf16.msra.mxu0 0
    %1858 = vmatprep.subr.bf16.mxu0 0
    %1859 = vmatpush1.bf16.msra.mxu0 %v1842
    %1860 = vmatprep.subr.bf16.mxu0 0
    %1861 = vmatpush2.bf16.msra.mxu0 0
    %1862 = vmatprep.subr.bf16.mxu0 0
    %1863 = vmatpush2.bf16.msra.mxu0 0
    %1864 = vmatprep.subr.bf16.mxu0 0
    %1865 = vmatpush2.bf16.msra.mxu0 0
    %1866 = vmatprep.subr.bf16.mxu0 0
    %1867 = vmatpush2.bf16.msra.mxu0 0
    %1868 = vmatprep.subr.bf16.mxu0 0
    %1869 = vmatpush2.bf16.msra.mxu0 0
    %1870 = vmatprep.subr.bf16.mxu0 0
    %1871 = vmatpush2.bf16.msra.mxu0 0
    %1872 = vmatprep.subr.bf16.mxu0 0
    %1873 = vmatpush2.bf16.msra.mxu0 0
    %1874 = vmatprep.subr.bf16.mxu0 0
    %1875 = vmatpush2.bf16.msra.mxu0 0
    %1876 = vmatprep.mubr.bf16.mxu0 0
    %1877 = vmatmul.mubr.bf16.gmra.mxu0 %v1839
    %v1878 = vpop.f32.mrf.mxu0
    %v1879 = vadd.f32 0.0, %v1878
    %v1880 = vpop.f32.mrf.mxu0
    %v1881 = vpop.f32.mrf.mxu0
    %v1882 = vpop.f32.mrf.mxu0
    %1883 = vdwg.mxu0
    %1884 = vrot.lane.b32.xlu0 %v348, 118
    %v1885 = vpop.permute.xlu0 %1884
    %v1887 = vsel %vm467, %v1835, 0
    %v1890 = vsel %vm471, %v1885, 0
    %1892 = vmatprep.subr.bf16.mxu0 0
    %1893 = vmatpush1.bf16.msra.mxu0 0
    %1894 = vmatprep.subr.bf16.mxu0 0
    %1895 = vmatpush1.bf16.msra.mxu0 0
    %1896 = vmatprep.subr.bf16.mxu0 0
    %1897 = vmatpush1.bf16.msra.mxu0 0
    %1898 = vmatprep.subr.bf16.mxu0 0
    %1899 = vmatpush1.bf16.msra.mxu0 0
    %1900 = vmatprep.subr.bf16.mxu0 0
    %1901 = vmatpush1.bf16.msra.mxu0 0
    %1902 = vmatprep.subr.bf16.mxu0 0
    %1903 = vmatpush1.bf16.msra.mxu0 0
    %1904 = vmatprep.subr.bf16.mxu0 0
    %1905 = vmatpush1.bf16.msra.mxu0 0
    %1906 = vmatprep.subr.bf16.mxu0 0
    %1907 = vmatpush1.bf16.msra.mxu0 %v1890
    %1908 = vmatprep.subr.bf16.mxu0 0
    %1909 = vmatpush2.bf16.msra.mxu0 0
    %1910 = vmatprep.subr.bf16.mxu0 0
    %1911 = vmatpush2.bf16.msra.mxu0 0
    %1912 = vmatprep.subr.bf16.mxu0 0
    %1913 = vmatpush2.bf16.msra.mxu0 0
    %1914 = vmatprep.subr.bf16.mxu0 0
    %1915 = vmatpush2.bf16.msra.mxu0 0
    %1916 = vmatprep.subr.bf16.mxu0 0
    %1917 = vmatpush2.bf16.msra.mxu0 0
    %1918 = vmatprep.subr.bf16.mxu0 0
    %1919 = vmatpush2.bf16.msra.mxu0 0
    %1920 = vmatprep.subr.bf16.mxu0 0
    %1921 = vmatpush2.bf16.msra.mxu0 0
    %1922 = vmatprep.subr.bf16.mxu0 0
    %1923 = vmatpush2.bf16.msra.mxu0 0
    %1924 = vmatprep.mubr.bf16.mxu0 0
    %1925 = vmatmul.mubr.bf16.gmra.mxu0 %v1887
    %v1926 = vpop.f32.mrf.mxu0
    %v1927 = vadd.f32 0.0, %v1926
    %v1928 = vpop.f32.mrf.mxu0
    %v1929 = vpop.f32.mrf.mxu0
    %v1930 = vpop.f32.mrf.mxu0
    %1931 = vdwg.mxu0
    %v1934 = vcombine.low %v1879, %v1927
    %v1936 = vpack.c.bf16 %v1934, %v1934
    %v1938 = vunpack.c.l.b16 %v80
    %v1939 = vpack.c.b16 %v1938, %v1938
    %v1940 = vrot.slane %v1939, 1
    %v1942 = vsel %vm349, %v1936, 0
    %v1945 = vsel %vm804, %v1940, 0
    %1947 = vmatprep.subr.bf16.mxu0 0
    %1948 = vmatpush1.bf16.msra.mxu0 0
    %1949 = vmatprep.subr.bf16.mxu0 0
    %1950 = vmatpush1.bf16.msra.mxu0 0
    %1951 = vmatprep.subr.bf16.mxu0 0
    %1952 = vmatpush1.bf16.msra.mxu0 0
    %1953 = vmatprep.subr.bf16.mxu0 0
    %1954 = vmatpush1.bf16.msra.mxu0 0
    %1955 = vmatprep.subr.bf16.mxu0 0
    %1956 = vmatpush1.bf16.msra.mxu0 0
    %1957 = vmatprep.subr.bf16.mxu0 0
    %1958 = vmatpush1.bf16.msra.mxu0 0
    %1959 = vmatprep.subr.bf16.mxu0 0
    %1960 = vmatpush1.bf16.msra.mxu0 0
    %1961 = vmatprep.subr.bf16.mxu0 0
    %1962 = vmatpush1.bf16.msra.mxu0 %v1945
    %1963 = vmatprep.subr.bf16.mxu0 0
    %1964 = vmatpush2.bf16.msra.mxu0 0
    %1965 = vmatprep.subr.bf16.mxu0 0
    %1966 = vmatpush2.bf16.msra.mxu0 0
    %1967 = vmatprep.subr.bf16.mxu0 0
    %1968 = vmatpush2.bf16.msra.mxu0 0
    %1969 = vmatprep.subr.bf16.mxu0 0
    %1970 = vmatpush2.bf16.msra.mxu0 0
    %1971 = vmatprep.subr.bf16.mxu0 0
    %1972 = vmatpush2.bf16.msra.mxu0 0
    %1973 = vmatprep.subr.bf16.mxu0 0
    %1974 = vmatpush2.bf16.msra.mxu0 0
    %1975 = vmatprep.subr.bf16.mxu0 0
    %1976 = vmatpush2.bf16.msra.mxu0 0
    %1977 = vmatprep.subr.bf16.mxu0 0
    %1978 = vmatpush2.bf16.msra.mxu0 0
    %1979 = vmatprep.mubr.bf16.mxu0 0
    %1980 = vmatmul.mubr.bf16.gmra.mxu0 %v1942
    %v1981 = vpop.f32.mrf.mxu0
    %v1982 = vadd.f32 0.0, %v1981
    %v1983 = vpop.f32.mrf.mxu0
    %v1984 = vpop.f32.mrf.mxu0
    %v1985 = vpop.f32.mrf.mxu0
    %1986 = vdwg.mxu0
    %v1987 = vadd.f32 %v1711, %v1982
    %1988 = vrot.lane.b32.xlu0 %v343, 116
    %v1989 = vpop.permute.xlu0 %1988
    %1990 = vrot.lane.b32.xlu0 %v345, 116
    %v1991 = vpop.permute.xlu0 %1990
    %v1993 = vsel %vm349, %v1989, 0
    %v1996 = vsel %vm349, %v1991, 0
    %1998 = vmatprep.subr.bf16.mxu0 0
    %1999 = vmatpush1.bf16.xpose.msra.mxu0 0
    %2000 = vmatprep.subr.bf16.mxu0 0
    %2001 = vmatpush1.bf16.xpose.msra.mxu0 0
    %2002 = vmatprep.subr.bf16.mxu0 0
    %2003 = vmatpush1.bf16.xpose.msra.mxu0 0
    %2004 = vmatprep.subr.bf16.mxu0 0
    %2005 = vmatpush1.bf16.xpose.msra.mxu0 0
    %2006 = vmatprep.subr.bf16.mxu0 0
    %2007 = vmatpush1.bf16.xpose.msra.mxu0 0
    %2008 = vmatprep.subr.bf16.mxu0 0
    %2009 = vmatpush1.bf16.xpose.msra.mxu0 0
    %2010 = vmatprep.subr.bf16.mxu0 0
    %2011 = vmatpush1.bf16.xpose.msra.mxu0 0
    %2012 = vmatprep.subr.bf16.mxu0 0
    %2013 = vmatpush1.bf16.xpose.msra.mxu0 %v1996
    %2014 = vmatprep.subr.bf16.mxu0 0
    %2015 = vmatpush2.bf16.xpose.msra.mxu0 0
    %2016 = vmatprep.subr.bf16.mxu0 0
    %2017 = vmatpush2.bf16.xpose.msra.mxu0 0
    %2018 = vmatprep.subr.bf16.mxu0 0
    %2019 = vmatpush2.bf16.xpose.msra.mxu0 0
    %2020 = vmatprep.subr.bf16.mxu0 0
    %2021 = vmatpush2.bf16.xpose.msra.mxu0 0
    %2022 = vmatprep.subr.bf16.mxu0 0
    %2023 = vmatpush2.bf16.xpose.msra.mxu0 0
    %2024 = vmatprep.subr.bf16.mxu0 0
    %2025 = vmatpush2.bf16.xpose.msra.mxu0 0
    %2026 = vmatprep.subr.bf16.mxu0 0
    %2027 = vmatpush2.bf16.xpose.msra.mxu0 0
    %2028 = vmatprep.subr.bf16.mxu0 0
    %2029 = vmatpush2.bf16.xpose.msra.mxu0 0
    %2030 = vmatprep.mubr.bf16.mxu0 0
    %2031 = vmatmul.mubr.bf16.gmra.mxu0 %v1993
    %v2032 = vpop.f32.mrf.mxu0
    %v2033 = vadd.f32 0.0, %v2032
    %v2034 = vpop.f32.mrf.mxu0
    %v2035 = vpop.f32.mrf.mxu0
    %v2036 = vpop.f32.mrf.mxu0
    %2037 = vdwg.mxu0
    %2038 = vrot.lane.b32.xlu0 %v344, 116
    %v2039 = vpop.permute.xlu0 %2038
    %2040 = vrot.lane.b32.xlu0 %v346, 116
    %v2041 = vpop.permute.xlu0 %2040
    %v2043 = vsel %vm349, %v2039, 0
    %v2046 = vsel %vm349, %v2041, 0
    %2048 = vmatprep.subr.bf16.mxu0 0
    %2049 = vmatpush1.bf16.xpose.msra.mxu0 0
    %2050 = vmatprep.subr.bf16.mxu0 0
    %2051 = vmatpush1.bf16.xpose.msra.mxu0 0
    %2052 = vmatprep.subr.bf16.mxu0 0
    %2053 = vmatpush1.bf16.xpose.msra.mxu0 0
    %2054 = vmatprep.subr.bf16.mxu0 0
    %2055 = vmatpush1.bf16.xpose.msra.mxu0 0
    %2056 = vmatprep.subr.bf16.mxu0 0
    %2057 = vmatpush1.bf16.xpose.msra.mxu0 0
    %2058 = vmatprep.subr.bf16.mxu0 0
    %2059 = vmatpush1.bf16.xpose.msra.mxu0 0
    %2060 = vmatprep.subr.bf16.mxu0 0
    %2061 = vmatpush1.bf16.xpose.msra.mxu0 0
    %2062 = vmatprep.subr.bf16.mxu0 0
    %2063 = vmatpush1.bf16.xpose.msra.mxu0 %v2046
    %2064 = vmatprep.subr.bf16.mxu0 0
    %2065 = vmatpush2.bf16.xpose.msra.mxu0 0
    %2066 = vmatprep.subr.bf16.mxu0 0
    %2067 = vmatpush2.bf16.xpose.msra.mxu0 0
    %2068 = vmatprep.subr.bf16.mxu0 0
    %2069 = vmatpush2.bf16.xpose.msra.mxu0 0
    %2070 = vmatprep.subr.bf16.mxu0 0
    %2071 = vmatpush2.bf16.xpose.msra.mxu0 0
    %2072 = vmatprep.subr.bf16.mxu0 0
    %2073 = vmatpush2.bf16.xpose.msra.mxu0 0
    %2074 = vmatprep.subr.bf16.mxu0 0
    %2075 = vmatpush2.bf16.xpose.msra.mxu0 0
    %2076 = vmatprep.subr.bf16.mxu0 0
    %2077 = vmatpush2.bf16.xpose.msra.mxu0 0
    %2078 = vmatprep.subr.bf16.mxu0 0
    %2079 = vmatpush2.bf16.xpose.msra.mxu0 0
    %2080 = vmatprep.mubr.bf16.mxu0 0
    %2081 = vmatmul.mubr.bf16.gmra.mxu0 %v2043
    %v2082 = vpop.f32.mrf.mxu0
    %v2083 = vadd.f32 0.0, %v2082
    %v2084 = vpop.f32.mrf.mxu0
    %v2085 = vpop.f32.mrf.mxu0
    %v2086 = vpop.f32.mrf.mxu0
    %2087 = vdwg.mxu0
    %v2088 = vsel %vm442, %v2033, -inf
    %2089 = vmax.xlane.f32.xlu0 %v2088
    %v2090 = vpop.xlane.xlu0 %2089
    %v2091 = vsel %vm442, %v2083, -inf
    %2092 = vmax.xlane.f32.xlu0 %v2091
    %v2093 = vpop.xlane.xlu0 %2092
    %v2094 = vsub.f32 %v2033, %v2090
    %v2095 = vsub.f32 %v2083, %v2093
    %v2096 = vmul.f32 %v2094, 1.442695
    %v2097 = vpow.pop %v2096
    %v2098 = vmul.f32 %v2095, 1.442695
    %v2099 = vpow.pop %v2098
    %v2100 = vsel %vm442, %v2097, 0.0
    %2101 = vadd.xlane.f32.xlu0 %v2100
    %v2102 = vpop.xlane.xlu0 %2101
    %v2103 = vsel %vm442, %v2099, 0.0
    %2104 = vadd.xlane.f32.xlu0 %v2103
    %v2105 = vpop.xlane.xlu0 %2104
    %v2106 = vrcp.pop %v2102
    %v2107 = vrcp.pop %v2105
    %v2108 = vmul.f32 %v2097, %v2106
    %v2109 = vmul.f32 %v2099, %v2107
    %v2110 = vpack.c.bf16 %v2108, %v2108
    %v2111 = vpack.c.bf16 %v2109, %v2109
    %2112 = vrot.lane.b32.xlu0 %v347, 116
    %v2113 = vpop.permute.xlu0 %2112
    %v2115 = vsel %vm467, %v2110, 0
    %v2118 = vsel %vm471, %v2113, 0
    %2120 = vmatprep.subr.bf16.mxu0 0
    %2121 = vmatpush1.bf16.msra.mxu0 0
    %2122 = vmatprep.subr.bf16.mxu0 0
    %2123 = vmatpush1.bf16.msra.mxu0 0
    %2124 = vmatprep.subr.bf16.mxu0 0
    %2125 = vmatpush1.bf16.msra.mxu0 0
    %2126 = vmatprep.subr.bf16.mxu0 0
    %2127 = vmatpush1.bf16.msra.mxu0 0
    %2128 = vmatprep.subr.bf16.mxu0 0
    %2129 = vmatpush1.bf16.msra.mxu0 0
    %2130 = vmatprep.subr.bf16.mxu0 0
    %2131 = vmatpush1.bf16.msra.mxu0 0
    %2132 = vmatprep.subr.bf16.mxu0 0
    %2133 = vmatpush1.bf16.msra.mxu0 0
    %2134 = vmatprep.subr.bf16.mxu0 0
    %2135 = vmatpush1.bf16.msra.mxu0 %v2118
    %2136 = vmatprep.subr.bf16.mxu0 0
    %2137 = vmatpush2.bf16.msra.mxu0 0
    %2138 = vmatprep.subr.bf16.mxu0 0
    %2139 = vmatpush2.bf16.msra.mxu0 0
    %2140 = vmatprep.subr.bf16.mxu0 0
    %2141 = vmatpush2.bf16.msra.mxu0 0
    %2142 = vmatprep.subr.bf16.mxu0 0
    %2143 = vmatpush2.bf16.msra.mxu0 0
    %2144 = vmatprep.subr.bf16.mxu0 0
    %2145 = vmatpush2.bf16.msra.mxu0 0
    %2146 = vmatprep.subr.bf16.mxu0 0
    %2147 = vmatpush2.bf16.msra.mxu0 0
    %2148 = vmatprep.subr.bf16.mxu0 0
    %2149 = vmatpush2.bf16.msra.mxu0 0
    %2150 = vmatprep.subr.bf16.mxu0 0
    %2151 = vmatpush2.bf16.msra.mxu0 0
    %2152 = vmatprep.mubr.bf16.mxu0 0
    %2153 = vmatmul.mubr.bf16.gmra.mxu0 %v2115
    %v2154 = vpop.f32.mrf.mxu0
    %v2155 = vadd.f32 0.0, %v2154
    %v2156 = vpop.f32.mrf.mxu0
    %v2157 = vpop.f32.mrf.mxu0
    %v2158 = vpop.f32.mrf.mxu0
    %2159 = vdwg.mxu0
    %2160 = vrot.lane.b32.xlu0 %v348, 116
    %v2161 = vpop.permute.xlu0 %2160
    %v2163 = vsel %vm467, %v2111, 0
    %v2166 = vsel %vm471, %v2161, 0
    %2168 = vmatprep.subr.bf16.mxu0 0
    %2169 = vmatpush1.bf16.msra.mxu0 0
    %2170 = vmatprep.subr.bf16.mxu0 0
    %2171 = vmatpush1.bf16.msra.mxu0 0
    %2172 = vmatprep.subr.bf16.mxu0 0
    %2173 = vmatpush1.bf16.msra.mxu0 0
    %2174 = vmatprep.subr.bf16.mxu0 0
    %2175 = vmatpush1.bf16.msra.mxu0 0
    %2176 = vmatprep.subr.bf16.mxu0 0
    %2177 = vmatpush1.bf16.msra.mxu0 0
    %2178 = vmatprep.subr.bf16.mxu0 0
    %2179 = vmatpush1.bf16.msra.mxu0 0
    %2180 = vmatprep.subr.bf16.mxu0 0
    %2181 = vmatpush1.bf16.msra.mxu0 0
    %2182 = vmatprep.subr.bf16.mxu0 0
    %2183 = vmatpush1.bf16.msra.mxu0 %v2166
    %2184 = vmatprep.subr.bf16.mxu0 0
    %2185 = vmatpush2.bf16.msra.mxu0 0
    %2186 = vmatprep.subr.bf16.mxu0 0
    %2187 = vmatpush2.bf16.msra.mxu0 0
    %2188 = vmatprep.subr.bf16.mxu0 0
    %2189 = vmatpush2.bf16.msra.mxu0 0
    %2190 = vmatprep.subr.bf16.mxu0 0
    %2191 = vmatpush2.bf16.msra.mxu0 0
    %2192 = vmatprep.subr.bf16.mxu0 0
    %2193 = vmatpush2.bf16.msra.mxu0 0
    %2194 = vmatprep.subr.bf16.mxu0 0
    %2195 = vmatpush2.bf16.msra.mxu0 0
    %2196 = vmatprep.subr.bf16.mxu0 0
    %2197 = vmatpush2.bf16.msra.mxu0 0
    %2198 = vmatprep.subr.bf16.mxu0 0
    %2199 = vmatpush2.bf16.msra.mxu0 0
    %2200 = vmatprep.mubr.bf16.mxu0 0
    %2201 = vmatmul.mubr.bf16.gmra.mxu0 %v2163
    %v2202 = vpop.f32.mrf.mxu0
    %v2203 = vadd.f32 0.0, %v2202
    %v2204 = vpop.f32.mrf.mxu0
    %v2205 = vpop.f32.mrf.mxu0
    %v2206 = vpop.f32.mrf.mxu0
    %2207 = vdwg.mxu0
    %v2210 = vcombine.low %v2155, %v2203
    %v2212 = vpack.c.bf16 %v2210, %v2210
    %v2213 = vrot.slane %v1939, 2
    %v2215 = vsel %vm349, %v2212, 0
    %v2218 = vsel %vm804, %v2213, 0
    %2220 = vmatprep.subr.bf16.mxu0 0
    %2221 = vmatpush1.bf16.msra.mxu0 0
    %2222 = vmatprep.subr.bf16.mxu0 0
    %2223 = vmatpush1.bf16.msra.mxu0 0
    %2224 = vmatprep.subr.bf16.mxu0 0
    %2225 = vmatpush1.bf16.msra.mxu0 0
    %2226 = vmatprep.subr.bf16.mxu0 0
    %2227 = vmatpush1.bf16.msra.mxu0 0
    %2228 = vmatprep.subr.bf16.mxu0 0
    %2229 = vmatpush1.bf16.msra.mxu0 0
    %2230 = vmatprep.subr.bf16.mxu0 0
    %2231 = vmatpush1.bf16.msra.mxu0 0
    %2232 = vmatprep.subr.bf16.mxu0 0
    %2233 = vmatpush1.bf16.msra.mxu0 0
    %2234 = vmatprep.subr.bf16.mxu0 0
    %2235 = vmatpush1.bf16.msra.mxu0 %v2218
    %2236 = vmatprep.subr.bf16.mxu0 0
    %2237 = vmatpush2.bf16.msra.mxu0 0
    %2238 = vmatprep.subr.bf16.mxu0 0
    %2239 = vmatpush2.bf16.msra.mxu0 0
    %2240 = vmatprep.subr.bf16.mxu0 0
    %2241 = vmatpush2.bf16.msra.mxu0 0
    %2242 = vmatprep.subr.bf16.mxu0 0
    %2243 = vmatpush2.bf16.msra.mxu0 0
    %2244 = vmatprep.subr.bf16.mxu0 0
    %2245 = vmatpush2.bf16.msra.mxu0 0
    %2246 = vmatprep.subr.bf16.mxu0 0
    %2247 = vmatpush2.bf16.msra.mxu0 0
    %2248 = vmatprep.subr.bf16.mxu0 0
    %2249 = vmatpush2.bf16.msra.mxu0 0
    %2250 = vmatprep.subr.bf16.mxu0 0
    %2251 = vmatpush2.bf16.msra.mxu0 0
    %2252 = vmatprep.mubr.bf16.mxu0 0
    %2253 = vmatmul.mubr.bf16.gmra.mxu0 %v2215
    %v2254 = vpop.f32.mrf.mxu0
    %v2255 = vadd.f32 0.0, %v2254
    %v2256 = vpop.f32.mrf.mxu0
    %v2257 = vpop.f32.mrf.mxu0
    %v2258 = vpop.f32.mrf.mxu0
    %2259 = vdwg.mxu0
    %v2260 = vadd.f32 %v1987, %v2255
    %2261 = vrot.lane.b32.xlu0 %v343, 114
    %v2262 = vpop.permute.xlu0 %2261
    %2263 = vrot.lane.b32.xlu0 %v345, 114
    %v2264 = vpop.permute.xlu0 %2263
    %v2266 = vsel %vm349, %v2262, 0
    %v2269 = vsel %vm349, %v2264, 0
    %2271 = vmatprep.subr.bf16.mxu0 0
    %2272 = vmatpush1.bf16.xpose.msra.mxu0 0
    %2273 = vmatprep.subr.bf16.mxu0 0
    %2274 = vmatpush1.bf16.xpose.msra.mxu0 0
    %2275 = vmatprep.subr.bf16.mxu0 0
    %2276 = vmatpush1.bf16.xpose.msra.mxu0 0
    %2277 = vmatprep.subr.bf16.mxu0 0
    %2278 = vmatpush1.bf16.xpose.msra.mxu0 0
    %2279 = vmatprep.subr.bf16.mxu0 0
    %2280 = vmatpush1.bf16.xpose.msra.mxu0 0
    %2281 = vmatprep.subr.bf16.mxu0 0
    %2282 = vmatpush1.bf16.xpose.msra.mxu0 0
    %2283 = vmatprep.subr.bf16.mxu0 0
    %2284 = vmatpush1.bf16.xpose.msra.mxu0 0
    %2285 = vmatprep.subr.bf16.mxu0 0
    %2286 = vmatpush1.bf16.xpose.msra.mxu0 %v2269
    %2287 = vmatprep.subr.bf16.mxu0 0
    %2288 = vmatpush2.bf16.xpose.msra.mxu0 0
    %2289 = vmatprep.subr.bf16.mxu0 0
    %2290 = vmatpush2.bf16.xpose.msra.mxu0 0
    %2291 = vmatprep.subr.bf16.mxu0 0
    %2292 = vmatpush2.bf16.xpose.msra.mxu0 0
    %2293 = vmatprep.subr.bf16.mxu0 0
    %2294 = vmatpush2.bf16.xpose.msra.mxu0 0
    %2295 = vmatprep.subr.bf16.mxu0 0
    %2296 = vmatpush2.bf16.xpose.msra.mxu0 0
    %2297 = vmatprep.subr.bf16.mxu0 0
    %2298 = vmatpush2.bf16.xpose.msra.mxu0 0
    %2299 = vmatprep.subr.bf16.mxu0 0
    %2300 = vmatpush2.bf16.xpose.msra.mxu0 0
    %2301 = vmatprep.subr.bf16.mxu0 0
    %2302 = vmatpush2.bf16.xpose.msra.mxu0 0
    %2303 = vmatprep.mubr.bf16.mxu0 0
    %2304 = vmatmul.mubr.bf16.gmra.mxu0 %v2266
    %v2305 = vpop.f32.mrf.mxu0
    %v2306 = vadd.f32 0.0, %v2305
    %v2307 = vpop.f32.mrf.mxu0
    %v2308 = vpop.f32.mrf.mxu0
    %v2309 = vpop.f32.mrf.mxu0
    %2310 = vdwg.mxu0
    %2311 = vrot.lane.b32.xlu0 %v344, 114
    %v2312 = vpop.permute.xlu0 %2311
    %2313 = vrot.lane.b32.xlu0 %v346, 114
    %v2314 = vpop.permute.xlu0 %2313
    %v2316 = vsel %vm349, %v2312, 0
    %v2319 = vsel %vm349, %v2314, 0
    %2321 = vmatprep.subr.bf16.mxu0 0
    %2322 = vmatpush1.bf16.xpose.msra.mxu0 0
    %2323 = vmatprep.subr.bf16.mxu0 0
    %2324 = vmatpush1.bf16.xpose.msra.mxu0 0
    %2325 = vmatprep.subr.bf16.mxu0 0
    %2326 = vmatpush1.bf16.xpose.msra.mxu0 0
    %2327 = vmatprep.subr.bf16.mxu0 0
    %2328 = vmatpush1.bf16.xpose.msra.mxu0 0
    %2329 = vmatprep.subr.bf16.mxu0 0
    %2330 = vmatpush1.bf16.xpose.msra.mxu0 0
    %2331 = vmatprep.subr.bf16.mxu0 0
    %2332 = vmatpush1.bf16.xpose.msra.mxu0 0
    %2333 = vmatprep.subr.bf16.mxu0 0
    %2334 = vmatpush1.bf16.xpose.msra.mxu0 0
    %2335 = vmatprep.subr.bf16.mxu0 0
    %2336 = vmatpush1.bf16.xpose.msra.mxu0 %v2319
    %2337 = vmatprep.subr.bf16.mxu0 0
    %2338 = vmatpush2.bf16.xpose.msra.mxu0 0
    %2339 = vmatprep.subr.bf16.mxu0 0
    %2340 = vmatpush2.bf16.xpose.msra.mxu0 0
    %2341 = vmatprep.subr.bf16.mxu0 0
    %2342 = vmatpush2.bf16.xpose.msra.mxu0 0
    %2343 = vmatprep.subr.bf16.mxu0 0
    %2344 = vmatpush2.bf16.xpose.msra.mxu0 0
    %2345 = vmatprep.subr.bf16.mxu0 0
    %2346 = vmatpush2.bf16.xpose.msra.mxu0 0
    %2347 = vmatprep.subr.bf16.mxu0 0
    %2348 = vmatpush2.bf16.xpose.msra.mxu0 0
    %2349 = vmatprep.subr.bf16.mxu0 0
    %2350 = vmatpush2.bf16.xpose.msra.mxu0 0
    %2351 = vmatprep.subr.bf16.mxu0 0
    %2352 = vmatpush2.bf16.xpose.msra.mxu0 0
    %2353 = vmatprep.mubr.bf16.mxu0 0
    %2354 = vmatmul.mubr.bf16.gmra.mxu0 %v2316
    %v2355 = vpop.f32.mrf.mxu0
    %v2356 = vadd.f32 0.0, %v2355
    %v2357 = vpop.f32.mrf.mxu0
    %v2358 = vpop.f32.mrf.mxu0
    %v2359 = vpop.f32.mrf.mxu0
    %2360 = vdwg.mxu0
    %v2361 = vsel %vm442, %v2306, -inf
    %2362 = vmax.xlane.f32.xlu0 %v2361
    %v2363 = vpop.xlane.xlu0 %2362
    %v2364 = vsel %vm442, %v2356, -inf
    %2365 = vmax.xlane.f32.xlu0 %v2364
    %v2366 = vpop.xlane.xlu0 %2365
    %v2367 = vsub.f32 %v2306, %v2363
    %v2368 = vsub.f32 %v2356, %v2366
    %v2369 = vmul.f32 %v2367, 1.442695
    %v2370 = vpow.pop %v2369
    %v2371 = vmul.f32 %v2368, 1.442695
    %v2372 = vpow.pop %v2371
    %v2373 = vsel %vm442, %v2370, 0.0
    %2374 = vadd.xlane.f32.xlu0 %v2373
    %v2375 = vpop.xlane.xlu0 %2374
    %v2376 = vsel %vm442, %v2372, 0.0
    %2377 = vadd.xlane.f32.xlu0 %v2376
    %v2378 = vpop.xlane.xlu0 %2377
    %v2379 = vrcp.pop %v2375
    %v2380 = vrcp.pop %v2378
    %v2381 = vmul.f32 %v2370, %v2379
    %v2382 = vmul.f32 %v2372, %v2380
    %v2383 = vpack.c.bf16 %v2381, %v2381
    %v2384 = vpack.c.bf16 %v2382, %v2382
    %2385 = vrot.lane.b32.xlu0 %v347, 114
    %v2386 = vpop.permute.xlu0 %2385
    %v2388 = vsel %vm467, %v2383, 0
    %v2391 = vsel %vm471, %v2386, 0
    %2393 = vmatprep.subr.bf16.mxu0 0
    %2394 = vmatpush1.bf16.msra.mxu0 0
    %2395 = vmatprep.subr.bf16.mxu0 0
    %2396 = vmatpush1.bf16.msra.mxu0 0
    %2397 = vmatprep.subr.bf16.mxu0 0
    %2398 = vmatpush1.bf16.msra.mxu0 0
    %2399 = vmatprep.subr.bf16.mxu0 0
    %2400 = vmatpush1.bf16.msra.mxu0 0
    %2401 = vmatprep.subr.bf16.mxu0 0
    %2402 = vmatpush1.bf16.msra.mxu0 0
    %2403 = vmatprep.subr.bf16.mxu0 0
    %2404 = vmatpush1.bf16.msra.mxu0 0
    %2405 = vmatprep.subr.bf16.mxu0 0
    %2406 = vmatpush1.bf16.msra.mxu0 0
    %2407 = vmatprep.subr.bf16.mxu0 0
    %2408 = vmatpush1.bf16.msra.mxu0 %v2391
    %2409 = vmatprep.subr.bf16.mxu0 0
    %2410 = vmatpush2.bf16.msra.mxu0 0
    %2411 = vmatprep.subr.bf16.mxu0 0
    %2412 = vmatpush2.bf16.msra.mxu0 0
    %2413 = vmatprep.subr.bf16.mxu0 0
    %2414 = vmatpush2.bf16.msra.mxu0 0
    %2415 = vmatprep.subr.bf16.mxu0 0
    %2416 = vmatpush2.bf16.msra.mxu0 0
    %2417 = vmatprep.subr.bf16.mxu0 0
    %2418 = vmatpush2.bf16.msra.mxu0 0
    %2419 = vmatprep.subr.bf16.mxu0 0
    %2420 = vmatpush2.bf16.msra.mxu0 0
    %2421 = vmatprep.subr.bf16.mxu0 0
    %2422 = vmatpush2.bf16.msra.mxu0 0
    %2423 = vmatprep.subr.bf16.mxu0 0
    %2424 = vmatpush2.bf16.msra.mxu0 0
    %2425 = vmatprep.mubr.bf16.mxu0 0
    %2426 = vmatmul.mubr.bf16.gmra.mxu0 %v2388
    %v2427 = vpop.f32.mrf.mxu0
    %v2428 = vadd.f32 0.0, %v2427
    %v2429 = vpop.f32.mrf.mxu0
    %v2430 = vpop.f32.mrf.mxu0
    %v2431 = vpop.f32.mrf.mxu0
    %2432 = vdwg.mxu0
    %2433 = vrot.lane.b32.xlu0 %v348, 114
    %v2434 = vpop.permute.xlu0 %2433
    %v2436 = vsel %vm467, %v2384, 0
    %v2439 = vsel %vm471, %v2434, 0
    %2441 = vmatprep.subr.bf16.mxu0 0
    %2442 = vmatpush1.bf16.msra.mxu0 0
    %2443 = vmatprep.subr.bf16.mxu0 0
    %2444 = vmatpush1.bf16.msra.mxu0 0
    %2445 = vmatprep.subr.bf16.mxu0 0
    %2446 = vmatpush1.bf16.msra.mxu0 0
    %2447 = vmatprep.subr.bf16.mxu0 0
    %2448 = vmatpush1.bf16.msra.mxu0 0
    %2449 = vmatprep.subr.bf16.mxu0 0
    %2450 = vmatpush1.bf16.msra.mxu0 0
    %2451 = vmatprep.subr.bf16.mxu0 0
    %2452 = vmatpush1.bf16.msra.mxu0 0
    %2453 = vmatprep.subr.bf16.mxu0 0
    %2454 = vmatpush1.bf16.msra.mxu0 0
    %2455 = vmatprep.subr.bf16.mxu0 0
    %2456 = vmatpush1.bf16.msra.mxu0 %v2439
    %2457 = vmatprep.subr.bf16.mxu0 0
    %2458 = vmatpush2.bf16.msra.mxu0 0
    %2459 = vmatprep.subr.bf16.mxu0 0
    %2460 = vmatpush2.bf16.msra.mxu0 0
    %2461 = vmatprep.subr.bf16.mxu0 0
    %2462 = vmatpush2.bf16.msra.mxu0 0
    %2463 = vmatprep.subr.bf16.mxu0 0
    %2464 = vmatpush2.bf16.msra.mxu0 0
    %2465 = vmatprep.subr.bf16.mxu0 0
    %2466 = vmatpush2.bf16.msra.mxu0 0
    %2467 = vmatprep.subr.bf16.mxu0 0
    %2468 = vmatpush2.bf16.msra.mxu0 0
    %2469 = vmatprep.subr.bf16.mxu0 0
    %2470 = vmatpush2.bf16.msra.mxu0 0
    %2471 = vmatprep.subr.bf16.mxu0 0
    %2472 = vmatpush2.bf16.msra.mxu0 0
    %2473 = vmatprep.mubr.bf16.mxu0 0
    %2474 = vmatmul.mubr.bf16.gmra.mxu0 %v2436
    %v2475 = vpop.f32.mrf.mxu0
    %v2476 = vadd.f32 0.0, %v2475
    %v2477 = vpop.f32.mrf.mxu0
    %v2478 = vpop.f32.mrf.mxu0
    %v2479 = vpop.f32.mrf.mxu0
    %2480 = vdwg.mxu0
    %v2483 = vcombine.low %v2428, %v2476
    %v2485 = vpack.c.bf16 %v2483, %v2483
    %v2486 = vrot.slane %v1939, 3
    %v2488 = vsel %vm349, %v2485, 0
    %v2491 = vsel %vm804, %v2486, 0
    %2493 = vmatprep.subr.bf16.mxu0 0
    %2494 = vmatpush1.bf16.msra.mxu0 0
    %2495 = vmatprep.subr.bf16.mxu0 0
    %2496 = vmatpush1.bf16.msra.mxu0 0
    %2497 = vmatprep.subr.bf16.mxu0 0
    %2498 = vmatpush1.bf16.msra.mxu0 0
    %2499 = vmatprep.subr.bf16.mxu0 0
    %2500 = vmatpush1.bf16.msra.mxu0 0
    %2501 = vmatprep.subr.bf16.mxu0 0
    %2502 = vmatpush1.bf16.msra.mxu0 0
    %2503 = vmatprep.subr.bf16.mxu0 0
    %2504 = vmatpush1.bf16.msra.mxu0 0
    %2505 = vmatprep.subr.bf16.mxu0 0
    %2506 = vmatpush1.bf16.msra.mxu0 0
    %2507 = vmatprep.subr.bf16.mxu0 0
    %2508 = vmatpush1.bf16.msra.mxu0 %v2491
    %2509 = vmatprep.subr.bf16.mxu0 0
    %2510 = vmatpush2.bf16.msra.mxu0 0
    %2511 = vmatprep.subr.bf16.mxu0 0
    %2512 = vmatpush2.bf16.msra.mxu0 0
    %2513 = vmatprep.subr.bf16.mxu0 0
    %2514 = vmatpush2.bf16.msra.mxu0 0
    %2515 = vmatprep.subr.bf16.mxu0 0
    %2516 = vmatpush2.bf16.msra.mxu0 0
    %2517 = vmatprep.subr.bf16.mxu0 0
    %2518 = vmatpush2.bf16.msra.mxu0 0
    %2519 = vmatprep.subr.bf16.mxu0 0
    %2520 = vmatpush2.bf16.msra.mxu0 0
    %2521 = vmatprep.subr.bf16.mxu0 0
    %2522 = vmatpush2.bf16.msra.mxu0 0
    %2523 = vmatprep.subr.bf16.mxu0 0
    %2524 = vmatpush2.bf16.msra.mxu0 0
    %2525 = vmatprep.mubr.bf16.mxu0 0
    %2526 = vmatmul.mubr.bf16.gmra.mxu0 %v2488
    %v2527 = vpop.f32.mrf.mxu0
    %v2528 = vadd.f32 0.0, %v2527
    %v2529 = vpop.f32.mrf.mxu0
    %v2530 = vpop.f32.mrf.mxu0
    %v2531 = vpop.f32.mrf.mxu0
    %2532 = vdwg.mxu0
    %v2533 = vadd.f32 %v2260, %v2528
    %v2535 = vcombine.high %v2533, %v2533
    %v2537 = vadd.f32 %v67, %v2533
    %v2538 = vadd.f32 %v68, %v2535
    %v2540 = vlaneseq
    %v2541 = vshrl.u32 %v2540, 7
    %v2542 = vsub.s32 0, %v2541
    %v2543 = vrot.slane %v81, %v2542
    %v2545 = vcombine.high %v2543, %v2543
    %v2547 = vadd.f32 %v2537, %v2543
    %v2548 = vadd.f32 %v2538, %v2545
    %v2551 = vcombine.low %v2547, %v2548
    %v2553 = vsel %vm100, %v2551, 0.0
    %2554 = vadd.xlane.f32.xlu0 %v2553
    %v2555 = vpop.xlane.xlu0 %2554
    %v2556 = vmul.f32 %v2555, %v104
    %v2559 = vunpack.c.l.s4 839922192
    %v2560 = vunpack.c.0.s8 %v2559
    %v2561 = vlaneseq
    %v2562 = vshrl.u32 %v2561, 7
    %v2563 = vsub.s32 %v2560, %v2562
    %v2564 = vrot.slane %v2556, %v2563
    %v2566 = vunpack.c.l.s4 1985246804
    %v2567 = vunpack.c.0.s8 %v2566
    %v2568 = vlaneseq
    %v2569 = vshrl.u32 %v2568, 7
    %v2570 = vsub.s32 %v2567, %v2569
    %v2571 = vrot.slane %v2556, %v2570
    %v2574 = vsub.f32 %v2547, %v2564
    %v2575 = vsub.f32 %v2548, %v2571
    %v2576 = vmul.f32 %v2574, %v2574
    %v2577 = vmul.f32 %v2575, %v2575
    %v2580 = vcombine.low %v2576, %v2577
    %v2582 = vsel %vm100, %v2580, 0.0
    %2583 = vadd.xlane.f32.xlu0 %v2582
    %v2584 = vpop.xlane.xlu0 %2583
    %v2585 = vmul.f32 %v2584, %v104
    %v2586 = vadd.f32 %v2585, 1e-05
    %v2587 = vrsqrt.pop %v2586
    %v2590 = vunpack.c.l.s4 839922192
    %v2591 = vunpack.c.0.s8 %v2590
    %v2592 = vlaneseq
    %v2593 = vshrl.u32 %v2592, 7
    %v2594 = vsub.s32 %v2591, %v2593
    %v2595 = vrot.slane %v2587, %v2594
    %v2597 = vunpack.c.l.s4 1985246804
    %v2598 = vunpack.c.0.s8 %v2597
    %v2599 = vlaneseq
    %v2600 = vshrl.u32 %v2599, 7
    %v2601 = vsub.s32 %v2598, %v2600
    %v2602 = vrot.slane %v2587, %v2601
    %v2605 = vmul.f32 %v2574, %v2595
    %v2606 = vmul.f32 %v2575, %v2602
    %v2608 = vlaneseq
    %v2609 = vshrl.u32 %v2608, 7
    %v2610 = vsub.s32 0, %v2609
    %v2611 = vrot.slane %v82, %v2610
    %v2613 = vcombine.high %v2611, %v2611
    %v2615 = vmul.f32 %v2605, %v2611
    %v2616 = vmul.f32 %v2606, %v2613
    %v2618 = vlaneseq
    %v2619 = vshrl.u32 %v2618, 7
    %v2620 = vsub.s32 0, %v2619
    %v2621 = vrot.slane %v83, %v2620
    %v2623 = vcombine.high %v2621, %v2621
    %v2625 = vadd.f32 %v2615, %v2621
    %v2626 = vadd.f32 %v2616, %v2623
    %v2629 = vcombine.low %v2625, %v2626
    %v2631 = vpack.c.bf16 %v2629, %v2629
    %v2633 = vlaneseq
    %v2634 = vshrl.u32 %v2633, 7
    %v2635 = vsub.s32 0, %v2634
    %v2636 = vrot.slane %v86, %v2635
    %v2640 = vunpack.c.l.b16 %v84
    %v2641 = vunpack.c.l.b16 %v85
    %v2642 = vpack.c.b16 %v2641, %v2640
    %v2645 = vsel %vm100, %v2631, 0
    %2647 = vmatprep.subr.bf16.mxu0 0
    %2648 = vmatpush1.bf16.msra.mxu0 0
    %2649 = vmatprep.subr.bf16.mxu0 0
    %2650 = vmatpush1.bf16.msra.mxu0 0
    %2651 = vmatprep.subr.bf16.mxu0 0
    %2652 = vmatpush1.bf16.msra.mxu0 0
    %2653 = vmatprep.subr.bf16.mxu0 0
    %2654 = vmatpush1.bf16.msra.mxu0 0
    %2655 = vmatprep.subr.bf16.mxu0 0
    %2656 = vmatpush1.bf16.msra.mxu0 0
    %2657 = vmatprep.subr.bf16.mxu0 0
    %2658 = vmatpush1.bf16.msra.mxu0 0
    %2659 = vmatprep.subr.bf16.mxu0 0
    %2660 = vmatpush1.bf16.msra.mxu0 0
    %2661 = vmatprep.subr.bf16.mxu0 0
    %2662 = vmatpush1.bf16.msra.mxu0 %v2642
    %2663 = vmatprep.subr.bf16.mxu0 0
    %2664 = vmatpush2.bf16.msra.mxu0 0
    %2665 = vmatprep.subr.bf16.mxu0 0
    %2666 = vmatpush2.bf16.msra.mxu0 0
    %2667 = vmatprep.subr.bf16.mxu0 0
    %2668 = vmatpush2.bf16.msra.mxu0 0
    %2669 = vmatprep.subr.bf16.mxu0 0
    %2670 = vmatpush2.bf16.msra.mxu0 0
    %2671 = vmatprep.subr.bf16.mxu0 0
    %2672 = vmatpush2.bf16.msra.mxu0 0
    %2673 = vmatprep.subr.bf16.mxu0 0
    %2674 = vmatpush2.bf16.msra.mxu0 0
    %2675 = vmatprep.subr.bf16.mxu0 0
    %2676 = vmatpush2.bf16.msra.mxu0 0
    %2677 = vmatprep.subr.bf16.mxu0 0
    %2678 = vmatpush2.bf16.msra.mxu0 0
    %2679 = vmatprep.mubr.bf16.mxu0 0
    %2680 = vmatmul.mubr.bf16.gmra.mxu0 %v2645
    %v2681 = vpop.f32.mrf.mxu0
    %v2682 = vadd.f32 %v2636, %v2681
    %v2683 = vpop.f32.mrf.mxu0
    %v2684 = vpop.f32.mrf.mxu0
    %v2685 = vpop.f32.mrf.mxu0
    %2686 = vdwg.mxu0
    %v2687 = vmul.f32 %v2682, 0.5
    %v2688 = vmul.f32 %v2682, 0.044715
    %v2689 = vmul.f32 %v2688, %v2682
    %v2690 = vmul.f32 %v2689, %v2682
    %v2691 = vadd.f32 %v2682, %v2690
    %v2692 = vmul.f32 %v2691, 0.7978846
    %v2693 = vtanh.pop %v2692
    %v2694 = vadd.f32 %v2693, 1.0
    %v2695 = vmul.f32 %v2687, %v2694
    %v2696 = vpack.c.bf16 %v2695, %v2695
    %v2698 = vlaneseq
    %v2699 = vshrl.u32 %v2698, 7
    %v2700 = vsub.s32 0, %v2699
    %v2701 = vrot.slane %v95, %v2700
    %v2711 = vunpack.c.l.b16 %v87
    %v2712 = vunpack.c.l.b16 %v88
    %v2713 = vunpack.c.l.b16 %v89
    %v2714 = vunpack.c.l.b16 %v90
    %v2715 = vunpack.c.l.b16 %v91
    %v2716 = vunpack.c.l.b16 %v92
    %v2717 = vunpack.c.l.b16 %v93
    %v2718 = vunpack.c.l.b16 %v94
    %v2719 = vpack.c.b16 %v2712, %v2711
    %v2720 = vpack.c.b16 %v2714, %v2713
    %v2721 = vpack.c.b16 %v2716, %v2715
    %v2722 = vpack.c.b16 %v2718, %v2717
    %vm2727 = vcmask 523264
    %v2729 = vsel %vm2727, %v2696, 0
    %2731 = vmatprep.subr.bf16.mxu0 0
    %2732 = vmatpush1.bf16.msra.mxu0 0
    %2733 = vmatprep.subr.bf16.mxu0 0
    %2734 = vmatpush1.bf16.msra.mxu0 0
    %2735 = vmatprep.subr.bf16.mxu0 0
    %2736 = vmatpush1.bf16.msra.mxu0 0
    %2737 = vmatprep.subr.bf16.mxu0 0
    %2738 = vmatpush1.bf16.msra.mxu0 0
    %2739 = vmatprep.subr.bf16.mxu0 0
    %2740 = vmatpush1.bf16.msra.mxu0 %v2722
    %2741 = vmatprep.subr.bf16.mxu0 0
    %2742 = vmatpush1.bf16.msra.mxu0 %v2721
    %2743 = vmatprep.subr.bf16.mxu0 0
    %2744 = vmatpush1.bf16.msra.mxu0 %v2720
    %2745 = vmatprep.subr.bf16.mxu0 0
    %2746 = vmatpush1.bf16.msra.mxu0 %v2719
    %2747 = vmatprep.subr.bf16.mxu0 0
    %2748 = vmatpush2.bf16.msra.mxu0 0
    %2749 = vmatprep.subr.bf16.mxu0 0
    %2750 = vmatpush2.bf16.msra.mxu0 0
    %2751 = vmatprep.subr.bf16.mxu0 0
    %2752 = vmatpush2.bf16.msra.mxu0 0
    %2753 = vmatprep.subr.bf16.mxu0 0
    %2754 = vmatpush2.bf16.msra.mxu0 0
    %2755 = vmatprep.subr.bf16.mxu0 0
    %2756 = vmatpush2.bf16.msra.mxu0 0
    %2757 = vmatprep.subr.bf16.mxu0 0
    %2758 = vmatpush2.bf16.msra.mxu0 0
    %2759 = vmatprep.subr.bf16.mxu0 0
    %2760 = vmatpush2.bf16.msra.mxu0 0
    %2761 = vmatprep.subr.bf16.mxu0 0
    %2762 = vmatpush2.bf16.msra.mxu0 0
    %2763 = vmatprep.mubr.bf16.mxu0 0
    %2764 = vmatmul.mubr.bf16.gmra.mxu0 %v2729
    %v2765 = vpop.f32.mrf.mxu0
    %v2766 = vadd.f32 %v2701, %v2765
    %v2767 = vpop.f32.mrf.mxu0
    %v2768 = vpop.f32.mrf.mxu0
    %v2769 = vpop.f32.mrf.mxu0
    %2770 = vdwg.mxu0
    %v2772 = vcombine.high %v2766, %v2766
    %v2774 = vadd.f32 %v2547, %v2766
    %v2775 = vadd.f32 %v2548, %v2772
    %v2776 = vlaneseq
    %v2777 = vshrl.u32 %v2776, 7
    %v2778 = vlaneseq
    %v2779 = vand.u32 %v2778, 127
    %v2780 = vmul.u32 %v2777, 4
    %vm2781 = vcmp.ge.s32.totalorder %v2779, %v2780
    %v2782 = vadd.s32 %v2780, 4
    %vm2783 = vcmp.lt.s32.totalorder %v2779, %v2782
    %vm2784 = vmand %vm2781, %vm2783
    %v2785 = vsel %vm2784, 0.25, 0.0
    %v2788 = vcombine.low %v2774, %v2775
    %vm2790 = vcmask 64512
    %v2792 = vsel %vm2790, %v2785, 0
    %2794 = vmatprep.subr.mxu0 0.0
    %2795 = vmatpush1.msra.mxu0 0.0
    %2796 = vmatprep.subr.mxu0 0.0
    %2797 = vmatpush1.msra.mxu0 0.0
    %2798 = vmatprep.subr.mxu0 0.0
    %2799 = vmatpush1.msra.mxu0 0.0
    %2800 = vmatprep.subr.mxu0 0.0
    %2801 = vmatpush1.msra.mxu0 0.0
    %2802 = vmatprep.subr.mxu0 0.0
    %2803 = vmatpush1.msra.mxu0 0.0
    %2804 = vmatprep.subr.mxu0 0.0
    %2805 = vmatpush1.msra.mxu0 0.0
    %2806 = vmatprep.subr.mxu0 0.0
    %2807 = vmatpush1.msra.mxu0 0.0
    %2808 = vmatprep.subr.mxu0 0.0
    %2809 = vmatpush1.msra.mxu0 0.0
    %2810 = vmatprep.subr.mxu0 0.0
    %2811 = vmatpush1.msra.mxu0 0.0
    %2812 = vmatprep.subr.mxu0 0.0
    %2813 = vmatpush1.msra.mxu0 0.0
    %2814 = vmatprep.subr.mxu0 0.0
    %2815 = vmatpush1.msra.mxu0 0.0
    %2816 = vmatprep.subr.mxu0 0.0
    %2817 = vmatpush1.msra.mxu0 0.0
    %2818 = vmatprep.subr.mxu0 0.0
    %2819 = vmatpush1.msra.mxu0 0.0
    %2820 = vmatprep.subr.mxu0 0.0
    %2821 = vmatpush1.msra.mxu0 0.0
    %2822 = vmatprep.subr.mxu0 0.0
    %2823 = vmatpush1.msra.mxu0 0.0
    %2824 = vmatprep.subr.mxu0 0.0
    %2825 = vmatpush1.msra.mxu0 %v2788
    %2826 = vmatprep.subr.mxu0 0.0
    %2827 = vmatpush2.msra.mxu0 0.0
    %2828 = vmatprep.subr.mxu0 0.0
    %2829 = vmatpush2.msra.mxu0 0.0
    %2830 = vmatprep.subr.mxu0 0.0
    %2831 = vmatpush2.msra.mxu0 0.0
    %2832 = vmatprep.subr.mxu0 0.0
    %2833 = vmatpush2.msra.mxu0 0.0
    %2834 = vmatprep.subr.mxu0 0.0
    %2835 = vmatpush2.msra.mxu0 0.0
    %2836 = vmatprep.subr.mxu0 0.0
    %2837 = vmatpush2.msra.mxu0 0.0
    %2838 = vmatprep.subr.mxu0 0.0
    %2839 = vmatpush2.msra.mxu0 0.0
    %2840 = vmatprep.subr.mxu0 0.0
    %2841 = vmatpush2.msra.mxu0 0.0
    %2842 = vmatprep.subr.mxu0 0.0
    %2843 = vmatpush2.msra.mxu0 0.0
    %2844 = vmatprep.subr.mxu0 0.0
    %2845 = vmatpush2.msra.mxu0 0.0
    %2846 = vmatprep.subr.mxu0 0.0
    %2847 = vmatpush2.msra.mxu0 0.0
    %2848 = vmatprep.subr.mxu0 0.0
    %2849 = vmatpush2.msra.mxu0 0.0
    %2850 = vmatprep.subr.mxu0 0.0
    %2851 = vmatpush2.msra.mxu0 0.0
    %2852 = vmatprep.subr.mxu0 0.0
    %2853 = vmatpush2.msra.mxu0 0.0
    %2854 = vmatprep.subr.mxu0 0.0
    %2855 = vmatpush2.msra.mxu0 0.0
    %2856 = vmatprep.subr.mxu0 0.0
    %2857 = vmatpush2.msra.mxu0 0.0
    %2858 = vmatprep.mubr.f32.mxu0 0.0
    %2859 = vmatmul.mubr.f32.gmra.mxu0 %v2792
    %v2860 = vpop.f32.mrf.mxu0
    %v2861 = vadd.f32 0.0, %v2860
    %v2862 = vpop.f32.mrf.mxu0
    %2863 = vdwg.mxu0
    %v2864 = vld [vmem:[%s16] sm:$0x1]
    %v2865 = vld [vmem:[%s17] sm:$0x1]
    %vm2866 = vcmask 123904
    %v2867 = vsel %vm2866, %v2861, 0.0
    %2868 = vadd.xlane.f32.xlu0 %v2867
    %v2869 = vpop.xlane.xlu0 %2868
    %v2870 = vmul.f32 %v2869, %v104
    %v2871 = vsub.f32 %v2861, %v2870
    %v2872 = vmul.f32 %v2871, %v2871
    %v2873 = vsel %vm2866, %v2872, 0.0
    %2874 = vadd.xlane.f32.xlu0 %v2873
    %v2875 = vpop.xlane.xlu0 %2874
    %v2876 = vmul.f32 %v2875, %v104
    %v2877 = vadd.f32 %v2876, 1e-05
    %v2878 = vrsqrt.pop %v2877
    %v2879 = vmul.f32 %v2871, %v2878
    %v2881 = vlaneseq
    %v2882 = vshrl.u32 %v2881, 7
    %v2883 = vsub.s32 0, %v2882
    %v2884 = vrot.slane %v2864, %v2883
    %v2886 = vmul.f32 %v2879, %v2884
    %v2888 = vlaneseq
    %v2889 = vshrl.u32 %v2888, 7
    %v2890 = vsub.s32 0, %v2889
    %v2891 = vrot.slane %v2865, %v2890
    %v2893 = vadd.f32 %v2886, %v2891
    %v2894 = vpack.c.bf16 %v2893, %v2893
    %v2895 = vld [vmem:[%s18] sm:$0xf]
    %v2896 = vld [vmem:[%s18 + $0x4] sm:$0xf]
    %v2897 = vld [vmem:[%s19] sm:$0x1]
    %v2899 = vlaneseq
    %v2900 = vshrl.u32 %v2899, 7
    %v2901 = vsub.s32 0, %v2900
    %v2902 = vrot.slane %v2897, %v2901
    %v2906 = vunpack.c.l.b16 %v2895
    %v2907 = vunpack.c.l.b16 %v2896
    %v2908 = vpack.c.b16 %v2907, %v2906
    %v2911 = vsel %vm100, %v2894, 0
    %2913 = vmatprep.subr.bf16.mxu0 0
    %2914 = vmatpush1.bf16.msra.mxu0 0
    %2915 = vmatprep.subr.bf16.mxu0 0
    %2916 = vmatpush1.bf16.msra.mxu0 0
    %2917 = vmatprep.subr.bf16.mxu0 0
    %2918 = vmatpush1.bf16.msra.mxu0 0
    %2919 = vmatprep.subr.bf16.mxu0 0
    %2920 = vmatpush1.bf16.msra.mxu0 0
    %2921 = vmatprep.subr.bf16.mxu0 0
    %2922 = vmatpush1.bf16.msra.mxu0 0
    %2923 = vmatprep.subr.bf16.mxu0 0
    %2924 = vmatpush1.bf16.msra.mxu0 0
    %2925 = vmatprep.subr.bf16.mxu0 0
    %2926 = vmatpush1.bf16.msra.mxu0 0
    %2927 = vmatprep.subr.bf16.mxu0 0
    %2928 = vmatpush1.bf16.msra.mxu0 %v2908
    %2929 = vmatprep.subr.bf16.mxu0 0
    %2930 = vmatpush2.bf16.msra.mxu0 0
    %2931 = vmatprep.subr.bf16.mxu0 0
    %2932 = vmatpush2.bf16.msra.mxu0 0
    %2933 = vmatprep.subr.bf16.mxu0 0
    %2934 = vmatpush2.bf16.msra.mxu0 0
    %2935 = vmatprep.subr.bf16.mxu0 0
    %2936 = vmatpush2.bf16.msra.mxu0 0
    %2937 = vmatprep.subr.bf16.mxu0 0
    %2938 = vmatpush2.bf16.msra.mxu0 0
    %2939 = vmatprep.subr.bf16.mxu0 0
    %2940 = vmatpush2.bf16.msra.mxu0 0
    %2941 = vmatprep.subr.bf16.mxu0 0
    %2942 = vmatpush2.bf16.msra.mxu0 0
    %2943 = vmatprep.subr.bf16.mxu0 0
    %2944 = vmatpush2.bf16.msra.mxu0 0
    %2945 = vmatprep.mubr.bf16.mxu0 0
    %2946 = vmatmul.mubr.bf16.gmra.mxu0 %v2911
    %v2947 = vpop.f32.mrf.mxu0
    %v2948 = vadd.f32 %v2902, %v2947
    %v2949 = vpop.f32.mrf.mxu0
    %v2950 = vpop.f32.mrf.mxu0
    %v2951 = vpop.f32.mrf.mxu0
    %2952 = vdwg.mxu0
    %vm2953 = vcmask 9216
    %2954 = vst.msk [vmem:[#allocation2] sm:$0x3] %vm2953, %v2948
    // Predicated region
    $region82: #{tltr_forward.3} parent=1 // pred_check
      _
    $region83: #{tltr_forward.3} parent=1 // pred_check_branch
      %2956 = sbr.rel (0) target = $region85
    $region84: #{tltr_forward.3} parent=1 // pred_region
      %s2958 = ssub.s32 32, 32
      %2959 = vsyncadd [#allocation3], %s2958
      %s2961 = sshll.u32 [#allocation2], 4
      %s2962 = int_to_ptr.vmem [resolvable:$true] %s2961
      %2964 = dma.vmem_to_hbm [thread:$0]  %s2962, 32, %s20, [#allocation3]
    $region85: #{tltr_forward.3} parent=1 // pred_fallthru
      _
    // Predicated region
    $region86: #{tltr_forward.3} parent=1 // pred_check
      _
    $region87: #{tltr_forward.3} parent=1 // pred_check_branch
      %2966 = sbr.rel (0) target = $region89
    $region88: #{tltr_forward.3} parent=1 // pred_region
      %2967 = dma.done [#allocation3], 32
    $region89: #{tltr_forward.3} parent=1 // pred_fallthru
      _
    %2968 = vsyncpa [#allocation3], 1

</llo_original>
